<compile_context>
chip_gen: v6e
topology: v6e:2x2x1
jax: 0.10.0
libtpu: 0.0.40
codegen_flags: <defaults>
</compile_context>

<pallas_src>
import jax
import jax.numpy as jnp
import numpy as np
from jax.experimental import pallas as pl
from jax.experimental.pallas import tpu as pltpu

T = 7              # temporal FIFO depth
C_IN = 2           # event polarities
NEG_SLOPE = 0.1    # LeakyReLU negative slope


def _leaky_relu(x):
    return jnp.where(x > 0, x, NEG_SLOPE * x)


def _temporal_conv_kernel(x_ref, w1_ref, b1_ref, w2_ref, b2_ref, w3_ref, b3_ref,
                          o_ref, a_buf):
    # x_ref : ((T+2)*c_in, n) bf16  time-major rows, one zero timestep at each end
    # w1_ref: (F, 3*c_in)     bf16  layer-1 taps concatenated along the contraction dim
    # w2/w3 : (F, 3*F)        bf16  taps concatenated along the contraction dim
    # b*    : (F, 1)          f32
    # o_ref : (F, n)          f32   lane-dense output block (also the running-max acc)
    # a_buf : (3*F, T*n)      bf16  im2col slab reused by layers 2 and 3
    F = o_ref.shape[0]
    n = o_ref.shape[1]
    c_in = x_ref.shape[0] // (T + 2)

    # Zero the temporal-pad chunks of the shifted bands (never overwritten below).
    zf = jnp.zeros((F, n), jnp.bfloat16)
    a_buf[0:F, 0:n] = zf
    a_buf[2 * F:3 * F, (T - 1) * n:T * n] = zf

    # ---- layer 1: one (F, 3*c_in) @ (3*c_in, n) matmul per timestep chunk.
    # The im2col slab for chunk t is the contiguous row window x_ref[t*c_in : t*c_in+3*c_in]
    # (thanks to the zero timestep padded at both ends in the wrapper).
    w1 = w1_ref[...]
    b1 = b1_ref[...]
    for t in range(T):
        y = jnp.dot(w1, x_ref[t * c_in:(t + 3) * c_in, :],
                    preferred_element_type=jnp.float32)
        a_buf[F:2 * F, t * n:(t + 1) * n] = _leaky_relu(y + b1).astype(jnp.bfloat16)

    def build_shifted_bands():
        # tap-0 band (rows 0:F) chunk t+1 and tap-2 band (rows 2F:3F) chunk t-1 are
        # copies of the center band (rows F:2F) chunk t: load each chunk once, store <=2x.
        for t in range(T):
            ct = a_buf[F:2 * F, t * n:(t + 1) * n]
            if t + 1 < T:
                a_buf[0:F, (t + 1) * n:(t + 2) * n] = ct
            if t >= 1:
                a_buf[2 * F:3 * F, (t - 1) * n:t * n] = ct

    # ---- layer 2: per-chunk (F,3F)@(3F,n); fused bias+LeakyReLU+bf16 store back into
    # the center band. In-place is safe: chunk t only reads column chunk t before writing it.
    build_shifted_bands()
    w2 = w2_ref[...]
    b2 = b2_ref[...]
    for t in range(T):
        y = jnp.dot(w2, a_buf[:, t * n:(t + 1) * n],
                    preferred_element_type=jnp.float32)
        a_buf[F:2 * F, t * n:(t + 1) * n] = _leaky_relu(y + b2).astype(jnp.bfloat16)

    # ---- layer 3: same per-chunk matmuls; temporal max fused into the epilogue with
    # o_ref as the running-max accumulator (no (F, T*n) f32 slab is ever materialized).
    build_shifted_bands()
    w3 = w3_ref[...]
    b3 = b3_ref[...]
    for t in range(T):
        y = _leaky_relu(jnp.dot(w3, a_buf[:, t * n:(t + 1) * n],
                                preferred_element_type=jnp.float32) + b3)
        if t == 0:
            o_ref[...] = y
        else:
            o_ref[...] = jnp.maximum(o_ref[...], y)


def temporal_convolutional(x, params, tile_n=2048):
    """x: (B, 2, T, H, W) float32. params: [(w, b)]*3 with w: (3, C_out, C_in), b: (C_out,)."""
    B, c_in, t_len, H, W = x.shape
    assert c_in == C_IN and t_len == T
    HW = H * W
    F = params[-1][0].shape[1]

    # Lane-dense tiling: force tile_n to a multiple of 128, cap at padded HW.
    tile_n = max(128, (tile_n // 128) * 128)
    hw_ceil = pl.cdiv(HW, 128) * 128
    tile_n = min(tile_n, hw_ceil)
    HW_pad = pl.cdiv(HW, tile_n) * tile_n
    # Keep at least 2 grid steps so both v7x TensorCores get work when B == 1.
    if B * (HW_pad // tile_n) < 2 and hw_ceil > 128:
        tile_n = pl.cdiv(pl.cdiv(HW, 2), 128) * 128
        HW_pad = pl.cdiv(HW, tile_n) * tile_n

    # (B, 2, T, H, W) f32 -> (B, (T+2)*2, HW_pad) bf16: time-major rows with one zero
    # timestep of padding at each end; zero-pad spatial lanes, slice them off later.
    x_flat = jnp.transpose(x.reshape(B, c_in, T, HW), (0, 2, 1, 3)).reshape(B, T * c_in, HW)
    x_flat = jnp.pad(x_flat, ((0, 0), (c_in, c_in), (0, HW_pad - HW))).astype(jnp.bfloat16)

    (w1, b1), (w2, b2), (w3, b3) = params

    def cat_taps(w):  # (3, C_out, C_in) -> (C_out, 3*C_in) bf16, col k*C_in+ci = w[k,:,ci]
        return jnp.transpose(w, (1, 0, 2)).reshape(w.shape[1], -1).astype(jnp.bfloat16)

    w1_p, w2_p, w3_p = cat_taps(w1), cat_taps(w2), cat_taps(w3)   # (F,6), (F,3F), (F,3F)
    b1_p = b1.reshape(-1, 1).astype(jnp.float32)
    b2_p = b2.reshape(-1, 1).astype(jnp.float32)
    b3_p = b3.reshape(-1, 1).astype(jnp.float32)

    grid = (B, HW_pad // tile_n)

    flops = 2 * B * T * HW_pad * F * 3 * (c_in + 2 * F)
    bytes_accessed = (x_flat.size * 2 + B * F * HW_pad * 4
                      + (w1_p.size + w2_p.size + w3_p.size) * 2
                      + (b1_p.size + b2_p.size + b3_p.size) * 4)

    out = pl.pallas_call(
        _temporal_conv_kernel,
        out_shape=jax.ShapeDtypeStruct((B, F, HW_pad), jnp.float32),
        grid_spec=pltpu.PrefetchScalarGridSpec(
            num_scalar_prefetch=0,
            grid=grid,
            in_specs=[
                pl.BlockSpec((None, (T + 2) * c_in, tile_n), lambda b, j: (b, 0, j)),
                pl.BlockSpec(w1_p.shape, lambda b, j: (0, 0)),
                pl.BlockSpec(b1_p.shape, lambda b, j: (0, 0)),
                pl.BlockSpec(w2_p.shape, lambda b, j: (0, 0)),
                pl.BlockSpec(b2_p.shape, lambda b, j: (0, 0)),
                pl.BlockSpec(w3_p.shape, lambda b, j: (0, 0)),
                pl.BlockSpec(b3_p.shape, lambda b, j: (0, 0)),
            ],
            out_specs=pl.BlockSpec((None, F, tile_n), lambda b, j: (b, 0, j)),
            scratch_shapes=[
                pltpu.VMEM((3 * F, T * tile_n), jnp.bfloat16),
            ],
        ),
        compiler_params=pltpu.CompilerParams(
            dimension_semantics=("parallel", "parallel")),
        cost_estimate=pl.CostEstimate(flops=int(flops), transcendentals=0,
                                      bytes_accessed=int(bytes_accessed)),
    )(x_flat, w1_p, b1_p, w2_p, b2_p, w3_p, b3_p)

    return out[:, :, :HW].reshape(B, F, H, W)


def _init_layer(key, c_in, c_out):
    # deterministic PyTorch-like uniform init (fan_in = c_in * 3 * 1 * 1)
    k1, k2 = jax.random.split(key)
    bound = 1.0 / np.sqrt(c_in * 3)
    w = jax.random.uniform(k1, (3, c_out, c_in), jnp.float32, -bound, bound)
    b = jax.random.uniform(k2, (c_out,), jnp.float32, -bound, bound)
    return w, b


def _ref_forward(x, params, matmul_dtype=jnp.float32):
    # pure-JAX reference (same semantics as the PyTorch module); matmul_dtype lets us
    # emulate the kernel's bf16 matmul operands (accumulation stays f32).
    h = x.astype(jnp.float32)
    for (w, b) in params:
        hp = jnp.pad(h, ((0, 0), (0, 0), (1, 1), (0, 0), (0, 0)))
        out = jnp.zeros((h.shape[0], w.shape[1], T) + h.shape[3:], jnp.float32)
        for k in range(3):
            out = out + jnp.einsum('oc,bcthw->bothw',
                                   w[k].astype(matmul_dtype),
                                   hp[:, :, k:k + T].astype(matmul_dtype),
                                   preferred_element_type=jnp.float32)
        out = out + b[None, :, None, None, None]
        h = jnp.where(out > 0, out, NEG_SLOPE * out)
    return h.max(axis=2)


if __name__ == "__main__":
    number_of_features = 32
    B, H, W = 2, 16, 16

    key = jax.random.PRNGKey(0)
    kx, k1, k2, k3 = jax.random.split(key, 4)

    x = jax.random.normal(kx, (B, 2, T, H, W), jnp.float32)
    params = [
        _init_layer(k1, 2, number_of_features),
        _init_layer(k2, number_of_features, number_of_features),
        _init_layer(k3, number_of_features, number_of_features),
    ]

    out = jax.block_until_ready(temporal_convolutional(x, params))
    assert out.shape == (B, number_of_features, H, W)

    # Tight check vs a reference using the same bf16 matmul operands
    # (validates structure: tap order, temporal shifts, bias, LeakyReLU, max).
    ref_bf16 = _ref_forward(x, params, matmul_dtype=jnp.bfloat16)
    np.testing.assert_allclose(np.asarray(out), np.asarray(ref_bf16),
                               rtol=5e-3, atol=5e-3)

    # Loose check vs the full-f32 reference (bounds the bf16 numerics drift).
    ref_f32 = _ref_forward(x, params, matmul_dtype=jnp.float32)
    np.testing.assert_allclose(np.asarray(out), np.asarray(ref_f32),
                               rtol=5e-2, atol=5e-2)

    print("KERNEL_OK")
</pallas_src>

<mosaic_0001>
module attributes {stable_mosaic.version = 11 : i64} {
  func.func @_temporal_conv_kernel(%arg0: i32, %arg1: i32, %arg2: memref<1x18x256xbf16, #tpu.memory_space<vmem>>, %arg3: memref<32x6xbf16, #tpu.memory_space<vmem>>, %arg4: memref<32x1xf32, #tpu.memory_space<vmem>>, %arg5: memref<32x96xbf16, #tpu.memory_space<vmem>>, %arg6: memref<32x1xf32, #tpu.memory_space<vmem>>, %arg7: memref<32x96xbf16, #tpu.memory_space<vmem>>, %arg8: memref<32x1xf32, #tpu.memory_space<vmem>>, %arg9: memref<1x32x256xf32, #tpu.memory_space<vmem>>, %arg10: memref<96x1792xbf16, #tpu.memory_space<vmem>>) attributes {dimension_semantics = [#tpu.dimension_semantics<parallel>, #tpu.dimension_semantics<parallel>], iteration_bounds = array<i64: 2, 1>, scalar_prefetch = 0 : i64, scratch_operands = 1 : i64, tpu.core_type = #tpu.core_type<tc>, window_params = [{transform_indices = @transform_0, window_bounds = array<i64: 1, 18, 256>}, {pipeline_mode = #tpu.pipeline_mode<synchronous>, transform_indices = @transform_1, window_bounds = array<i64: 32, 6>}, {pipeline_mode = #tpu.pipeline_mode<synchronous>, transform_indices = @transform_2, window_bounds = array<i64: 32, 1>}, {pipeline_mode = #tpu.pipeline_mode<synchronous>, transform_indices = @transform_3, window_bounds = array<i64: 32, 96>}, {pipeline_mode = #tpu.pipeline_mode<synchronous>, transform_indices = @transform_4, window_bounds = array<i64: 32, 1>}, {pipeline_mode = #tpu.pipeline_mode<synchronous>, transform_indices = @transform_5, window_bounds = array<i64: 32, 96>}, {pipeline_mode = #tpu.pipeline_mode<synchronous>, transform_indices = @transform_6, window_bounds = array<i64: 32, 1>}, {transform_indices = @transform_7, window_bounds = array<i64: 1, 32, 256>}]} {
    %cst = arith.constant 0.000000e+00 : bf16
    %0 = vector.broadcast %cst : bf16 to vector<32x256xbf16>
    %c0 = arith.constant 0 : index
    %c0_0 = arith.constant 0 : index
    %1 = vector.load %arg10[%c0, %c0_0] : memref<96x1792xbf16, #tpu.memory_space<vmem>>, vector<32x256xbf16>
    tpu.vector_store %arg10[%c0, %c0_0], %0 {strides = array<i32>} : memref<96x1792xbf16, #tpu.memory_space<vmem>>, vector<32x256xbf16>,
    %c64 = arith.constant 64 : index
    %c1536 = arith.constant 1536 : index
    %2 = vector.load %arg10[%c64, %c1536] : memref<96x1792xbf16, #tpu.memory_space<vmem>>, vector<32x256xbf16>
    tpu.vector_store %arg10[%c64, %c1536], %0 {strides = array<i32>} : memref<96x1792xbf16, #tpu.memory_space<vmem>>, vector<32x256xbf16>,
    %c0_1 = arith.constant 0 : index
    %c0_2 = arith.constant 0 : index
    %3 = vector.load %arg3[%c0_1, %c0_2] : memref<32x6xbf16, #tpu.memory_space<vmem>>, vector<32x6xbf16>
    %c0_3 = arith.constant 0 : index
    %c0_4 = arith.constant 0 : index
    %4 = vector.load %arg4[%c0_3, %c0_4] : memref<32x1xf32, #tpu.memory_space<vmem>>, vector<32x1xf32>
    %c0_5 = arith.constant 0 : index
    %c0_6 = arith.constant 0 : index
    %c0_7 = arith.constant 0 : index
    %5 = vector.load %arg2[%c0_5, %c0_6, %c0_7] : memref<1x18x256xbf16, #tpu.memory_space<vmem>>, vector<1x6x256xbf16>
    %6 = vector.shape_cast %5 : vector<1x6x256xbf16> to vector<6x256xbf16>
    %cst_8 = arith.constant dense<0.000000e+00> : vector<32x256xf32>
    %7 = tpu.matmul %3, %6, %cst_8 {dimension_numbers = #tpu.dot_dimension_numbers<[1], [0], [0], [1], [0, 0, 1, 1], [], []>} : vector<32x6xbf16>, vector<6x256xbf16>, vector<32x256xf32> -> vector<32x256xf32>
    %8 = vector.broadcast %4 : vector<32x1xf32> to vector<32x256xf32>
    %9 = arith.addf %7, %8 : vector<32x256xf32>
    %cst_9 = arith.constant 0.000000e+00 : f32
    %10 = vector.broadcast %cst_9 : f32 to vector<32x256xf32>
    %11 = arith.cmpf ogt, %9, %10 : vector<32x256xf32>
    %cst_10 = arith.constant 1.000000e-01 : f32
    %12 = vector.broadcast %cst_10 : f32 to vector<32x256xf32>
    %13 = arith.mulf %12, %9 : vector<32x256xf32>
    %14 = arith.select %11, %9, %13 : vector<32x256xi1>, vector<32x256xf32>
    %15 = arith.truncf %14 : vector<32x256xf32> to vector<32x256xbf16>
    %c32 = arith.constant 32 : index
    %c0_11 = arith.constant 0 : index
    %16 = vector.load %arg10[%c32, %c0_11] : memref<96x1792xbf16, #tpu.memory_space<vmem>>, vector<32x256xbf16>
    tpu.vector_store %arg10[%c32, %c0_11], %15 {strides = array<i32>} : memref<96x1792xbf16, #tpu.memory_space<vmem>>, vector<32x256xbf16>,
    %c0_12 = arith.constant 0 : index
    %c2 = arith.constant 2 : index
    %c0_13 = arith.constant 0 : index
    %17 = vector.load %arg2[%c0_12, %c2, %c0_13] : memref<1x18x256xbf16, #tpu.memory_space<vmem>>, vector<1x6x256xbf16>
    %18 = vector.shape_cast %17 : vector<1x6x256xbf16> to vector<6x256xbf16>
    %cst_14 = arith.constant dense<0.000000e+00> : vector<32x256xf32>
    %19 = tpu.matmul %3, %18, %cst_14 {dimension_numbers = #tpu.dot_dimension_numbers<[1], [0], [0], [1], [0, 0, 1, 1], [], []>} : vector<32x6xbf16>, vector<6x256xbf16>, vector<32x256xf32> -> vector<32x256xf32>
    %20 = vector.broadcast %4 : vector<32x1xf32> to vector<32x256xf32>
    %21 = arith.addf %19, %20 : vector<32x256xf32>
    %cst_15 = arith.constant 0.000000e+00 : f32
    %22 = vector.broadcast %cst_15 : f32 to vector<32x256xf32>
    %23 = arith.cmpf ogt, %21, %22 : vector<32x256xf32>
    %cst_16 = arith.constant 1.000000e-01 : f32
    %24 = vector.broadcast %cst_16 : f32 to vector<32x256xf32>
    %25 = arith.mulf %24, %21 : vector<32x256xf32>
    %26 = arith.select %23, %21, %25 : vector<32x256xi1>, vector<32x256xf32>
    %27 = arith.truncf %26 : vector<32x256xf32> to vector<32x256xbf16>
    %c32_17 = arith.constant 32 : index
    %c256 = arith.constant 256 : index
    %28 = vector.load %arg10[%c32_17, %c256] : memref<96x1792xbf16, #tpu.memory_space<vmem>>, vector<32x256xbf16>
    tpu.vector_store %arg10[%c32_17, %c256], %27 {strides = array<i32>} : memref<96x1792xbf16, #tpu.memory_space<vmem>>, vector<32x256xbf16>,
    %c0_18 = arith.constant 0 : index
    %c4 = arith.constant 4 : index
    %c0_19 = arith.constant 0 : index
    %29 = vector.load %arg2[%c0_18, %c4, %c0_19] : memref<1x18x256xbf16, #tpu.memory_space<vmem>>, vector<1x6x256xbf16>
    %30 = vector.shape_cast %29 : vector<1x6x256xbf16> to vector<6x256xbf16>
    %cst_20 = arith.constant dense<0.000000e+00> : vector<32x256xf32>
    %31 = tpu.matmul %3, %30, %cst_20 {dimension_numbers = #tpu.dot_dimension_numbers<[1], [0], [0], [1], [0, 0, 1, 1], [], []>} : vector<32x6xbf16>, vector<6x256xbf16>, vector<32x256xf32> -> vector<32x256xf32>
    %32 = vector.broadcast %4 : vector<32x1xf32> to vector<32x256xf32>
    %33 = arith.addf %31, %32 : vector<32x256xf32>
    %cst_21 = arith.constant 0.000000e+00 : f32
    %34 = vector.broadcast %cst_21 : f32 to vector<32x256xf32>
    %35 = arith.cmpf ogt, %33, %34 : vector<32x256xf32>
    %cst_22 = arith.constant 1.000000e-01 : f32
    %36 = vector.broadcast %cst_22 : f32 to vector<32x256xf32>
    %37 = arith.mulf %36, %33 : vector<32x256xf32>
    %38 = arith.select %35, %33, %37 : vector<32x256xi1>, vector<32x256xf32>
    %39 = arith.truncf %38 : vector<32x256xf32> to vector<32x256xbf16>
    %c32_23 = arith.constant 32 : index
    %c512 = arith.constant 512 : index
    %40 = vector.load %arg10[%c32_23, %c512] : memref<96x1792xbf16, #tpu.memory_space<vmem>>, vector<32x256xbf16>
    tpu.vector_store %arg10[%c32_23, %c512], %39 {strides = array<i32>} : memref<96x1792xbf16, #tpu.memory_space<vmem>>, vector<32x256xbf16>,
    %c0_24 = arith.constant 0 : index
    %c6 = arith.constant 6 : index
    %c0_25 = arith.constant 0 : index
    %41 = vector.load %arg2[%c0_24, %c6, %c0_25] : memref<1x18x256xbf16, #tpu.memory_space<vmem>>, vector<1x6x256xbf16>
    %42 = vector.shape_cast %41 : vector<1x6x256xbf16> to vector<6x256xbf16>
    %cst_26 = arith.constant dense<0.000000e+00> : vector<32x256xf32>
    %43 = tpu.matmul %3, %42, %cst_26 {dimension_numbers = #tpu.dot_dimension_numbers<[1], [0], [0], [1], [0, 0, 1, 1], [], []>} : vector<32x6xbf16>, vector<6x256xbf16>, vector<32x256xf32> -> vector<32x256xf32>
    %44 = vector.broadcast %4 : vector<32x1xf32> to vector<32x256xf32>
    %45 = arith.addf %43, %44 : vector<32x256xf32>
    %cst_27 = arith.constant 0.000000e+00 : f32
    %46 = vector.broadcast %cst_27 : f32 to vector<32x256xf32>
    %47 = arith.cmpf ogt, %45, %46 : vector<32x256xf32>
    %cst_28 = arith.constant 1.000000e-01 : f32
    %48 = vector.broadcast %cst_28 : f32 to vector<32x256xf32>
    %49 = arith.mulf %48, %45 : vector<32x256xf32>
    %50 = arith.select %47, %45, %49 : vector<32x256xi1>, vector<32x256xf32>
    %51 = arith.truncf %50 : vector<32x256xf32> to vector<32x256xbf16>
    %c32_29 = arith.constant 32 : index
    %c768 = arith.constant 768 : index
    %52 = vector.load %arg10[%c32_29, %c768] : memref<96x1792xbf16, #tpu.memory_space<vmem>>, vector<32x256xbf16>
    tpu.vector_store %arg10[%c32_29, %c768], %51 {strides = array<i32>} : memref<96x1792xbf16, #tpu.memory_space<vmem>>, vector<32x256xbf16>,
    %c0_30 = arith.constant 0 : index
    %c8 = arith.constant 8 : index
    %c0_31 = arith.constant 0 : index
    %53 = vector.load %arg2[%c0_30, %c8, %c0_31] : memref<1x18x256xbf16, #tpu.memory_space<vmem>>, vector<1x6x256xbf16>
    %54 = vector.shape_cast %53 : vector<1x6x256xbf16> to vector<6x256xbf16>
    %cst_32 = arith.constant dense<0.000000e+00> : vector<32x256xf32>
    %55 = tpu.matmul %3, %54, %cst_32 {dimension_numbers = #tpu.dot_dimension_numbers<[1], [0], [0], [1], [0, 0, 1, 1], [], []>} : vector<32x6xbf16>, vector<6x256xbf16>, vector<32x256xf32> -> vector<32x256xf32>
    %56 = vector.broadcast %4 : vector<32x1xf32> to vector<32x256xf32>
    %57 = arith.addf %55, %56 : vector<32x256xf32>
    %cst_33 = arith.constant 0.000000e+00 : f32
    %58 = vector.broadcast %cst_33 : f32 to vector<32x256xf32>
    %59 = arith.cmpf ogt, %57, %58 : vector<32x256xf32>
    %cst_34 = arith.constant 1.000000e-01 : f32
    %60 = vector.broadcast %cst_34 : f32 to vector<32x256xf32>
    %61 = arith.mulf %60, %57 : vector<32x256xf32>
    %62 = arith.select %59, %57, %61 : vector<32x256xi1>, vector<32x256xf32>
    %63 = arith.truncf %62 : vector<32x256xf32> to vector<32x256xbf16>
    %c32_35 = arith.constant 32 : index
    %c1024 = arith.constant 1024 : index
    %64 = vector.load %arg10[%c32_35, %c1024] : memref<96x1792xbf16, #tpu.memory_space<vmem>>, vector<32x256xbf16>
    tpu.vector_store %arg10[%c32_35, %c1024], %63 {strides = array<i32>} : memref<96x1792xbf16, #tpu.memory_space<vmem>>, vector<32x256xbf16>,
    %c0_36 = arith.constant 0 : index
    %c10 = arith.constant 10 : index
    %c0_37 = arith.constant 0 : index
    %65 = vector.load %arg2[%c0_36, %c10, %c0_37] : memref<1x18x256xbf16, #tpu.memory_space<vmem>>, vector<1x6x256xbf16>
    %66 = vector.shape_cast %65 : vector<1x6x256xbf16> to vector<6x256xbf16>
    %cst_38 = arith.constant dense<0.000000e+00> : vector<32x256xf32>
    %67 = tpu.matmul %3, %66, %cst_38 {dimension_numbers = #tpu.dot_dimension_numbers<[1], [0], [0], [1], [0, 0, 1, 1], [], []>} : vector<32x6xbf16>, vector<6x256xbf16>, vector<32x256xf32> -> vector<32x256xf32>
    %68 = vector.broadcast %4 : vector<32x1xf32> to vector<32x256xf32>
    %69 = arith.addf %67, %68 : vector<32x256xf32>
    %cst_39 = arith.constant 0.000000e+00 : f32
    %70 = vector.broadcast %cst_39 : f32 to vector<32x256xf32>
    %71 = arith.cmpf ogt, %69, %70 : vector<32x256xf32>
    %cst_40 = arith.constant 1.000000e-01 : f32
    %72 = vector.broadcast %cst_40 : f32 to vector<32x256xf32>
    %73 = arith.mulf %72, %69 : vector<32x256xf32>
    %74 = arith.select %71, %69, %73 : vector<32x256xi1>, vector<32x256xf32>
    %75 = arith.truncf %74 : vector<32x256xf32> to vector<32x256xbf16>
    %c32_41 = arith.constant 32 : index
    %c1280 = arith.constant 1280 : index
    %76 = vector.load %arg10[%c32_41, %c1280] : memref<96x1792xbf16, #tpu.memory_space<vmem>>, vector<32x256xbf16>
    tpu.vector_store %arg10[%c32_41, %c1280], %75 {strides = array<i32>} : memref<96x1792xbf16, #tpu.memory_space<vmem>>, vector<32x256xbf16>,
    %c0_42 = arith.constant 0 : index
    %c12 = arith.constant 12 : index
    %c0_43 = arith.constant 0 : index
    %77 = vector.load %arg2[%c0_42, %c12, %c0_43] : memref<1x18x256xbf16, #tpu.memory_space<vmem>>, vector<1x6x256xbf16>
    %78 = vector.shape_cast %77 : vector<1x6x256xbf16> to vector<6x256xbf16>
    %cst_44 = arith.constant dense<0.000000e+00> : vector<32x256xf32>
    %79 = tpu.matmul %3, %78, %cst_44 {dimension_numbers = #tpu.dot_dimension_numbers<[1], [0], [0], [1], [0, 0, 1, 1], [], []>} : vector<32x6xbf16>, vector<6x256xbf16>, vector<32x256xf32> -> vector<32x256xf32>
    %80 = vector.broadcast %4 : vector<32x1xf32> to vector<32x256xf32>
    %81 = arith.addf %79, %80 : vector<32x256xf32>
    %cst_45 = arith.constant 0.000000e+00 : f32
    %82 = vector.broadcast %cst_45 : f32 to vector<32x256xf32>
    %83 = arith.cmpf ogt, %81, %82 : vector<32x256xf32>
    %cst_46 = arith.constant 1.000000e-01 : f32
    %84 = vector.broadcast %cst_46 : f32 to vector<32x256xf32>
    %85 = arith.mulf %84, %81 : vector<32x256xf32>
    %86 = arith.select %83, %81, %85 : vector<32x256xi1>, vector<32x256xf32>
    %87 = arith.truncf %86 : vector<32x256xf32> to vector<32x256xbf16>
    %c32_47 = arith.constant 32 : index
    %c1536_48 = arith.constant 1536 : index
    %88 = vector.load %arg10[%c32_47, %c1536_48] : memref<96x1792xbf16, #tpu.memory_space<vmem>>, vector<32x256xbf16>
    tpu.vector_store %arg10[%c32_47, %c1536_48], %87 {strides = array<i32>} : memref<96x1792xbf16, #tpu.memory_space<vmem>>, vector<32x256xbf16>,
    %c32_49 = arith.constant 32 : index
    %c0_50 = arith.constant 0 : index
    %89 = vector.load %arg10[%c32_49, %c0_50] : memref<96x1792xbf16, #tpu.memory_space<vmem>>, vector<32x256xbf16>
    %c0_51 = arith.constant 0 : index
    %c256_52 = arith.constant 256 : index
    %90 = vector.load %arg10[%c0_51, %c256_52] : memref<96x1792xbf16, #tpu.memory_space<vmem>>, vector<32x256xbf16>
    tpu.vector_store %arg10[%c0_51, %c256_52], %89 {strides = array<i32>} : memref<96x1792xbf16, #tpu.memory_space<vmem>>, vector<32x256xbf16>,
    %c32_53 = arith.constant 32 : index
    %c256_54 = arith.constant 256 : index
    %91 = vector.load %arg10[%c32_53, %c256_54] : memref<96x1792xbf16, #tpu.memory_space<vmem>>, vector<32x256xbf16>
    %c0_55 = arith.constant 0 : index
    %c512_56 = arith.constant 512 : index
    %92 = vector.load %arg10[%c0_55, %c512_56] : memref<96x1792xbf16, #tpu.memory_space<vmem>>, vector<32x256xbf16>
    tpu.vector_store %arg10[%c0_55, %c512_56], %91 {strides = array<i32>} : memref<96x1792xbf16, #tpu.memory_space<vmem>>, vector<32x256xbf16>,
    %c64_57 = arith.constant 64 : index
    %c0_58 = arith.constant 0 : index
    %93 = vector.load %arg10[%c64_57, %c0_58] : memref<96x1792xbf16, #tpu.memory_space<vmem>>, vector<32x256xbf16>
    tpu.vector_store %arg10[%c64_57, %c0_58], %91 {strides = array<i32>} : memref<96x1792xbf16, #tpu.memory_space<vmem>>, vector<32x256xbf16>,
    %c32_59 = arith.constant 32 : index
    %c512_60 = arith.constant 512 : index
    %94 = vector.load %arg10[%c32_59, %c512_60] : memref<96x1792xbf16, #tpu.memory_space<vmem>>, vector<32x256xbf16>
    %c0_61 = arith.constant 0 : index
    %c768_62 = arith.constant 768 : index
    %95 = vector.load %arg10[%c0_61, %c768_62] : memref<96x1792xbf16, #tpu.memory_space<vmem>>, vector<32x256xbf16>
    tpu.vector_store %arg10[%c0_61, %c768_62], %94 {strides = array<i32>} : memref<96x1792xbf16, #tpu.memory_space<vmem>>, vector<32x256xbf16>,
    %c64_63 = arith.constant 64 : index
    %c256_64 = arith.constant 256 : index
    %96 = vector.load %arg10[%c64_63, %c256_64] : memref<96x1792xbf16, #tpu.memory_space<vmem>>, vector<32x256xbf16>
    tpu.vector_store %arg10[%c64_63, %c256_64], %94 {strides = array<i32>} : memref<96x1792xbf16, #tpu.memory_space<vmem>>, vector<32x256xbf16>,
    %c32_65 = arith.constant 32 : index
    %c768_66 = arith.constant 768 : index
    %97 = vector.load %arg10[%c32_65, %c768_66] : memref<96x1792xbf16, #tpu.memory_space<vmem>>, vector<32x256xbf16>
    %c0_67 = arith.constant 0 : index
    %c1024_68 = arith.constant 1024 : index
    %98 = vector.load %arg10[%c0_67, %c1024_68] : memref<96x1792xbf16, #tpu.memory_space<vmem>>, vector<32x256xbf16>
    tpu.vector_store %arg10[%c0_67, %c1024_68], %97 {strides = array<i32>} : memref<96x1792xbf16, #tpu.memory_space<vmem>>, vector<32x256xbf16>,
    %c64_69 = arith.constant 64 : index
    %c512_70 = arith.constant 512 : index
    %99 = vector.load %arg10[%c64_69, %c512_70] : memref<96x1792xbf16, #tpu.memory_space<vmem>>, vector<32x256xbf16>
    tpu.vector_store %arg10[%c64_69, %c512_70], %97 {strides = array<i32>} : memref<96x1792xbf16, #tpu.memory_space<vmem>>, vector<32x256xbf16>,
    %c32_71 = arith.constant 32 : index
    %c1024_72 = arith.constant 1024 : index
    %100 = vector.load %arg10[%c32_71, %c1024_72] : memref<96x1792xbf16, #tpu.memory_space<vmem>>, vector<32x256xbf16>
    %c0_73 = arith.constant 0 : index
    %c1280_74 = arith.constant 1280 : index
    %101 = vector.load %arg10[%c0_73, %c1280_74] : memref<96x1792xbf16, #tpu.memory_space<vmem>>, vector<32x256xbf16>
    tpu.vector_store %arg10[%c0_73, %c1280_74], %100 {strides = array<i32>} : memref<96x1792xbf16, #tpu.memory_space<vmem>>, vector<32x256xbf16>,
    %c64_75 = arith.constant 64 : index
    %c768_76 = arith.constant 768 : index
    %102 = vector.load %arg10[%c64_75, %c768_76] : memref<96x1792xbf16, #tpu.memory_space<vmem>>, vector<32x256xbf16>
    tpu.vector_store %arg10[%c64_75, %c768_76], %100 {strides = array<i32>} : memref<96x1792xbf16, #tpu.memory_space<vmem>>, vector<32x256xbf16>,
    %c32_77 = arith.constant 32 : index
    %c1280_78 = arith.constant 1280 : index
    %103 = vector.load %arg10[%c32_77, %c1280_78] : memref<96x1792xbf16, #tpu.memory_space<vmem>>, vector<32x256xbf16>
    %c0_79 = arith.constant 0 : index
    %c1536_80 = arith.constant 1536 : index
    %104 = vector.load %arg10[%c0_79, %c1536_80] : memref<96x1792xbf16, #tpu.memory_space<vmem>>, vector<32x256xbf16>
    tpu.vector_store %arg10[%c0_79, %c1536_80], %103 {strides = array<i32>} : memref<96x1792xbf16, #tpu.memory_space<vmem>>, vector<32x256xbf16>,
    %c64_81 = arith.constant 64 : index
    %c1024_82 = arith.constant 1024 : index
    %105 = vector.load %arg10[%c64_81, %c1024_82] : memref<96x1792xbf16, #tpu.memory_space<vmem>>, vector<32x256xbf16>
    tpu.vector_store %arg10[%c64_81, %c1024_82], %103 {strides = array<i32>} : memref<96x1792xbf16, #tpu.memory_space<vmem>>, vector<32x256xbf16>,
    %c32_83 = arith.constant 32 : index
    %c1536_84 = arith.constant 1536 : index
    %106 = vector.load %arg10[%c32_83, %c1536_84] : memref<96x1792xbf16, #tpu.memory_space<vmem>>, vector<32x256xbf16>
    %c64_85 = arith.constant 64 : index
    %c1280_86 = arith.constant 1280 : index
    %107 = vector.load %arg10[%c64_85, %c1280_86] : memref<96x1792xbf16, #tpu.memory_space<vmem>>, vector<32x256xbf16>
    tpu.vector_store %arg10[%c64_85, %c1280_86], %106 {strides = array<i32>} : memref<96x1792xbf16, #tpu.memory_space<vmem>>, vector<32x256xbf16>,
    %c0_87 = arith.constant 0 : index
    %c0_88 = arith.constant 0 : index
    %108 = vector.load %arg5[%c0_87, %c0_88] : memref<32x96xbf16, #tpu.memory_space<vmem>>, vector<32x96xbf16>
    %c0_89 = arith.constant 0 : index
    %c0_90 = arith.constant 0 : index
    %109 = vector.load %arg6[%c0_89, %c0_90] : memref<32x1xf32, #tpu.memory_space<vmem>>, vector<32x1xf32>
    %c0_91 = arith.constant 0 : index
    %c0_92 = arith.constant 0 : index
    %110 = vector.load %arg10[%c0_91, %c0_92] : memref<96x1792xbf16, #tpu.memory_space<vmem>>, vector<96x256xbf16>
    %cst_93 = arith.constant dense<0.000000e+00> : vector<32x256xf32>
    %111 = tpu.matmul %108, %110, %cst_93 {dimension_numbers = #tpu.dot_dimension_numbers<[1], [0], [0], [1], [0, 0, 1, 1], [], []>} : vector<32x96xbf16>, vector<96x256xbf16>, vector<32x256xf32> -> vector<32x256xf32>
    %112 = vector.broadcast %109 : vector<32x1xf32> to vector<32x256xf32>
    %113 = arith.addf %111, %112 : vector<32x256xf32>
    %cst_94 = arith.constant 0.000000e+00 : f32
    %114 = vector.broadcast %cst_94 : f32 to vector<32x256xf32>
    %115 = arith.cmpf ogt, %113, %114 : vector<32x256xf32>
    %cst_95 = arith.constant 1.000000e-01 : f32
    %116 = vector.broadcast %cst_95 : f32 to vector<32x256xf32>
    %117 = arith.mulf %116, %113 : vector<32x256xf32>
    %118 = arith.select %115, %113, %117 : vector<32x256xi1>, vector<32x256xf32>
    %119 = arith.truncf %118 : vector<32x256xf32> to vector<32x256xbf16>
    %c32_96 = arith.constant 32 : index
    %c0_97 = arith.constant 0 : index
    %120 = vector.load %arg10[%c32_96, %c0_97] : memref<96x1792xbf16, #tpu.memory_space<vmem>>, vector<32x256xbf16>
    tpu.vector_store %arg10[%c32_96, %c0_97], %119 {strides = array<i32>} : memref<96x1792xbf16, #tpu.memory_space<vmem>>, vector<32x256xbf16>,
    %c0_98 = arith.constant 0 : index
    %c256_99 = arith.constant 256 : index
    %121 = vector.load %arg10[%c0_98, %c256_99] : memref<96x1792xbf16, #tpu.memory_space<vmem>>, vector<96x256xbf16>
    %cst_100 = arith.constant dense<0.000000e+00> : vector<32x256xf32>
    %122 = tpu.matmul %108, %121, %cst_100 {dimension_numbers = #tpu.dot_dimension_numbers<[1], [0], [0], [1], [0, 0, 1, 1], [], []>} : vector<32x96xbf16>, vector<96x256xbf16>, vector<32x256xf32> -> vector<32x256xf32>
    %123 = vector.broadcast %109 : vector<32x1xf32> to vector<32x256xf32>
    %124 = arith.addf %122, %123 : vector<32x256xf32>
    %cst_101 = arith.constant 0.000000e+00 : f32
    %125 = vector.broadcast %cst_101 : f32 to vector<32x256xf32>
    %126 = arith.cmpf ogt, %124, %125 : vector<32x256xf32>
    %cst_102 = arith.constant 1.000000e-01 : f32
    %127 = vector.broadcast %cst_102 : f32 to vector<32x256xf32>
    %128 = arith.mulf %127, %124 : vector<32x256xf32>
    %129 = arith.select %126, %124, %128 : vector<32x256xi1>, vector<32x256xf32>
    %130 = arith.truncf %129 : vector<32x256xf32> to vector<32x256xbf16>
    %c32_103 = arith.constant 32 : index
    %c256_104 = arith.constant 256 : index
    %131 = vector.load %arg10[%c32_103, %c256_104] : memref<96x1792xbf16, #tpu.memory_space<vmem>>, vector<32x256xbf16>
    tpu.vector_store %arg10[%c32_103, %c256_104], %130 {strides = array<i32>} : memref<96x1792xbf16, #tpu.memory_space<vmem>>, vector<32x256xbf16>,
    %c0_105 = arith.constant 0 : index
    %c512_106 = arith.constant 512 : index
    %132 = vector.load %arg10[%c0_105, %c512_106] : memref<96x1792xbf16, #tpu.memory_space<vmem>>, vector<96x256xbf16>
    %cst_107 = arith.constant dense<0.000000e+00> : vector<32x256xf32>
    %133 = tpu.matmul %108, %132, %cst_107 {dimension_numbers = #tpu.dot_dimension_numbers<[1], [0], [0], [1], [0, 0, 1, 1], [], []>} : vector<32x96xbf16>, vector<96x256xbf16>, vector<32x256xf32> -> vector<32x256xf32>
    %134 = vector.broadcast %109 : vector<32x1xf32> to vector<32x256xf32>
    %135 = arith.addf %133, %134 : vector<32x256xf32>
    %cst_108 = arith.constant 0.000000e+00 : f32
    %136 = vector.broadcast %cst_108 : f32 to vector<32x256xf32>
    %137 = arith.cmpf ogt, %135, %136 : vector<32x256xf32>
    %cst_109 = arith.constant 1.000000e-01 : f32
    %138 = vector.broadcast %cst_109 : f32 to vector<32x256xf32>
    %139 = arith.mulf %138, %135 : vector<32x256xf32>
    %140 = arith.select %137, %135, %139 : vector<32x256xi1>, vector<32x256xf32>
    %141 = arith.truncf %140 : vector<32x256xf32> to vector<32x256xbf16>
    %c32_110 = arith.constant 32 : index
    %c512_111 = arith.constant 512 : index
    %142 = vector.load %arg10[%c32_110, %c512_111] : memref<96x1792xbf16, #tpu.memory_space<vmem>>, vector<32x256xbf16>
    tpu.vector_store %arg10[%c32_110, %c512_111], %141 {strides = array<i32>} : memref<96x1792xbf16, #tpu.memory_space<vmem>>, vector<32x256xbf16>,
    %c0_112 = arith.constant 0 : index
    %c768_113 = arith.constant 768 : index
    %143 = vector.load %arg10[%c0_112, %c768_113] : memref<96x1792xbf16, #tpu.memory_space<vmem>>, vector<96x256xbf16>
    %cst_114 = arith.constant dense<0.000000e+00> : vector<32x256xf32>
    %144 = tpu.matmul %108, %143, %cst_114 {dimension_numbers = #tpu.dot_dimension_numbers<[1], [0], [0], [1], [0, 0, 1, 1], [], []>} : vector<32x96xbf16>, vector<96x256xbf16>, vector<32x256xf32> -> vector<32x256xf32>
    %145 = vector.broadcast %109 : vector<32x1xf32> to vector<32x256xf32>
    %146 = arith.addf %144, %145 : vector<32x256xf32>
    %cst_115 = arith.constant 0.000000e+00 : f32
    %147 = vector.broadcast %cst_115 : f32 to vector<32x256xf32>
    %148 = arith.cmpf ogt, %146, %147 : vector<32x256xf32>
    %cst_116 = arith.constant 1.000000e-01 : f32
    %149 = vector.broadcast %cst_116 : f32 to vector<32x256xf32>
    %150 = arith.mulf %149, %146 : vector<32x256xf32>
    %151 = arith.select %148, %146, %150 : vector<32x256xi1>, vector<32x256xf32>
    %152 = arith.truncf %151 : vector<32x256xf32> to vector<32x256xbf16>
    %c32_117 = arith.constant 32 : index
    %c768_118 = arith.constant 768 : index
    %153 = vector.load %arg10[%c32_117, %c768_118] : memref<96x1792xbf16, #tpu.memory_space<vmem>>, vector<32x256xbf16>
    tpu.vector_store %arg10[%c32_117, %c768_118], %152 {strides = array<i32>} : memref<96x1792xbf16, #tpu.memory_space<vmem>>, vector<32x256xbf16>,
    %c0_119 = arith.constant 0 : index
    %c1024_120 = arith.constant 1024 : index
    %154 = vector.load %arg10[%c0_119, %c1024_120] : memref<96x1792xbf16, #tpu.memory_space<vmem>>, vector<96x256xbf16>
    %cst_121 = arith.constant dense<0.000000e+00> : vector<32x256xf32>
    %155 = tpu.matmul %108, %154, %cst_121 {dimension_numbers = #tpu.dot_dimension_numbers<[1], [0], [0], [1], [0, 0, 1, 1], [], []>} : vector<32x96xbf16>, vector<96x256xbf16>, vector<32x256xf32> -> vector<32x256xf32>
    %156 = vector.broadcast %109 : vector<32x1xf32> to vector<32x256xf32>
    %157 = arith.addf %155, %156 : vector<32x256xf32>
    %cst_122 = arith.constant 0.000000e+00 : f32
    %158 = vector.broadcast %cst_122 : f32 to vector<32x256xf32>
    %159 = arith.cmpf ogt, %157, %158 : vector<32x256xf32>
    %cst_123 = arith.constant 1.000000e-01 : f32
    %160 = vector.broadcast %cst_123 : f32 to vector<32x256xf32>
    %161 = arith.mulf %160, %157 : vector<32x256xf32>
    %162 = arith.select %159, %157, %161 : vector<32x256xi1>, vector<32x256xf32>
    %163 = arith.truncf %162 : vector<32x256xf32> to vector<32x256xbf16>
    %c32_124 = arith.constant 32 : index
    %c1024_125 = arith.constant 1024 : index
    %164 = vector.load %arg10[%c32_124, %c1024_125] : memref<96x1792xbf16, #tpu.memory_space<vmem>>, vector<32x256xbf16>
    tpu.vector_store %arg10[%c32_124, %c1024_125], %163 {strides = array<i32>} : memref<96x1792xbf16, #tpu.memory_space<vmem>>, vector<32x256xbf16>,
    %c0_126 = arith.constant 0 : index
    %c1280_127 = arith.constant 1280 : index
    %165 = vector.load %arg10[%c0_126, %c1280_127] : memref<96x1792xbf16, #tpu.memory_space<vmem>>, vector<96x256xbf16>
    %cst_128 = arith.constant dense<0.000000e+00> : vector<32x256xf32>
    %166 = tpu.matmul %108, %165, %cst_128 {dimension_numbers = #tpu.dot_dimension_numbers<[1], [0], [0], [1], [0, 0, 1, 1], [], []>} : vector<32x96xbf16>, vector<96x256xbf16>, vector<32x256xf32> -> vector<32x256xf32>
    %167 = vector.broadcast %109 : vector<32x1xf32> to vector<32x256xf32>
    %168 = arith.addf %166, %167 : vector<32x256xf32>
    %cst_129 = arith.constant 0.000000e+00 : f32
    %169 = vector.broadcast %cst_129 : f32 to vector<32x256xf32>
    %170 = arith.cmpf ogt, %168, %169 : vector<32x256xf32>
    %cst_130 = arith.constant 1.000000e-01 : f32
    %171 = vector.broadcast %cst_130 : f32 to vector<32x256xf32>
    %172 = arith.mulf %171, %168 : vector<32x256xf32>
    %173 = arith.select %170, %168, %172 : vector<32x256xi1>, vector<32x256xf32>
    %174 = arith.truncf %173 : vector<32x256xf32> to vector<32x256xbf16>
    %c32_131 = arith.constant 32 : index
    %c1280_132 = arith.constant 1280 : index
    %175 = vector.load %arg10[%c32_131, %c1280_132] : memref<96x1792xbf16, #tpu.memory_space<vmem>>, vector<32x256xbf16>
    tpu.vector_store %arg10[%c32_131, %c1280_132], %174 {strides = array<i32>} : memref<96x1792xbf16, #tpu.memory_space<vmem>>, vector<32x256xbf16>,
    %c0_133 = arith.constant 0 : index
    %c1536_134 = arith.constant 1536 : index
    %176 = vector.load %arg10[%c0_133, %c1536_134] : memref<96x1792xbf16, #tpu.memory_space<vmem>>, vector<96x256xbf16>
    %cst_135 = arith.constant dense<0.000000e+00> : vector<32x256xf32>
    %177 = tpu.matmul %108, %176, %cst_135 {dimension_numbers = #tpu.dot_dimension_numbers<[1], [0], [0], [1], [0, 0, 1, 1], [], []>} : vector<32x96xbf16>, vector<96x256xbf16>, vector<32x256xf32> -> vector<32x256xf32>
    %178 = vector.broadcast %109 : vector<32x1xf32> to vector<32x256xf32>
    %179 = arith.addf %177, %178 : vector<32x256xf32>
    %cst_136 = arith.constant 0.000000e+00 : f32
    %180 = vector.broadcast %cst_136 : f32 to vector<32x256xf32>
    %181 = arith.cmpf ogt, %179, %180 : vector<32x256xf32>
    %cst_137 = arith.constant 1.000000e-01 : f32
    %182 = vector.broadcast %cst_137 : f32 to vector<32x256xf32>
    %183 = arith.mulf %182, %179 : vector<32x256xf32>
    %184 = arith.select %181, %179, %183 : vector<32x256xi1>, vector<32x256xf32>
    %185 = arith.truncf %184 : vector<32x256xf32> to vector<32x256xbf16>
    %c32_138 = arith.constant 32 : index
    %c1536_139 = arith.constant 1536 : index
    %186 = vector.load %arg10[%c32_138, %c1536_139] : memref<96x1792xbf16, #tpu.memory_space<vmem>>, vector<32x256xbf16>
    tpu.vector_store %arg10[%c32_138, %c1536_139], %185 {strides = array<i32>} : memref<96x1792xbf16, #tpu.memory_space<vmem>>, vector<32x256xbf16>,
    %c32_140 = arith.constant 32 : index
    %c0_141 = arith.constant 0 : index
    %187 = vector.load %arg10[%c32_140, %c0_141] : memref<96x1792xbf16, #tpu.memory_space<vmem>>, vector<32x256xbf16>
    %c0_142 = arith.constant 0 : index
    %c256_143 = arith.constant 256 : index
    %188 = vector.load %arg10[%c0_142, %c256_143] : memref<96x1792xbf16, #tpu.memory_space<vmem>>, vector<32x256xbf16>
    tpu.vector_store %arg10[%c0_142, %c256_143], %187 {strides = array<i32>} : memref<96x1792xbf16, #tpu.memory_space<vmem>>, vector<32x256xbf16>,
    %c32_144 = arith.constant 32 : index
    %c256_145 = arith.constant 256 : index
    %189 = vector.load %arg10[%c32_144, %c256_145] : memref<96x1792xbf16, #tpu.memory_space<vmem>>, vector<32x256xbf16>
    %c0_146 = arith.constant 0 : index
    %c512_147 = arith.constant 512 : index
    %190 = vector.load %arg10[%c0_146, %c512_147] : memref<96x1792xbf16, #tpu.memory_space<vmem>>, vector<32x256xbf16>
    tpu.vector_store %arg10[%c0_146, %c512_147], %189 {strides = array<i32>} : memref<96x1792xbf16, #tpu.memory_space<vmem>>, vector<32x256xbf16>,
    %c64_148 = arith.constant 64 : index
    %c0_149 = arith.constant 0 : index
    %191 = vector.load %arg10[%c64_148, %c0_149] : memref<96x1792xbf16, #tpu.memory_space<vmem>>, vector<32x256xbf16>
    tpu.vector_store %arg10[%c64_148, %c0_149], %189 {strides = array<i32>} : memref<96x1792xbf16, #tpu.memory_space<vmem>>, vector<32x256xbf16>,
    %c32_150 = arith.constant 32 : index
    %c512_151 = arith.constant 512 : index
    %192 = vector.load %arg10[%c32_150, %c512_151] : memref<96x1792xbf16, #tpu.memory_space<vmem>>, vector<32x256xbf16>
    %c0_152 = arith.constant 0 : index
    %c768_153 = arith.constant 768 : index
    %193 = vector.load %arg10[%c0_152, %c768_153] : memref<96x1792xbf16, #tpu.memory_space<vmem>>, vector<32x256xbf16>
    tpu.vector_store %arg10[%c0_152, %c768_153], %192 {strides = array<i32>} : memref<96x1792xbf16, #tpu.memory_space<vmem>>, vector<32x256xbf16>,
    %c64_154 = arith.constant 64 : index
    %c256_155 = arith.constant 256 : index
    %194 = vector.load %arg10[%c64_154, %c256_155] : memref<96x1792xbf16, #tpu.memory_space<vmem>>, vector<32x256xbf16>
    tpu.vector_store %arg10[%c64_154, %c256_155], %192 {strides = array<i32>} : memref<96x1792xbf16, #tpu.memory_space<vmem>>, vector<32x256xbf16>,
    %c32_156 = arith.constant 32 : index
    %c768_157 = arith.constant 768 : index
    %195 = vector.load %arg10[%c32_156, %c768_157] : memref<96x1792xbf16, #tpu.memory_space<vmem>>, vector<32x256xbf16>
    %c0_158 = arith.constant 0 : index
    %c1024_159 = arith.constant 1024 : index
    %196 = vector.load %arg10[%c0_158, %c1024_159] : memref<96x1792xbf16, #tpu.memory_space<vmem>>, vector<32x256xbf16>
    tpu.vector_store %arg10[%c0_158, %c1024_159], %195 {strides = array<i32>} : memref<96x1792xbf16, #tpu.memory_space<vmem>>, vector<32x256xbf16>,
    %c64_160 = arith.constant 64 : index
    %c512_161 = arith.constant 512 : index
    %197 = vector.load %arg10[%c64_160, %c512_161] : memref<96x1792xbf16, #tpu.memory_space<vmem>>, vector<32x256xbf16>
    tpu.vector_store %arg10[%c64_160, %c512_161], %195 {strides = array<i32>} : memref<96x1792xbf16, #tpu.memory_space<vmem>>, vector<32x256xbf16>,
    %c32_162 = arith.constant 32 : index
    %c1024_163 = arith.constant 1024 : index
    %198 = vector.load %arg10[%c32_162, %c1024_163] : memref<96x1792xbf16, #tpu.memory_space<vmem>>, vector<32x256xbf16>
    %c0_164 = arith.constant 0 : index
    %c1280_165 = arith.constant 1280 : index
    %199 = vector.load %arg10[%c0_164, %c1280_165] : memref<96x1792xbf16, #tpu.memory_space<vmem>>, vector<32x256xbf16>
    tpu.vector_store %arg10[%c0_164, %c1280_165], %198 {strides = array<i32>} : memref<96x1792xbf16, #tpu.memory_space<vmem>>, vector<32x256xbf16>,
    %c64_166 = arith.constant 64 : index
    %c768_167 = arith.constant 768 : index
    %200 = vector.load %arg10[%c64_166, %c768_167] : memref<96x1792xbf16, #tpu.memory_space<vmem>>, vector<32x256xbf16>
    tpu.vector_store %arg10[%c64_166, %c768_167], %198 {strides = array<i32>} : memref<96x1792xbf16, #tpu.memory_space<vmem>>, vector<32x256xbf16>,
    %c32_168 = arith.constant 32 : index
    %c1280_169 = arith.constant 1280 : index
    %201 = vector.load %arg10[%c32_168, %c1280_169] : memref<96x1792xbf16, #tpu.memory_space<vmem>>, vector<32x256xbf16>
    %c0_170 = arith.constant 0 : index
    %c1536_171 = arith.constant 1536 : index
    %202 = vector.load %arg10[%c0_170, %c1536_171] : memref<96x1792xbf16, #tpu.memory_space<vmem>>, vector<32x256xbf16>
    tpu.vector_store %arg10[%c0_170, %c1536_171], %201 {strides = array<i32>} : memref<96x1792xbf16, #tpu.memory_space<vmem>>, vector<32x256xbf16>,
    %c64_172 = arith.constant 64 : index
    %c1024_173 = arith.constant 1024 : index
    %203 = vector.load %arg10[%c64_172, %c1024_173] : memref<96x1792xbf16, #tpu.memory_space<vmem>>, vector<32x256xbf16>
    tpu.vector_store %arg10[%c64_172, %c1024_173], %201 {strides = array<i32>} : memref<96x1792xbf16, #tpu.memory_space<vmem>>, vector<32x256xbf16>,
    %c32_174 = arith.constant 32 : index
    %c1536_175 = arith.constant 1536 : index
    %204 = vector.load %arg10[%c32_174, %c1536_175] : memref<96x1792xbf16, #tpu.memory_space<vmem>>, vector<32x256xbf16>
    %c64_176 = arith.constant 64 : index
    %c1280_177 = arith.constant 1280 : index
    %205 = vector.load %arg10[%c64_176, %c1280_177] : memref<96x1792xbf16, #tpu.memory_space<vmem>>, vector<32x256xbf16>
    tpu.vector_store %arg10[%c64_176, %c1280_177], %204 {strides = array<i32>} : memref<96x1792xbf16, #tpu.memory_space<vmem>>, vector<32x256xbf16>,
    %c0_178 = arith.constant 0 : index
    %c0_179 = arith.constant 0 : index
    %206 = vector.load %arg7[%c0_178, %c0_179] : memref<32x96xbf16, #tpu.memory_space<vmem>>, vector<32x96xbf16>
    %c0_180 = arith.constant 0 : index
    %c0_181 = arith.constant 0 : index
    %207 = vector.load %arg8[%c0_180, %c0_181] : memref<32x1xf32, #tpu.memory_space<vmem>>, vector<32x1xf32>
    %c0_182 = arith.constant 0 : index
    %c0_183 = arith.constant 0 : index
    %208 = vector.load %arg10[%c0_182, %c0_183] : memref<96x1792xbf16, #tpu.memory_space<vmem>>, vector<96x256xbf16>
    %cst_184 = arith.constant dense<0.000000e+00> : vector<32x256xf32>
    %209 = tpu.matmul %206, %208, %cst_184 {dimension_numbers = #tpu.dot_dimension_numbers<[1], [0], [0], [1], [0, 0, 1, 1], [], []>} : vector<32x96xbf16>, vector<96x256xbf16>, vector<32x256xf32> -> vector<32x256xf32>
    %210 = vector.broadcast %207 : vector<32x1xf32> to vector<32x256xf32>
    %211 = arith.addf %209, %210 : vector<32x256xf32>
    %cst_185 = arith.constant 0.000000e+00 : f32
    %212 = vector.broadcast %cst_185 : f32 to vector<32x256xf32>
    %213 = arith.cmpf ogt, %211, %212 : vector<32x256xf32>
    %cst_186 = arith.constant 1.000000e-01 : f32
    %214 = vector.broadcast %cst_186 : f32 to vector<32x256xf32>
    %215 = arith.mulf %214, %211 : vector<32x256xf32>
    %216 = arith.select %213, %211, %215 : vector<32x256xi1>, vector<32x256xf32>
    %c0_187 = arith.constant 0 : index
    %c0_188 = arith.constant 0 : index
    %c0_189 = arith.constant 0 : index
    %217 = vector.load %arg9[%c0_187, %c0_188, %c0_189] : memref<1x32x256xf32, #tpu.memory_space<vmem>>, vector<1x32x256xf32>
    %218 = vector.shape_cast %217 : vector<1x32x256xf32> to vector<32x256xf32>
    %219 = vector.shape_cast %216 : vector<32x256xf32> to vector<1x32x256xf32>
    tpu.vector_store %arg9[%c0_187, %c0_188, %c0_189], %219 {strides = array<i32>} : memref<1x32x256xf32, #tpu.memory_space<vmem>>, vector<1x32x256xf32>,
    %c0_190 = arith.constant 0 : index
    %c256_191 = arith.constant 256 : index
    %220 = vector.load %arg10[%c0_190, %c256_191] : memref<96x1792xbf16, #tpu.memory_space<vmem>>, vector<96x256xbf16>
    %cst_192 = arith.constant dense<0.000000e+00> : vector<32x256xf32>
    %221 = tpu.matmul %206, %220, %cst_192 {dimension_numbers = #tpu.dot_dimension_numbers<[1], [0], [0], [1], [0, 0, 1, 1], [], []>} : vector<32x96xbf16>, vector<96x256xbf16>, vector<32x256xf32> -> vector<32x256xf32>
    %222 = vector.broadcast %207 : vector<32x1xf32> to vector<32x256xf32>
    %223 = arith.addf %221, %222 : vector<32x256xf32>
    %cst_193 = arith.constant 0.000000e+00 : f32
    %224 = vector.broadcast %cst_193 : f32 to vector<32x256xf32>
    %225 = arith.cmpf ogt, %223, %224 : vector<32x256xf32>
    %cst_194 = arith.constant 1.000000e-01 : f32
    %226 = vector.broadcast %cst_194 : f32 to vector<32x256xf32>
    %227 = arith.mulf %226, %223 : vector<32x256xf32>
    %228 = arith.select %225, %223, %227 : vector<32x256xi1>, vector<32x256xf32>
    %c0_195 = arith.constant 0 : index
    %c0_196 = arith.constant 0 : index
    %c0_197 = arith.constant 0 : index
    %229 = vector.load %arg9[%c0_195, %c0_196, %c0_197] : memref<1x32x256xf32, #tpu.memory_space<vmem>>, vector<1x32x256xf32>
    %230 = vector.shape_cast %229 : vector<1x32x256xf32> to vector<32x256xf32>
    %231 = arith.maximumf %230, %228 : vector<32x256xf32>
    %c0_198 = arith.constant 0 : index
    %c0_199 = arith.constant 0 : index
    %c0_200 = arith.constant 0 : index
    %232 = vector.load %arg9[%c0_198, %c0_199, %c0_200] : memref<1x32x256xf32, #tpu.memory_space<vmem>>, vector<1x32x256xf32>
    %233 = vector.shape_cast %232 : vector<1x32x256xf32> to vector<32x256xf32>
    %234 = vector.shape_cast %231 : vector<32x256xf32> to vector<1x32x256xf32>
    tpu.vector_store %arg9[%c0_198, %c0_199, %c0_200], %234 {strides = array<i32>} : memref<1x32x256xf32, #tpu.memory_space<vmem>>, vector<1x32x256xf32>,
    %c0_201 = arith.constant 0 : index
    %c512_202 = arith.constant 512 : index
    %235 = vector.load %arg10[%c0_201, %c512_202] : memref<96x1792xbf16, #tpu.memory_space<vmem>>, vector<96x256xbf16>
    %cst_203 = arith.constant dense<0.000000e+00> : vector<32x256xf32>
    %236 = tpu.matmul %206, %235, %cst_203 {dimension_numbers = #tpu.dot_dimension_numbers<[1], [0], [0], [1], [0, 0, 1, 1], [], []>} : vector<32x96xbf16>, vector<96x256xbf16>, vector<32x256xf32> -> vector<32x256xf32>
    %237 = vector.broadcast %207 : vector<32x1xf32> to vector<32x256xf32>
    %238 = arith.addf %236, %237 : vector<32x256xf32>
    %cst_204 = arith.constant 0.000000e+00 : f32
    %239 = vector.broadcast %cst_204 : f32 to vector<32x256xf32>
    %240 = arith.cmpf ogt, %238, %239 : vector<32x256xf32>
    %cst_205 = arith.constant 1.000000e-01 : f32
    %241 = vector.broadcast %cst_205 : f32 to vector<32x256xf32>
    %242 = arith.mulf %241, %238 : vector<32x256xf32>
    %243 = arith.select %240, %238, %242 : vector<32x256xi1>, vector<32x256xf32>
    %c0_206 = arith.constant 0 : index
    %c0_207 = arith.constant 0 : index
    %c0_208 = arith.constant 0 : index
    %244 = vector.load %arg9[%c0_206, %c0_207, %c0_208] : memref<1x32x256xf32, #tpu.memory_space<vmem>>, vector<1x32x256xf32>
    %245 = vector.shape_cast %244 : vector<1x32x256xf32> to vector<32x256xf32>
    %246 = arith.maximumf %245, %243 : vector<32x256xf32>
    %c0_209 = arith.constant 0 : index
    %c0_210 = arith.constant 0 : index
    %c0_211 = arith.constant 0 : index
    %247 = vector.load %arg9[%c0_209, %c0_210, %c0_211] : memref<1x32x256xf32, #tpu.memory_space<vmem>>, vector<1x32x256xf32>
    %248 = vector.shape_cast %247 : vector<1x32x256xf32> to vector<32x256xf32>
    %249 = vector.shape_cast %246 : vector<32x256xf32> to vector<1x32x256xf32>
    tpu.vector_store %arg9[%c0_209, %c0_210, %c0_211], %249 {strides = array<i32>} : memref<1x32x256xf32, #tpu.memory_space<vmem>>, vector<1x32x256xf32>,
    %c0_212 = arith.constant 0 : index
    %c768_213 = arith.constant 768 : index
    %250 = vector.load %arg10[%c0_212, %c768_213] : memref<96x1792xbf16, #tpu.memory_space<vmem>>, vector<96x256xbf16>
    %cst_214 = arith.constant dense<0.000000e+00> : vector<32x256xf32>
    %251 = tpu.matmul %206, %250, %cst_214 {dimension_numbers = #tpu.dot_dimension_numbers<[1], [0], [0], [1], [0, 0, 1, 1], [], []>} : vector<32x96xbf16>, vector<96x256xbf16>, vector<32x256xf32> -> vector<32x256xf32>
    %252 = vector.broadcast %207 : vector<32x1xf32> to vector<32x256xf32>
    %253 = arith.addf %251, %252 : vector<32x256xf32>
    %cst_215 = arith.constant 0.000000e+00 : f32
    %254 = vector.broadcast %cst_215 : f32 to vector<32x256xf32>
    %255 = arith.cmpf ogt, %253, %254 : vector<32x256xf32>
    %cst_216 = arith.constant 1.000000e-01 : f32
    %256 = vector.broadcast %cst_216 : f32 to vector<32x256xf32>
    %257 = arith.mulf %256, %253 : vector<32x256xf32>
    %258 = arith.select %255, %253, %257 : vector<32x256xi1>, vector<32x256xf32>
    %c0_217 = arith.constant 0 : index
    %c0_218 = arith.constant 0 : index
    %c0_219 = arith.constant 0 : index
    %259 = vector.load %arg9[%c0_217, %c0_218, %c0_219] : memref<1x32x256xf32, #tpu.memory_space<vmem>>, vector<1x32x256xf32>
    %260 = vector.shape_cast %259 : vector<1x32x256xf32> to vector<32x256xf32>
    %261 = arith.maximumf %260, %258 : vector<32x256xf32>
    %c0_220 = arith.constant 0 : index
    %c0_221 = arith.constant 0 : index
    %c0_222 = arith.constant 0 : index
    %262 = vector.load %arg9[%c0_220, %c0_221, %c0_222] : memref<1x32x256xf32, #tpu.memory_space<vmem>>, vector<1x32x256xf32>
    %263 = vector.shape_cast %262 : vector<1x32x256xf32> to vector<32x256xf32>
    %264 = vector.shape_cast %261 : vector<32x256xf32> to vector<1x32x256xf32>
    tpu.vector_store %arg9[%c0_220, %c0_221, %c0_222], %264 {strides = array<i32>} : memref<1x32x256xf32, #tpu.memory_space<vmem>>, vector<1x32x256xf32>,
    %c0_223 = arith.constant 0 : index
    %c1024_224 = arith.constant 1024 : index
    %265 = vector.load %arg10[%c0_223, %c1024_224] : memref<96x1792xbf16, #tpu.memory_space<vmem>>, vector<96x256xbf16>
    %cst_225 = arith.constant dense<0.000000e+00> : vector<32x256xf32>
    %266 = tpu.matmul %206, %265, %cst_225 {dimension_numbers = #tpu.dot_dimension_numbers<[1], [0], [0], [1], [0, 0, 1, 1], [], []>} : vector<32x96xbf16>, vector<96x256xbf16>, vector<32x256xf32> -> vector<32x256xf32>
    %267 = vector.broadcast %207 : vector<32x1xf32> to vector<32x256xf32>
    %268 = arith.addf %266, %267 : vector<32x256xf32>
    %cst_226 = arith.constant 0.000000e+00 : f32
    %269 = vector.broadcast %cst_226 : f32 to vector<32x256xf32>
    %270 = arith.cmpf ogt, %268, %269 : vector<32x256xf32>
    %cst_227 = arith.constant 1.000000e-01 : f32
    %271 = vector.broadcast %cst_227 : f32 to vector<32x256xf32>
    %272 = arith.mulf %271, %268 : vector<32x256xf32>
    %273 = arith.select %270, %268, %272 : vector<32x256xi1>, vector<32x256xf32>
    %c0_228 = arith.constant 0 : index
    %c0_229 = arith.constant 0 : index
    %c0_230 = arith.constant 0 : index
    %274 = vector.load %arg9[%c0_228, %c0_229, %c0_230] : memref<1x32x256xf32, #tpu.memory_space<vmem>>, vector<1x32x256xf32>
    %275 = vector.shape_cast %274 : vector<1x32x256xf32> to vector<32x256xf32>
    %276 = arith.maximumf %275, %273 : vector<32x256xf32>
    %c0_231 = arith.constant 0 : index
    %c0_232 = arith.constant 0 : index
    %c0_233 = arith.constant 0 : index
    %277 = vector.load %arg9[%c0_231, %c0_232, %c0_233] : memref<1x32x256xf32, #tpu.memory_space<vmem>>, vector<1x32x256xf32>
    %278 = vector.shape_cast %277 : vector<1x32x256xf32> to vector<32x256xf32>
    %279 = vector.shape_cast %276 : vector<32x256xf32> to vector<1x32x256xf32>
    tpu.vector_store %arg9[%c0_231, %c0_232, %c0_233], %279 {strides = array<i32>} : memref<1x32x256xf32, #tpu.memory_space<vmem>>, vector<1x32x256xf32>,
    %c0_234 = arith.constant 0 : index
    %c1280_235 = arith.constant 1280 : index
    %280 = vector.load %arg10[%c0_234, %c1280_235] : memref<96x1792xbf16, #tpu.memory_space<vmem>>, vector<96x256xbf16>
    %cst_236 = arith.constant dense<0.000000e+00> : vector<32x256xf32>
    %281 = tpu.matmul %206, %280, %cst_236 {dimension_numbers = #tpu.dot_dimension_numbers<[1], [0], [0], [1], [0, 0, 1, 1], [], []>} : vector<32x96xbf16>, vector<96x256xbf16>, vector<32x256xf32> -> vector<32x256xf32>
    %282 = vector.broadcast %207 : vector<32x1xf32> to vector<32x256xf32>
    %283 = arith.addf %281, %282 : vector<32x256xf32>
    %cst_237 = arith.constant 0.000000e+00 : f32
    %284 = vector.broadcast %cst_237 : f32 to vector<32x256xf32>
    %285 = arith.cmpf ogt, %283, %284 : vector<32x256xf32>
    %cst_238 = arith.constant 1.000000e-01 : f32
    %286 = vector.broadcast %cst_238 : f32 to vector<32x256xf32>
    %287 = arith.mulf %286, %283 : vector<32x256xf32>
    %288 = arith.select %285, %283, %287 : vector<32x256xi1>, vector<32x256xf32>
    %c0_239 = arith.constant 0 : index
    %c0_240 = arith.constant 0 : index
    %c0_241 = arith.constant 0 : index
    %289 = vector.load %arg9[%c0_239, %c0_240, %c0_241] : memref<1x32x256xf32, #tpu.memory_space<vmem>>, vector<1x32x256xf32>
    %290 = vector.shape_cast %289 : vector<1x32x256xf32> to vector<32x256xf32>
    %291 = arith.maximumf %290, %288 : vector<32x256xf32>
    %c0_242 = arith.constant 0 : index
    %c0_243 = arith.constant 0 : index
    %c0_244 = arith.constant 0 : index
    %292 = vector.load %arg9[%c0_242, %c0_243, %c0_244] : memref<1x32x256xf32, #tpu.memory_space<vmem>>, vector<1x32x256xf32>
    %293 = vector.shape_cast %292 : vector<1x32x256xf32> to vector<32x256xf32>
    %294 = vector.shape_cast %291 : vector<32x256xf32> to vector<1x32x256xf32>
    tpu.vector_store %arg9[%c0_242, %c0_243, %c0_244], %294 {strides = array<i32>} : memref<1x32x256xf32, #tpu.memory_space<vmem>>, vector<1x32x256xf32>,
    %c0_245 = arith.constant 0 : index
    %c1536_246 = arith.constant 1536 : index
    %295 = vector.load %arg10[%c0_245, %c1536_246] : memref<96x1792xbf16, #tpu.memory_space<vmem>>, vector<96x256xbf16>
    %cst_247 = arith.constant dense<0.000000e+00> : vector<32x256xf32>
    %296 = tpu.matmul %206, %295, %cst_247 {dimension_numbers = #tpu.dot_dimension_numbers<[1], [0], [0], [1], [0, 0, 1, 1], [], []>} : vector<32x96xbf16>, vector<96x256xbf16>, vector<32x256xf32> -> vector<32x256xf32>
    %297 = vector.broadcast %207 : vector<32x1xf32> to vector<32x256xf32>
    %298 = arith.addf %296, %297 : vector<32x256xf32>
    %cst_248 = arith.constant 0.000000e+00 : f32
    %299 = vector.broadcast %cst_248 : f32 to vector<32x256xf32>
    %300 = arith.cmpf ogt, %298, %299 : vector<32x256xf32>
    %cst_249 = arith.constant 1.000000e-01 : f32
    %301 = vector.broadcast %cst_249 : f32 to vector<32x256xf32>
    %302 = arith.mulf %301, %298 : vector<32x256xf32>
    %303 = arith.select %300, %298, %302 : vector<32x256xi1>, vector<32x256xf32>
    %c0_250 = arith.constant 0 : index
    %c0_251 = arith.constant 0 : index
    %c0_252 = arith.constant 0 : index
    %304 = vector.load %arg9[%c0_250, %c0_251, %c0_252] : memref<1x32x256xf32, #tpu.memory_space<vmem>>, vector<1x32x256xf32>
    %305 = vector.shape_cast %304 : vector<1x32x256xf32> to vector<32x256xf32>
    %306 = arith.maximumf %305, %303 : vector<32x256xf32>
    %c0_253 = arith.constant 0 : index
    %c0_254 = arith.constant 0 : index
    %c0_255 = arith.constant 0 : index
    %307 = vector.load %arg9[%c0_253, %c0_254, %c0_255] : memref<1x32x256xf32, #tpu.memory_space<vmem>>, vector<1x32x256xf32>
    %308 = vector.shape_cast %307 : vector<1x32x256xf32> to vector<32x256xf32>
    %309 = vector.shape_cast %306 : vector<32x256xf32> to vector<1x32x256xf32>
    tpu.vector_store %arg9[%c0_253, %c0_254, %c0_255], %309 {strides = array<i32>} : memref<1x32x256xf32, #tpu.memory_space<vmem>>, vector<1x32x256xf32>,
    return
  }
  func.func @transform_0(%arg0: i32, %arg1: i32) -> (i32, i32, i32) {
    %c0_i32 = arith.constant 0 : i32
    %c0_i32_0 = arith.constant 0 : i32
    return %arg0, %c0_i32, %arg1 : i32, i32, i32
  }
  func.func @transform_1(%arg0: i32, %arg1: i32) -> (i32, i32) {
    %c0_i32 = arith.constant 0 : i32
    %c0_i32_0 = arith.constant 0 : i32
    %c0_i32_1 = arith.constant 0 : i32
    return %c0_i32, %c0_i32_0 : i32, i32
  }
  func.func @transform_2(%arg0: i32, %arg1: i32) -> (i32, i32) {
    %c0_i32 = arith.constant 0 : i32
    %c0_i32_0 = arith.constant 0 : i32
    %c0_i32_1 = arith.constant 0 : i32
    return %c0_i32, %c0_i32_0 : i32, i32
  }
  func.func @transform_3(%arg0: i32, %arg1: i32) -> (i32, i32) {
    %c0_i32 = arith.constant 0 : i32
    %c0_i32_0 = arith.constant 0 : i32
    %c0_i32_1 = arith.constant 0 : i32
    return %c0_i32, %c0_i32_0 : i32, i32
  }
  func.func @transform_4(%arg0: i32, %arg1: i32) -> (i32, i32) {
    %c0_i32 = arith.constant 0 : i32
    %c0_i32_0 = arith.constant 0 : i32
    %c0_i32_1 = arith.constant 0 : i32
    return %c0_i32, %c0_i32_0 : i32, i32
  }
  func.func @transform_5(%arg0: i32, %arg1: i32) -> (i32, i32) {
    %c0_i32 = arith.constant 0 : i32
    %c0_i32_0 = arith.constant 0 : i32
    %c0_i32_1 = arith.constant 0 : i32
    return %c0_i32, %c0_i32_0 : i32, i32
  }
  func.func @transform_6(%arg0: i32, %arg1: i32) -> (i32, i32) {
    %c0_i32 = arith.constant 0 : i32
    %c0_i32_0 = arith.constant 0 : i32
    %c0_i32_1 = arith.constant 0 : i32
    return %c0_i32, %c0_i32_0 : i32, i32
  }
  func.func @transform_7(%arg0: i32, %arg1: i32) -> (i32, i32, i32) {
    %c0_i32 = arith.constant 0 : i32
    %c0_i32_0 = arith.constant 0 : i32
    return %arg0, %c0_i32, %arg1 : i32, i32, i32
  }
}

</mosaic_0001>

<llo_original>
// kernel: tpu_custom_call.1
$region0: #{tpu_custom_call.1}
  #allocation0 [shape = 'u32[]', space=smem, size = 0x4, offset = 0x4, fixed_abs, tag = 'smem constant byte address 0x4 - core index']
  #allocation1 [shape = 'u32[144,128]{1,0:T(1,128)}', space=vmem, size = 0x12000, scoped, tag = 'internal scratch']
  #allocation2 [shape = 'bf16[96,1792]{1,0:T(8,128)(2,1)}', space=vmem, size = 0x54000, scoped, tag = 'scratch operand']
  %s0 = inlined_call_operand.vmem [shape: bf16[2,18,256], index: 0, kind: input, shape index: {}]
  %s1 = inlined_call_operand.vmem [shape: bf16[32,6], index: 1, kind: input, shape index: {}]
  %s2 = inlined_call_operand.vmem [shape: f32[32,1], index: 2, kind: input, shape index: {}]
  %s3 = inlined_call_operand.vmem [shape: bf16[32,96], index: 3, kind: input, shape index: {}]
  %s4 = inlined_call_operand.vmem [shape: f32[32,1], index: 4, kind: input, shape index: {}]
  %s5 = inlined_call_operand.vmem [shape: bf16[32,96], index: 5, kind: input, shape index: {}]
  %s6 = inlined_call_operand.vmem [shape: f32[32,1], index: 6, kind: input, shape index: {}]
  %s7 = inlined_call_operand.hbm [shape: f32[2,32,256], index: 7, kind: output, shape index: {}]
  %s8 = sld [smem:[#allocation0]]
  $region61: #{tpu_custom_call.1} parent=0
    _
  %s10 = ssub.s32 1, %s8
  %s11 = scalar_select 0, %s10, %s8
  $region1: #{tpu_custom_call.1} parent=0
    #allocation3 [shape = 'u8[65536]{0}', space=vmem, size = 0x10000, scoped, tag = 'output window, operand 0']
    #allocation4 [shape = 's32[2]{0}', space=sflag, size = 0x8, scoped, tag = 'scoped memory for tpu_custom_call.1']
    %12 = vsyncpa [#allocation4], 0
    %s13 = scalar_lea.sflag [#allocation4], 1
    %14 = vsyncpa %s13, 0
    loop: start=0, step=1, limit=4
    $region2: #{tpu_custom_call.1} parent=1 // loop_pre_header
      _
    $region3: #{tpu_custom_call.1} parent=1 // loop_header
      %s16 = sphi 0, %s20
      %p17 = scmp.ge.s32.totalorder %s16, 4
      %s23 = sphi 0, %s35
      %s24 = sphi 0, %s31
      %s25 = sphi 0, %s23
      %s26 = sphi 0, %s24
      %s27 = sphi 0, %s25
      %s28 = sphi 0, %s26
      %s40 = sphi 0, %s42
      %s43 = sphi 0, %s40
      %s44 = sphi 0, %s43
      %s60 = sphi 0, %s44
      %s64 = sphi 0, %s64
      %s66 = sphi 0, %s64
      %s67 = sphi 0, %s66
      %s81 = sphi 0, %s67
      %s85 = sphi 0, %s85
      %s87 = sphi 0, %s85
      %s88 = sphi 0, %s87
      %s102 = sphi 0, %s88
      %s106 = sphi 0, %s106
      %s108 = sphi 0, %s106
      %s109 = sphi 0, %s108
      %s123 = sphi 0, %s109
      %s127 = sphi 0, %s127
      %s129 = sphi 0, %s127
      %s130 = sphi 0, %s129
      %s144 = sphi 0, %s130
      %s148 = sphi 0, %s148
      %s150 = sphi 0, %s148
      %s151 = sphi 0, %s150
      %s165 = sphi 0, %s151
      %s169 = sphi 0, %s169
      %s171 = sphi 0, %s169
      %s172 = sphi 0, %s171
      %s186 = sphi 0, %s172
      %s194 = sphi 0, %s196
      %s197 = sphi 0, %s194
      %s198 = sphi 0, %s197
      %s214 = sphi 0, %s198
    $region4: #{tpu_custom_call.1} parent=1 // loop_header_branch
      %19 = sbr.rel (%p17) target = $region8
    $region5: #{tpu_custom_call.1} parent=1 // loop_body
      %s21 = ssub.s32 %s16, 1
      %s22 = ssub.s32 %s16, 2
      %s29 = sadd.s32 1, %s24
      %p30 = scmp.ge.s32.totalorder %s29, 1
      %s31 = scalar_select %p30, 0, %s29
      %s32 = sadd.s32 1, %s23
      %s33 = scalar_select %p30, %s32, %s23
      %p34 = scmp.ge.s32.totalorder %s33, 2
      %s35 = scalar_select %p34, 0, %s33
      %s36 = ssub.s32 %s23, %s35
      %s37 = ssub.s32 %s24, %s31
      %s38 = sor.u32 %s36, %s37
      %p39 = scmp.eq.s32.totalorder %s38, 0
      %s41 = sadd.s32 %s40, 1
      %s42 = scalar_select %p39, %s40, %s41
      %p45 = pneg %p39
      %p46 = scmp.eq.s32.totalorder %s16, 1
      %p47 = por %p45, %p46
      %p48 = scmp.ne.s32.totalorder %s40, %s43
      %p49 = scmp.eq.s32.totalorder %s16, 0
      %p50 = por %p48, %p49
      %p51 = scmp.ne.s32.totalorder %s40, %s43
      %p52 = scmp.eq.s32.totalorder %s21, 1
      %p53 = por %p51, %p52
      %p54 = scmp.ne.s32.totalorder %s43, %s44
      %p55 = scmp.eq.s32.totalorder %s21, 0
      %p56 = por %p54, %p55
      %p57 = scmp.ne.s32.totalorder %s43, %s44
      %p58 = scmp.eq.s32.totalorder %s22, 1
      %p59 = por %p57, %p58
      %p61 = scmp.ne.s32.totalorder %s44, %s60
      %p62 = scmp.eq.s32.totalorder %s22, 0
      %p63 = por %p61, %p62
      %s65 = sadd.s32 %s64, 1
      %p68 = scmp.eq.s32.totalorder %s16, 1
      %p69 = scmp.ne.s32.totalorder %s64, %s66
      %p70 = scmp.eq.s32.totalorder %s16, 0
      %p71 = por %p69, %p70
      %p72 = scmp.ne.s32.totalorder %s64, %s66
      %p73 = scmp.eq.s32.totalorder %s21, 1
      %p74 = por %p72, %p73
      %p75 = scmp.ne.s32.totalorder %s66, %s67
      %p76 = scmp.eq.s32.totalorder %s21, 0
      %p77 = por %p75, %p76
      %p78 = scmp.ne.s32.totalorder %s66, %s67
      %p79 = scmp.eq.s32.totalorder %s22, 1
      %p80 = por %p78, %p79
      %p82 = scmp.ne.s32.totalorder %s67, %s81
      %p83 = scmp.eq.s32.totalorder %s22, 0
      %p84 = por %p82, %p83
      %s86 = sadd.s32 %s85, 1
      %p89 = scmp.eq.s32.totalorder %s16, 1
      %p90 = scmp.ne.s32.totalorder %s85, %s87
      %p91 = scmp.eq.s32.totalorder %s16, 0
      %p92 = por %p90, %p91
      %p93 = scmp.ne.s32.totalorder %s85, %s87
      %p94 = scmp.eq.s32.totalorder %s21, 1
      %p95 = por %p93, %p94
      %p96 = scmp.ne.s32.totalorder %s87, %s88
      %p97 = scmp.eq.s32.totalorder %s21, 0
      %p98 = por %p96, %p97
      %p99 = scmp.ne.s32.totalorder %s87, %s88
      %p100 = scmp.eq.s32.totalorder %s22, 1
      %p101 = por %p99, %p100
      %p103 = scmp.ne.s32.totalorder %s88, %s102
      %p104 = scmp.eq.s32.totalorder %s22, 0
      %p105 = por %p103, %p104
      %s107 = sadd.s32 %s106, 1
      %p110 = scmp.eq.s32.totalorder %s16, 1
      %p111 = scmp.ne.s32.totalorder %s106, %s108
      %p112 = scmp.eq.s32.totalorder %s16, 0
      %p113 = por %p111, %p112
      %p114 = scmp.ne.s32.totalorder %s106, %s108
      %p115 = scmp.eq.s32.totalorder %s21, 1
      %p116 = por %p114, %p115
      %p117 = scmp.ne.s32.totalorder %s108, %s109
      %p118 = scmp.eq.s32.totalorder %s21, 0
      %p119 = por %p117, %p118
      %p120 = scmp.ne.s32.totalorder %s108, %s109
      %p121 = scmp.eq.s32.totalorder %s22, 1
      %p122 = por %p120, %p121
      %p124 = scmp.ne.s32.totalorder %s109, %s123
      %p125 = scmp.eq.s32.totalorder %s22, 0
      %p126 = por %p124, %p125
      %s128 = sadd.s32 %s127, 1
      %p131 = scmp.eq.s32.totalorder %s16, 1
      %p132 = scmp.ne.s32.totalorder %s127, %s129
      %p133 = scmp.eq.s32.totalorder %s16, 0
      %p134 = por %p132, %p133
      %p135 = scmp.ne.s32.totalorder %s127, %s129
      %p136 = scmp.eq.s32.totalorder %s21, 1
      %p137 = por %p135, %p136
      %p138 = scmp.ne.s32.totalorder %s129, %s130
      %p139 = scmp.eq.s32.totalorder %s21, 0
      %p140 = por %p138, %p139
      %p141 = scmp.ne.s32.totalorder %s129, %s130
      %p142 = scmp.eq.s32.totalorder %s22, 1
      %p143 = por %p141, %p142
      %p145 = scmp.ne.s32.totalorder %s130, %s144
      %p146 = scmp.eq.s32.totalorder %s22, 0
      %p147 = por %p145, %p146
      %s149 = sadd.s32 %s148, 1
      %p152 = scmp.eq.s32.totalorder %s16, 1
      %p153 = scmp.ne.s32.totalorder %s148, %s150
      %p154 = scmp.eq.s32.totalorder %s16, 0
      %p155 = por %p153, %p154
      %p156 = scmp.ne.s32.totalorder %s148, %s150
      %p157 = scmp.eq.s32.totalorder %s21, 1
      %p158 = por %p156, %p157
      %p159 = scmp.ne.s32.totalorder %s150, %s151
      %p160 = scmp.eq.s32.totalorder %s21, 0
      %p161 = por %p159, %p160
      %p162 = scmp.ne.s32.totalorder %s150, %s151
      %p163 = scmp.eq.s32.totalorder %s22, 1
      %p164 = por %p162, %p163
      %p166 = scmp.ne.s32.totalorder %s151, %s165
      %p167 = scmp.eq.s32.totalorder %s22, 0
      %p168 = por %p166, %p167
      %s170 = sadd.s32 %s169, 1
      %p173 = scmp.eq.s32.totalorder %s16, 1
      %p174 = scmp.ne.s32.totalorder %s169, %s171
      %p175 = scmp.eq.s32.totalorder %s16, 0
      %p176 = por %p174, %p175
      %p177 = scmp.ne.s32.totalorder %s169, %s171
      %p178 = scmp.eq.s32.totalorder %s21, 1
      %p179 = por %p177, %p178
      %p180 = scmp.ne.s32.totalorder %s171, %s172
      %p181 = scmp.eq.s32.totalorder %s21, 0
      %p182 = por %p180, %p181
      %p183 = scmp.ne.s32.totalorder %s171, %s172
      %p184 = scmp.eq.s32.totalorder %s22, 1
      %p185 = por %p183, %p184
      %p187 = scmp.ne.s32.totalorder %s172, %s186
      %p188 = scmp.eq.s32.totalorder %s22, 0
      %p189 = por %p187, %p188
      %s190 = ssub.s32 %s23, %s35
      %s191 = ssub.s32 %s24, %s31
      %s192 = sor.u32 %s190, %s191
      %p193 = scmp.eq.s32.totalorder %s192, 0
      %s195 = sadd.s32 %s194, 1
      %s196 = scalar_select %p193, %s194, %s195
      %p199 = pneg %p193
      %p200 = scmp.eq.s32.totalorder %s16, 1
      %p201 = por %p199, %p200
      %p202 = scmp.ne.s32.totalorder %s194, %s197
      %p203 = scmp.eq.s32.totalorder %s16, 0
      %p204 = por %p202, %p203
      %p205 = scmp.ne.s32.totalorder %s194, %s197
      %p206 = scmp.eq.s32.totalorder %s21, 1
      %p207 = por %p205, %p206
      %p208 = scmp.ne.s32.totalorder %s197, %s198
      %p209 = scmp.eq.s32.totalorder %s21, 0
      %p210 = por %p208, %p209
      %p211 = scmp.ne.s32.totalorder %s197, %s198
      %p212 = scmp.eq.s32.totalorder %s22, 1
      %p213 = por %p211, %p212
      %p215 = scmp.ne.s32.totalorder %s198, %s214
      %p216 = scmp.eq.s32.totalorder %s22, 0
      %p217 = por %p215, %p216
      %p218 = scmp.le.s32.totalorder 1, %s16
      %p219 = scmp.lt.s32.totalorder %s16, 3
      %p220 = pnand %p218, %p219
      %p221 = pneg %p220
      // Predicated region
      $region9: #{tpu_custom_call.1} parent=5 // pred_check
        _
      $region10: #{tpu_custom_call.1} parent=5 // pred_check_branch
        %223 = sbr.rel (%p220) target = $region12
      $region11: #{tpu_custom_call.1} parent=5 // pred_region
        %s224 = ssub.s32 %s16, 1
        // Predicated region
        $region13: #{tpu_custom_call.1} parent=11 // pred_check
          %p225 = pneg %p77
        $region14: #{tpu_custom_call.1} parent=11 // pred_check_branch
          %227 = sbr.rel (%p225) target = $region16
        $region15: #{tpu_custom_call.1} parent=11 // pred_region
          _
        $region16: #{tpu_custom_call.1} parent=11 // pred_fallthru
          _
        // Predicated region
        $region17: #{tpu_custom_call.1} parent=11 // pred_check
          %p228 = pneg %p98
        $region18: #{tpu_custom_call.1} parent=11 // pred_check_branch
          %230 = sbr.rel (%p228) target = $region20
        $region19: #{tpu_custom_call.1} parent=11 // pred_region
          _
        $region20: #{tpu_custom_call.1} parent=11 // pred_fallthru
          _
        // Predicated region
        $region21: #{tpu_custom_call.1} parent=11 // pred_check
          %p231 = pneg %p119
        $region22: #{tpu_custom_call.1} parent=11 // pred_check_branch
          %233 = sbr.rel (%p231) target = $region24
        $region23: #{tpu_custom_call.1} parent=11 // pred_region
          _
        $region24: #{tpu_custom_call.1} parent=11 // pred_fallthru
          _
        // Predicated region
        $region25: #{tpu_custom_call.1} parent=11 // pred_check
          %p234 = pneg %p140
        $region26: #{tpu_custom_call.1} parent=11 // pred_check_branch
          %236 = sbr.rel (%p234) target = $region28
        $region27: #{tpu_custom_call.1} parent=11 // pred_region
          _
        $region28: #{tpu_custom_call.1} parent=11 // pred_fallthru
          _
        // Predicated region
        $region29: #{tpu_custom_call.1} parent=11 // pred_check
          %p237 = pneg %p161
        $region30: #{tpu_custom_call.1} parent=11 // pred_check_branch
          %239 = sbr.rel (%p237) target = $region32
        $region31: #{tpu_custom_call.1} parent=11 // pred_region
          _
        $region32: #{tpu_custom_call.1} parent=11 // pred_fallthru
          _
        // Predicated region
        $region33: #{tpu_custom_call.1} parent=11 // pred_check
          %p240 = pneg %p182
        $region34: #{tpu_custom_call.1} parent=11 // pred_check_branch
          %242 = sbr.rel (%p240) target = $region36
        $region35: #{tpu_custom_call.1} parent=11 // pred_region
          _
        $region36: #{tpu_custom_call.1} parent=11 // pred_fallthru
          _
      $region12: #{tpu_custom_call.1} parent=5 // pred_fallthru
        _
      %p243 = scmp.lt.s32.totalorder %s16, 2
      // Predicated region
      $region37: #{tpu_custom_call.1} parent=5 // pred_check
        %p244 = pneg %p243
      $region38: #{tpu_custom_call.1} parent=5 // pred_check_branch
        %246 = sbr.rel (%p244) target = $region40
      $region39: #{tpu_custom_call.1} parent=5 // pred_region
        // Predicated region
        $region41: #{tpu_custom_call.1} parent=39 // pred_check
          %p247 = pneg %p50
        $region42: #{tpu_custom_call.1} parent=39 // pred_check_branch
          %249 = sbr.rel (%p247) target = $region44
        $region43: #{tpu_custom_call.1} parent=39 // pred_region
          %s250 = smul.u32 2, %s24
          %p251 = scmp.lt.s32.totalorder %s23, 1
          %s252 = scalar_select %p251, %s23, 1
          %p253 = scmp.lt.s32.totalorder %s250, 1
          %s254 = scalar_select %p253, %s250, 1
          %s255 = smul.addr %s252, 6
          %s256 = sadd.s32 %s254, %s255
          %s257 = smul.addr %s256, 4
          %s258 = scalar_lea.vmem %s0, %s257
          %s259 = smul.u32 2, %s24
        $region44: #{tpu_custom_call.1} parent=39 // pred_fallthru
          _
      $region40: #{tpu_custom_call.1} parent=5 // pred_fallthru
        _
      %p260 = scmp.le.s32.totalorder 1, %s16
      %p261 = scmp.lt.s32.totalorder %s16, 3
      %p262 = pnand %p260, %p261
      %p263 = pneg %p262
      // Predicated region
      $region45: #{tpu_custom_call.1} parent=5 // pred_check
        _
      $region46: #{tpu_custom_call.1} parent=5 // pred_check_branch
        %265 = sbr.rel (%p262) target = $region48
      $region47: #{tpu_custom_call.1} parent=5 // pred_region
        %s266 = ssub.s32 %s16, 1
        %s267 = smul.u32 2, %s26
        %p268 = scmp.lt.s32.totalorder %s25, 1
        %s269 = scalar_select %p268, %s25, 1
        %p270 = scmp.lt.s32.totalorder %s267, 1
        %s271 = scalar_select %p270, %s267, 1
        %s272 = smul.addr %s269, 6
        %s273 = sadd.s32 %s271, %s272
        %s274 = smul.addr %s273, 4
        %s275 = scalar_lea.vmem %s0, %s274
        %p276 = pneg %p56
        %p277 = pneg %p53
        %p278 = pneg %p77
        %p279 = pneg %p74
        %p280 = pneg %p98
        %p281 = pneg %p95
        %p282 = pneg %p119
        %p283 = pneg %p116
        %p284 = pneg %p140
        %p285 = pneg %p137
        %p286 = pneg %p161
        %p287 = pneg %p158
        %p288 = pneg %p182
        %p289 = pneg %p179
        %p290 = pneg %p210
        %p291 = pneg %p207
        %s292 = sand.u32 %s197, 1
        %s293 = scalar_lea.sflag [#allocation4], %s292
        %s294 = sand.u32 %s197, 1
        %s295 = smul.addr %s294, 64
        %s296 = scalar_lea.vmem [#allocation3], %s295
        %s297 = smul.u32 2, %s26
        %p298 = scmp.lt.s32.totalorder %s25, 1
        %s299 = scalar_select %p298, %s25, 1
        %p300 = scmp.lt.s32.totalorder %s297, 1
        %s301 = scalar_select %p300, %s297, 1
        %s302 = smul.addr %s299, 6
        %s303 = sadd.s32 %s301, %s302
        %s304 = smul.addr %s303, 4
        %s305 = scalar_lea.vmem %s0, %s304
        %s306 = smul.u32 2, %s26
        %s307 = smul.u32 2, %s26
        %309 = vst [vmem:[#allocation2] sm:$0xff] 0
        %310 = vst [vmem:[#allocation2 + $0x38] sm:$0xff] 0
        %311 = vst [vmem:[#allocation2 + $0x70] sm:$0xff] 0
        %312 = vst [vmem:[#allocation2 + $0xa8] sm:$0xff] 0
        %313 = vst [vmem:[#allocation2 + $0x1f0] sm:$0xff] 0
        %314 = vst [vmem:[#allocation2 + $0x228] sm:$0xff] 0
        %315 = vst [vmem:[#allocation2 + $0x260] sm:$0xff] 0
        %316 = vst [vmem:[#allocation2 + $0x298] sm:$0xff] 0
        %v317 = vld [vmem:[%s1] sm:$0xf]
        %v318 = vld [vmem:[%s1 + $0x4] sm:$0xf]
        %v319 = vld [vmem:[%s1 + $0x8] sm:$0xf]
        %v320 = vld [vmem:[%s1 + $0xc] sm:$0xf]
        %v321 = vld [vmem:[%s2] sm:$0xff]
        %v322 = vld [vmem:[%s2 + $0x8] sm:$0xff]
        %v323 = vld [vmem:[%s2 + $0x10] sm:$0xff]
        %v324 = vld [vmem:[%s2 + $0x18] sm:$0xff]
        %v325 = vld [vmem:[%s305] sm:$0x77]
        %327 = vset.pattern.permute.xlu0 0
        %328 = vperm.xlu0 %327, %v321
        %v329 = vpop.permute.xlu0 %328
        %332 = vset.pattern.permute.xlu0 0
        %333 = vperm.xlu0 %332, %v322
        %v334 = vpop.permute.xlu0 %333
        %337 = vset.pattern.permute.xlu0 0
        %338 = vperm.xlu0 %337, %v323
        %v339 = vpop.permute.xlu0 %338
        %342 = vset.pattern.permute.xlu0 0
        %343 = vperm.xlu0 %342, %v324
        %v344 = vpop.permute.xlu0 %343
        %v350 = vunpack.c.l.b16 %v317
        %v351 = vunpack.c.l.b16 %v318
        %v352 = vunpack.c.l.b16 %v319
        %v353 = vunpack.c.l.b16 %v320
        %v354 = vpack.c.b16 %v351, %v350
        %v355 = vpack.c.b16 %v353, %v352
        %v357 = vunpack.c.l.b16 %v325
        %v358 = vunpack.c.h.b16 %v325
        %v359 = vpack.c.b16 %v357, %v357
        %v360 = vpack.c.b16 %v358, %v358
        %vm361 = vcmask 48128
        %v363 = vsel %vm361, %v354, 0
        %v366 = vsel %vm361, %v355, 0
        %vm368 = vcmask 1042432
        %v370 = vsel %vm368, %v359, 0
        %v373 = vsel %vm368, %v360, 0
        %375 = vmatprep.subr.bf16.mxu0 0
        %376 = vmatpush1.bf16.msra.mxu0 0
        %377 = vmatprep.subr.bf16.mxu0 0
        %378 = vmatpush1.bf16.msra.mxu0 0
        %379 = vmatprep.subr.bf16.mxu0 0
        %380 = vmatpush1.bf16.msra.mxu0 0
        %381 = vmatprep.subr.bf16.mxu0 0
        %382 = vmatpush1.bf16.msra.mxu0 0
        %383 = vmatprep.subr.bf16.mxu0 0
        %384 = vmatpush1.bf16.msra.mxu0 0
        %385 = vmatprep.subr.bf16.mxu0 0
        %386 = vmatpush1.bf16.msra.mxu0 0
        %387 = vmatprep.subr.bf16.mxu0 0
        %388 = vmatpush1.bf16.msra.mxu0 0
        %389 = vmatprep.subr.bf16.mxu0 %v373
        %390 = vmatpush1.bf16.msra.mxu0 %v370
        %391 = vmatprep.subr.bf16.mxu0 0
        %392 = vmatpush2.bf16.msra.mxu0 0
        %393 = vmatprep.subr.bf16.mxu0 0
        %394 = vmatpush2.bf16.msra.mxu0 0
        %395 = vmatprep.subr.bf16.mxu0 0
        %396 = vmatpush2.bf16.msra.mxu0 0
        %397 = vmatprep.subr.bf16.mxu0 0
        %398 = vmatpush2.bf16.msra.mxu0 0
        %399 = vmatprep.subr.bf16.mxu0 0
        %400 = vmatpush2.bf16.msra.mxu0 0
        %401 = vmatprep.subr.bf16.mxu0 0
        %402 = vmatpush2.bf16.msra.mxu0 0
        %403 = vmatprep.subr.bf16.mxu0 0
        %404 = vmatpush2.bf16.msra.mxu0 0
        %405 = vmatprep.subr.bf16.mxu0 0
        %406 = vmatpush2.bf16.msra.mxu0 0
        %407 = vmatprep.mubr.bf16.mxu0 0
        %408 = vmatmul.mubr.bf16.gmra.mxu0 %v363
        %v409 = vpop.f32.mrf.mxu0
        %v410 = vadd.f32 %v329, %v409
        %v411 = vpop.f32.mrf.mxu0
        %v412 = vadd.f32 %v329, %v411
        %v413 = vpop.f32.mrf.mxu0
        %v414 = vadd.f32 %v334, %v413
        %v415 = vpop.f32.mrf.mxu0
        %v416 = vadd.f32 %v334, %v415
        %417 = vmatprep.mubr.bf16.mxu0 0
        %418 = vmatmul.mubr.bf16.gmra.mxu0 %v366
        %v419 = vpop.f32.mrf.mxu0
        %v420 = vadd.f32 %v339, %v419
        %v421 = vpop.f32.mrf.mxu0
        %v422 = vadd.f32 %v339, %v421
        %v423 = vpop.f32.mrf.mxu0
        %v424 = vadd.f32 %v344, %v423
        %v425 = vpop.f32.mrf.mxu0
        %v426 = vadd.f32 %v344, %v425
        %427 = vdwg.mxu0
        %vm428 = vcmp.gt.f32.partialorder %v410, 0.0
        %vm429 = vcmp.gt.f32.partialorder %v412, 0.0
        %vm430 = vcmp.gt.f32.partialorder %v414, 0.0
        %vm431 = vcmp.gt.f32.partialorder %v416, 0.0
        %vm432 = vcmp.gt.f32.partialorder %v420, 0.0
        %vm433 = vcmp.gt.f32.partialorder %v422, 0.0
        %vm434 = vcmp.gt.f32.partialorder %v424, 0.0
        %vm435 = vcmp.gt.f32.partialorder %v426, 0.0
        %v436 = vmul.f32 %v410, 0.1
        %v437 = vmul.f32 %v412, 0.1
        %v438 = vmul.f32 %v414, 0.1
        %v439 = vmul.f32 %v416, 0.1
        %v440 = vmul.f32 %v420, 0.1
        %v441 = vmul.f32 %v422, 0.1
        %v442 = vmul.f32 %v424, 0.1
        %v443 = vmul.f32 %v426, 0.1
        %v444 = vsel %vm428, %v410, %v436
        %v445 = vsel %vm429, %v412, %v437
        %v446 = vsel %vm430, %v414, %v438
        %v447 = vsel %vm431, %v416, %v439
        %v448 = vsel %vm432, %v420, %v440
        %v449 = vsel %vm433, %v422, %v441
        %v450 = vsel %vm434, %v424, %v442
        %v451 = vsel %vm435, %v426, %v443
        %v452 = vpack.c.bf16 %v446, %v444
        %v453 = vpack.c.bf16 %v447, %v445
        %v454 = vpack.c.bf16 %v450, %v448
        %v455 = vpack.c.bf16 %v451, %v449
        %v460 = vunpack.c.l.b16 %v452
        %v461 = vunpack.c.l.b16 %v453
        %v462 = vunpack.c.h.b16 %v452
        %v463 = vunpack.c.h.b16 %v453
        %v464 = vunpack.c.l.b16 %v454
        %v465 = vunpack.c.l.b16 %v455
        %v466 = vunpack.c.h.b16 %v454
        %v467 = vunpack.c.h.b16 %v455
        %v468 = vpack.c.b16 %v461, %v460
        %v469 = vpack.c.b16 %v463, %v462
        %v470 = vpack.c.b16 %v465, %v464
        %v471 = vpack.c.b16 %v467, %v466
        %476 = vst [vmem:[#allocation2 + $0xe0] sm:$0xff] %v468
        %477 = vst [vmem:[#allocation2 + $0x118] sm:$0xff] %v469
        %478 = vst [vmem:[#allocation2 + $0x150] sm:$0xff] %v470
        %479 = vst [vmem:[#allocation2 + $0x188] sm:$0xff] %v471
        %v480 = vld [vmem:[%s305] sm:$0xee]
        %v482 = vunpack.c.l.b16 %v480
        %v483 = vunpack.c.h.b16 %v480
        %v484 = vpack.c.b16 %v482, %v482
        %v485 = vpack.c.b16 %v483, %v483
        %v486 = vrot.slane %v484, 1
        %v487 = vrot.slane %v485, 1
        %v489 = vsel %vm368, %v486, 0
        %v492 = vsel %vm368, %v487, 0
        %494 = vmatprep.subr.bf16.mxu0 0
        %495 = vmatpush1.bf16.msra.mxu0 0
        %496 = vmatprep.subr.bf16.mxu0 0
        %497 = vmatpush1.bf16.msra.mxu0 0
        %498 = vmatprep.subr.bf16.mxu0 0
        %499 = vmatpush1.bf16.msra.mxu0 0
        %500 = vmatprep.subr.bf16.mxu0 0
        %501 = vmatpush1.bf16.msra.mxu0 0
        %502 = vmatprep.subr.bf16.mxu0 0
        %503 = vmatpush1.bf16.msra.mxu0 0
        %504 = vmatprep.subr.bf16.mxu0 0
        %505 = vmatpush1.bf16.msra.mxu0 0
        %506 = vmatprep.subr.bf16.mxu0 0
        %507 = vmatpush1.bf16.msra.mxu0 0
        %508 = vmatprep.subr.bf16.mxu0 %v492
        %509 = vmatpush1.bf16.msra.mxu0 %v489
        %510 = vmatprep.subr.bf16.mxu0 0
        %511 = vmatpush2.bf16.msra.mxu0 0
        %512 = vmatprep.subr.bf16.mxu0 0
        %513 = vmatpush2.bf16.msra.mxu0 0
        %514 = vmatprep.subr.bf16.mxu0 0
        %515 = vmatpush2.bf16.msra.mxu0 0
        %516 = vmatprep.subr.bf16.mxu0 0
        %517 = vmatpush2.bf16.msra.mxu0 0
        %518 = vmatprep.subr.bf16.mxu0 0
        %519 = vmatpush2.bf16.msra.mxu0 0
        %520 = vmatprep.subr.bf16.mxu0 0
        %521 = vmatpush2.bf16.msra.mxu0 0
        %522 = vmatprep.subr.bf16.mxu0 0
        %523 = vmatpush2.bf16.msra.mxu0 0
        %524 = vmatprep.subr.bf16.mxu0 0
        %525 = vmatpush2.bf16.msra.mxu0 0
        %526 = vmatprep.mubr.bf16.mxu0 0
        %527 = vmatmul.mubr.bf16.gmra.mxu0 %v363
        %v528 = vpop.f32.mrf.mxu0
        %v529 = vadd.f32 %v329, %v528
        %v530 = vpop.f32.mrf.mxu0
        %v531 = vadd.f32 %v329, %v530
        %v532 = vpop.f32.mrf.mxu0
        %v533 = vadd.f32 %v334, %v532
        %v534 = vpop.f32.mrf.mxu0
        %v535 = vadd.f32 %v334, %v534
        %536 = vmatprep.mubr.bf16.mxu0 0
        %537 = vmatmul.mubr.bf16.gmra.mxu0 %v366
        %v538 = vpop.f32.mrf.mxu0
        %v539 = vadd.f32 %v339, %v538
        %v540 = vpop.f32.mrf.mxu0
        %v541 = vadd.f32 %v339, %v540
        %v542 = vpop.f32.mrf.mxu0
        %v543 = vadd.f32 %v344, %v542
        %v544 = vpop.f32.mrf.mxu0
        %v545 = vadd.f32 %v344, %v544
        %546 = vdwg.mxu0
        %vm547 = vcmp.gt.f32.partialorder %v529, 0.0
        %vm548 = vcmp.gt.f32.partialorder %v531, 0.0
        %vm549 = vcmp.gt.f32.partialorder %v533, 0.0
        %vm550 = vcmp.gt.f32.partialorder %v535, 0.0
        %vm551 = vcmp.gt.f32.partialorder %v539, 0.0
        %vm552 = vcmp.gt.f32.partialorder %v541, 0.0
        %vm553 = vcmp.gt.f32.partialorder %v543, 0.0
        %vm554 = vcmp.gt.f32.partialorder %v545, 0.0
        %v555 = vmul.f32 %v529, 0.1
        %v556 = vmul.f32 %v531, 0.1
        %v557 = vmul.f32 %v533, 0.1
        %v558 = vmul.f32 %v535, 0.1
        %v559 = vmul.f32 %v539, 0.1
        %v560 = vmul.f32 %v541, 0.1
        %v561 = vmul.f32 %v543, 0.1
        %v562 = vmul.f32 %v545, 0.1
        %v563 = vsel %vm547, %v529, %v555
        %v564 = vsel %vm548, %v531, %v556
        %v565 = vsel %vm549, %v533, %v557
        %v566 = vsel %vm550, %v535, %v558
        %v567 = vsel %vm551, %v539, %v559
        %v568 = vsel %vm552, %v541, %v560
        %v569 = vsel %vm553, %v543, %v561
        %v570 = vsel %vm554, %v545, %v562
        %v571 = vpack.c.bf16 %v565, %v563
        %v572 = vpack.c.bf16 %v566, %v564
        %v573 = vpack.c.bf16 %v569, %v567
        %v574 = vpack.c.bf16 %v570, %v568
        %v579 = vunpack.c.l.b16 %v571
        %v580 = vunpack.c.l.b16 %v572
        %v581 = vunpack.c.h.b16 %v571
        %v582 = vunpack.c.h.b16 %v572
        %v583 = vunpack.c.l.b16 %v573
        %v584 = vunpack.c.l.b16 %v574
        %v585 = vunpack.c.h.b16 %v573
        %v586 = vunpack.c.h.b16 %v574
        %v587 = vpack.c.b16 %v580, %v579
        %v588 = vpack.c.b16 %v582, %v581
        %v589 = vpack.c.b16 %v584, %v583
        %v590 = vpack.c.b16 %v586, %v585
        %595 = vst [vmem:[#allocation2 + $0xe8] sm:$0xff] %v587
        %596 = vst [vmem:[#allocation2 + $0x120] sm:$0xff] %v588
        %597 = vst [vmem:[#allocation2 + $0x158] sm:$0xff] %v589
        %598 = vst [vmem:[#allocation2 + $0x190] sm:$0xff] %v590
        %v599 = vld [vmem:[%s305] sm:$0xcc]
        %v600 = vld [vmem:[%s305 + $0x8] sm:$0x11]
        %v603 = vunpack.c.l.b16 %v599
        %v604 = vunpack.c.h.b16 %v599
        %v605 = vunpack.c.l.b16 %v600
        %v606 = vunpack.c.h.b16 %v600
        %v607 = vpack.c.b16 %v605, %v603
        %v608 = vpack.c.b16 %v606, %v604
        %v609 = vrot.slane %v607, 2
        %v610 = vrot.slane %v608, 2
        %v612 = vsel %vm368, %v609, 0
        %v615 = vsel %vm368, %v610, 0
        %617 = vmatprep.subr.bf16.mxu0 0
        %618 = vmatpush1.bf16.msra.mxu0 0
        %619 = vmatprep.subr.bf16.mxu0 0
        %620 = vmatpush1.bf16.msra.mxu0 0
        %621 = vmatprep.subr.bf16.mxu0 0
        %622 = vmatpush1.bf16.msra.mxu0 0
        %623 = vmatprep.subr.bf16.mxu0 0
        %624 = vmatpush1.bf16.msra.mxu0 0
        %625 = vmatprep.subr.bf16.mxu0 0
        %626 = vmatpush1.bf16.msra.mxu0 0
        %627 = vmatprep.subr.bf16.mxu0 0
        %628 = vmatpush1.bf16.msra.mxu0 0
        %629 = vmatprep.subr.bf16.mxu0 0
        %630 = vmatpush1.bf16.msra.mxu0 0
        %631 = vmatprep.subr.bf16.mxu0 %v615
        %632 = vmatpush1.bf16.msra.mxu0 %v612
        %633 = vmatprep.subr.bf16.mxu0 0
        %634 = vmatpush2.bf16.msra.mxu0 0
        %635 = vmatprep.subr.bf16.mxu0 0
        %636 = vmatpush2.bf16.msra.mxu0 0
        %637 = vmatprep.subr.bf16.mxu0 0
        %638 = vmatpush2.bf16.msra.mxu0 0
        %639 = vmatprep.subr.bf16.mxu0 0
        %640 = vmatpush2.bf16.msra.mxu0 0
        %641 = vmatprep.subr.bf16.mxu0 0
        %642 = vmatpush2.bf16.msra.mxu0 0
        %643 = vmatprep.subr.bf16.mxu0 0
        %644 = vmatpush2.bf16.msra.mxu0 0
        %645 = vmatprep.subr.bf16.mxu0 0
        %646 = vmatpush2.bf16.msra.mxu0 0
        %647 = vmatprep.subr.bf16.mxu0 0
        %648 = vmatpush2.bf16.msra.mxu0 0
        %649 = vmatprep.mubr.bf16.mxu0 0
        %650 = vmatmul.mubr.bf16.gmra.mxu0 %v363
        %v651 = vpop.f32.mrf.mxu0
        %v652 = vadd.f32 %v329, %v651
        %v653 = vpop.f32.mrf.mxu0
        %v654 = vadd.f32 %v329, %v653
        %v655 = vpop.f32.mrf.mxu0
        %v656 = vadd.f32 %v334, %v655
        %v657 = vpop.f32.mrf.mxu0
        %v658 = vadd.f32 %v334, %v657
        %659 = vmatprep.mubr.bf16.mxu0 0
        %660 = vmatmul.mubr.bf16.gmra.mxu0 %v366
        %v661 = vpop.f32.mrf.mxu0
        %v662 = vadd.f32 %v339, %v661
        %v663 = vpop.f32.mrf.mxu0
        %v664 = vadd.f32 %v339, %v663
        %v665 = vpop.f32.mrf.mxu0
        %v666 = vadd.f32 %v344, %v665
        %v667 = vpop.f32.mrf.mxu0
        %v668 = vadd.f32 %v344, %v667
        %669 = vdwg.mxu0
        %vm670 = vcmp.gt.f32.partialorder %v652, 0.0
        %vm671 = vcmp.gt.f32.partialorder %v654, 0.0
        %vm672 = vcmp.gt.f32.partialorder %v656, 0.0
        %vm673 = vcmp.gt.f32.partialorder %v658, 0.0
        %vm674 = vcmp.gt.f32.partialorder %v662, 0.0
        %vm675 = vcmp.gt.f32.partialorder %v664, 0.0
        %vm676 = vcmp.gt.f32.partialorder %v666, 0.0
        %vm677 = vcmp.gt.f32.partialorder %v668, 0.0
        %v678 = vmul.f32 %v652, 0.1
        %v679 = vmul.f32 %v654, 0.1
        %v680 = vmul.f32 %v656, 0.1
        %v681 = vmul.f32 %v658, 0.1
        %v682 = vmul.f32 %v662, 0.1
        %v683 = vmul.f32 %v664, 0.1
        %v684 = vmul.f32 %v666, 0.1
        %v685 = vmul.f32 %v668, 0.1
        %v686 = vsel %vm670, %v652, %v678
        %v687 = vsel %vm671, %v654, %v679
        %v688 = vsel %vm672, %v656, %v680
        %v689 = vsel %vm673, %v658, %v681
        %v690 = vsel %vm674, %v662, %v682
        %v691 = vsel %vm675, %v664, %v683
        %v692 = vsel %vm676, %v666, %v684
        %v693 = vsel %vm677, %v668, %v685
        %v694 = vpack.c.bf16 %v688, %v686
        %v695 = vpack.c.bf16 %v689, %v687
        %v696 = vpack.c.bf16 %v692, %v690
        %v697 = vpack.c.bf16 %v693, %v691
        %v702 = vunpack.c.l.b16 %v694
        %v703 = vunpack.c.l.b16 %v695
        %v704 = vunpack.c.h.b16 %v694
        %v705 = vunpack.c.h.b16 %v695
        %v706 = vunpack.c.l.b16 %v696
        %v707 = vunpack.c.l.b16 %v697
        %v708 = vunpack.c.h.b16 %v696
        %v709 = vunpack.c.h.b16 %v697
        %v710 = vpack.c.b16 %v703, %v702
        %v711 = vpack.c.b16 %v705, %v704
        %v712 = vpack.c.b16 %v707, %v706
        %v713 = vpack.c.b16 %v709, %v708
        %718 = vst [vmem:[#allocation2 + $0xf0] sm:$0xff] %v710
        %719 = vst [vmem:[#allocation2 + $0x128] sm:$0xff] %v711
        %720 = vst [vmem:[#allocation2 + $0x160] sm:$0xff] %v712
        %721 = vst [vmem:[#allocation2 + $0x198] sm:$0xff] %v713
        %v722 = vld [vmem:[%s305] sm:$0x88]
        %v723 = vld [vmem:[%s305 + $0x8] sm:$0x33]
        %v726 = vunpack.c.l.b16 %v722
        %v727 = vunpack.c.h.b16 %v722
        %v728 = vunpack.c.l.b16 %v723
        %v729 = vunpack.c.h.b16 %v723
        %v730 = vpack.c.b16 %v728, %v726
        %v731 = vpack.c.b16 %v729, %v727
        %v732 = vrot.slane %v730, 3
        %v733 = vrot.slane %v731, 3
        %v735 = vsel %vm368, %v732, 0
        %v738 = vsel %vm368, %v733, 0
        %740 = vmatprep.subr.bf16.mxu0 0
        %741 = vmatpush1.bf16.msra.mxu0 0
        %742 = vmatprep.subr.bf16.mxu0 0
        %743 = vmatpush1.bf16.msra.mxu0 0
        %744 = vmatprep.subr.bf16.mxu0 0
        %745 = vmatpush1.bf16.msra.mxu0 0
        %746 = vmatprep.subr.bf16.mxu0 0
        %747 = vmatpush1.bf16.msra.mxu0 0
        %748 = vmatprep.subr.bf16.mxu0 0
        %749 = vmatpush1.bf16.msra.mxu0 0
        %750 = vmatprep.subr.bf16.mxu0 0
        %751 = vmatpush1.bf16.msra.mxu0 0
        %752 = vmatprep.subr.bf16.mxu0 0
        %753 = vmatpush1.bf16.msra.mxu0 0
        %754 = vmatprep.subr.bf16.mxu0 %v738
        %755 = vmatpush1.bf16.msra.mxu0 %v735
        %756 = vmatprep.subr.bf16.mxu0 0
        %757 = vmatpush2.bf16.msra.mxu0 0
        %758 = vmatprep.subr.bf16.mxu0 0
        %759 = vmatpush2.bf16.msra.mxu0 0
        %760 = vmatprep.subr.bf16.mxu0 0
        %761 = vmatpush2.bf16.msra.mxu0 0
        %762 = vmatprep.subr.bf16.mxu0 0
        %763 = vmatpush2.bf16.msra.mxu0 0
        %764 = vmatprep.subr.bf16.mxu0 0
        %765 = vmatpush2.bf16.msra.mxu0 0
        %766 = vmatprep.subr.bf16.mxu0 0
        %767 = vmatpush2.bf16.msra.mxu0 0
        %768 = vmatprep.subr.bf16.mxu0 0
        %769 = vmatpush2.bf16.msra.mxu0 0
        %770 = vmatprep.subr.bf16.mxu0 0
        %771 = vmatpush2.bf16.msra.mxu0 0
        %772 = vmatprep.mubr.bf16.mxu0 0
        %773 = vmatmul.mubr.bf16.gmra.mxu0 %v363
        %v774 = vpop.f32.mrf.mxu0
        %v775 = vadd.f32 %v329, %v774
        %v776 = vpop.f32.mrf.mxu0
        %v777 = vadd.f32 %v329, %v776
        %v778 = vpop.f32.mrf.mxu0
        %v779 = vadd.f32 %v334, %v778
        %v780 = vpop.f32.mrf.mxu0
        %v781 = vadd.f32 %v334, %v780
        %782 = vmatprep.mubr.bf16.mxu0 0
        %783 = vmatmul.mubr.bf16.gmra.mxu0 %v366
        %v784 = vpop.f32.mrf.mxu0
        %v785 = vadd.f32 %v339, %v784
        %v786 = vpop.f32.mrf.mxu0
        %v787 = vadd.f32 %v339, %v786
        %v788 = vpop.f32.mrf.mxu0
        %v789 = vadd.f32 %v344, %v788
        %v790 = vpop.f32.mrf.mxu0
        %v791 = vadd.f32 %v344, %v790
        %792 = vdwg.mxu0
        %vm793 = vcmp.gt.f32.partialorder %v775, 0.0
        %vm794 = vcmp.gt.f32.partialorder %v777, 0.0
        %vm795 = vcmp.gt.f32.partialorder %v779, 0.0
        %vm796 = vcmp.gt.f32.partialorder %v781, 0.0
        %vm797 = vcmp.gt.f32.partialorder %v785, 0.0
        %vm798 = vcmp.gt.f32.partialorder %v787, 0.0
        %vm799 = vcmp.gt.f32.partialorder %v789, 0.0
        %vm800 = vcmp.gt.f32.partialorder %v791, 0.0
        %v801 = vmul.f32 %v775, 0.1
        %v802 = vmul.f32 %v777, 0.1
        %v803 = vmul.f32 %v779, 0.1
        %v804 = vmul.f32 %v781, 0.1
        %v805 = vmul.f32 %v785, 0.1
        %v806 = vmul.f32 %v787, 0.1
        %v807 = vmul.f32 %v789, 0.1
        %v808 = vmul.f32 %v791, 0.1
        %v809 = vsel %vm793, %v775, %v801
        %v810 = vsel %vm794, %v777, %v802
        %v811 = vsel %vm795, %v779, %v803
        %v812 = vsel %vm796, %v781, %v804
        %v813 = vsel %vm797, %v785, %v805
        %v814 = vsel %vm798, %v787, %v806
        %v815 = vsel %vm799, %v789, %v807
        %v816 = vsel %vm800, %v791, %v808
        %v817 = vpack.c.bf16 %v811, %v809
        %v818 = vpack.c.bf16 %v812, %v810
        %v819 = vpack.c.bf16 %v815, %v813
        %v820 = vpack.c.bf16 %v816, %v814
        %v825 = vunpack.c.l.b16 %v817
        %v826 = vunpack.c.l.b16 %v818
        %v827 = vunpack.c.h.b16 %v817
        %v828 = vunpack.c.h.b16 %v818
        %v829 = vunpack.c.l.b16 %v819
        %v830 = vunpack.c.l.b16 %v820
        %v831 = vunpack.c.h.b16 %v819
        %v832 = vunpack.c.h.b16 %v820
        %v833 = vpack.c.b16 %v826, %v825
        %v834 = vpack.c.b16 %v828, %v827
        %v835 = vpack.c.b16 %v830, %v829
        %v836 = vpack.c.b16 %v832, %v831
        %841 = vst [vmem:[#allocation2 + $0xf8] sm:$0xff] %v833
        %842 = vst [vmem:[#allocation2 + $0x130] sm:$0xff] %v834
        %843 = vst [vmem:[#allocation2 + $0x168] sm:$0xff] %v835
        %844 = vst [vmem:[#allocation2 + $0x1a0] sm:$0xff] %v836
        %v845 = vld [vmem:[%s305 + $0x8] sm:$0x77]
        %v847 = vunpack.c.l.b16 %v845
        %v848 = vunpack.c.h.b16 %v845
        %v849 = vpack.c.b16 %v847, %v847
        %v850 = vpack.c.b16 %v848, %v848
        %v852 = vsel %vm368, %v849, 0
        %v855 = vsel %vm368, %v850, 0
        %857 = vmatprep.subr.bf16.mxu0 0
        %858 = vmatpush1.bf16.msra.mxu0 0
        %859 = vmatprep.subr.bf16.mxu0 0
        %860 = vmatpush1.bf16.msra.mxu0 0
        %861 = vmatprep.subr.bf16.mxu0 0
        %862 = vmatpush1.bf16.msra.mxu0 0
        %863 = vmatprep.subr.bf16.mxu0 0
        %864 = vmatpush1.bf16.msra.mxu0 0
        %865 = vmatprep.subr.bf16.mxu0 0
        %866 = vmatpush1.bf16.msra.mxu0 0
        %867 = vmatprep.subr.bf16.mxu0 0
        %868 = vmatpush1.bf16.msra.mxu0 0
        %869 = vmatprep.subr.bf16.mxu0 0
        %870 = vmatpush1.bf16.msra.mxu0 0
        %871 = vmatprep.subr.bf16.mxu0 %v855
        %872 = vmatpush1.bf16.msra.mxu0 %v852
        %873 = vmatprep.subr.bf16.mxu0 0
        %874 = vmatpush2.bf16.msra.mxu0 0
        %875 = vmatprep.subr.bf16.mxu0 0
        %876 = vmatpush2.bf16.msra.mxu0 0
        %877 = vmatprep.subr.bf16.mxu0 0
        %878 = vmatpush2.bf16.msra.mxu0 0
        %879 = vmatprep.subr.bf16.mxu0 0
        %880 = vmatpush2.bf16.msra.mxu0 0
        %881 = vmatprep.subr.bf16.mxu0 0
        %882 = vmatpush2.bf16.msra.mxu0 0
        %883 = vmatprep.subr.bf16.mxu0 0
        %884 = vmatpush2.bf16.msra.mxu0 0
        %885 = vmatprep.subr.bf16.mxu0 0
        %886 = vmatpush2.bf16.msra.mxu0 0
        %887 = vmatprep.subr.bf16.mxu0 0
        %888 = vmatpush2.bf16.msra.mxu0 0
        %889 = vmatprep.mubr.bf16.mxu0 0
        %890 = vmatmul.mubr.bf16.gmra.mxu0 %v363
        %v891 = vpop.f32.mrf.mxu0
        %v892 = vadd.f32 %v329, %v891
        %v893 = vpop.f32.mrf.mxu0
        %v894 = vadd.f32 %v329, %v893
        %v895 = vpop.f32.mrf.mxu0
        %v896 = vadd.f32 %v334, %v895
        %v897 = vpop.f32.mrf.mxu0
        %v898 = vadd.f32 %v334, %v897
        %899 = vmatprep.mubr.bf16.mxu0 0
        %900 = vmatmul.mubr.bf16.gmra.mxu0 %v366
        %v901 = vpop.f32.mrf.mxu0
        %v902 = vadd.f32 %v339, %v901
        %v903 = vpop.f32.mrf.mxu0
        %v904 = vadd.f32 %v339, %v903
        %v905 = vpop.f32.mrf.mxu0
        %v906 = vadd.f32 %v344, %v905
        %v907 = vpop.f32.mrf.mxu0
        %v908 = vadd.f32 %v344, %v907
        %909 = vdwg.mxu0
        %vm910 = vcmp.gt.f32.partialorder %v892, 0.0
        %vm911 = vcmp.gt.f32.partialorder %v894, 0.0
        %vm912 = vcmp.gt.f32.partialorder %v896, 0.0
        %vm913 = vcmp.gt.f32.partialorder %v898, 0.0
        %vm914 = vcmp.gt.f32.partialorder %v902, 0.0
        %vm915 = vcmp.gt.f32.partialorder %v904, 0.0
        %vm916 = vcmp.gt.f32.partialorder %v906, 0.0
        %vm917 = vcmp.gt.f32.partialorder %v908, 0.0
        %v918 = vmul.f32 %v892, 0.1
        %v919 = vmul.f32 %v894, 0.1
        %v920 = vmul.f32 %v896, 0.1
        %v921 = vmul.f32 %v898, 0.1
        %v922 = vmul.f32 %v902, 0.1
        %v923 = vmul.f32 %v904, 0.1
        %v924 = vmul.f32 %v906, 0.1
        %v925 = vmul.f32 %v908, 0.1
        %v926 = vsel %vm910, %v892, %v918
        %v927 = vsel %vm911, %v894, %v919
        %v928 = vsel %vm912, %v896, %v920
        %v929 = vsel %vm913, %v898, %v921
        %v930 = vsel %vm914, %v902, %v922
        %v931 = vsel %vm915, %v904, %v923
        %v932 = vsel %vm916, %v906, %v924
        %v933 = vsel %vm917, %v908, %v925
        %v934 = vpack.c.bf16 %v928, %v926
        %v935 = vpack.c.bf16 %v929, %v927
        %v936 = vpack.c.bf16 %v932, %v930
        %v937 = vpack.c.bf16 %v933, %v931
        %v942 = vunpack.c.l.b16 %v934
        %v943 = vunpack.c.l.b16 %v935
        %v944 = vunpack.c.h.b16 %v934
        %v945 = vunpack.c.h.b16 %v935
        %v946 = vunpack.c.l.b16 %v936
        %v947 = vunpack.c.l.b16 %v937
        %v948 = vunpack.c.h.b16 %v936
        %v949 = vunpack.c.h.b16 %v937
        %v950 = vpack.c.b16 %v943, %v942
        %v951 = vpack.c.b16 %v945, %v944
        %v952 = vpack.c.b16 %v947, %v946
        %v953 = vpack.c.b16 %v949, %v948
        %958 = vst [vmem:[#allocation2 + $0x100] sm:$0xff] %v950
        %959 = vst [vmem:[#allocation2 + $0x138] sm:$0xff] %v951
        %960 = vst [vmem:[#allocation2 + $0x170] sm:$0xff] %v952
        %961 = vst [vmem:[#allocation2 + $0x1a8] sm:$0xff] %v953
        %v962 = vld [vmem:[%s305 + $0x8] sm:$0xee]
        %v964 = vunpack.c.l.b16 %v962
        %v965 = vunpack.c.h.b16 %v962
        %v966 = vpack.c.b16 %v964, %v964
        %v967 = vpack.c.b16 %v965, %v965
        %v968 = vrot.slane %v966, 1
        %v969 = vrot.slane %v967, 1
        %v971 = vsel %vm368, %v968, 0
        %v974 = vsel %vm368, %v969, 0
        %976 = vmatprep.subr.bf16.mxu0 0
        %977 = vmatpush1.bf16.msra.mxu0 0
        %978 = vmatprep.subr.bf16.mxu0 0
        %979 = vmatpush1.bf16.msra.mxu0 0
        %980 = vmatprep.subr.bf16.mxu0 0
        %981 = vmatpush1.bf16.msra.mxu0 0
        %982 = vmatprep.subr.bf16.mxu0 0
        %983 = vmatpush1.bf16.msra.mxu0 0
        %984 = vmatprep.subr.bf16.mxu0 0
        %985 = vmatpush1.bf16.msra.mxu0 0
        %986 = vmatprep.subr.bf16.mxu0 0
        %987 = vmatpush1.bf16.msra.mxu0 0
        %988 = vmatprep.subr.bf16.mxu0 0
        %989 = vmatpush1.bf16.msra.mxu0 0
        %990 = vmatprep.subr.bf16.mxu0 %v974
        %991 = vmatpush1.bf16.msra.mxu0 %v971
        %992 = vmatprep.subr.bf16.mxu0 0
        %993 = vmatpush2.bf16.msra.mxu0 0
        %994 = vmatprep.subr.bf16.mxu0 0
        %995 = vmatpush2.bf16.msra.mxu0 0
        %996 = vmatprep.subr.bf16.mxu0 0
        %997 = vmatpush2.bf16.msra.mxu0 0
        %998 = vmatprep.subr.bf16.mxu0 0
        %999 = vmatpush2.bf16.msra.mxu0 0
        %1000 = vmatprep.subr.bf16.mxu0 0
        %1001 = vmatpush2.bf16.msra.mxu0 0
        %1002 = vmatprep.subr.bf16.mxu0 0
        %1003 = vmatpush2.bf16.msra.mxu0 0
        %1004 = vmatprep.subr.bf16.mxu0 0
        %1005 = vmatpush2.bf16.msra.mxu0 0
        %1006 = vmatprep.subr.bf16.mxu0 0
        %1007 = vmatpush2.bf16.msra.mxu0 0
        %1008 = vmatprep.mubr.bf16.mxu0 0
        %1009 = vmatmul.mubr.bf16.gmra.mxu0 %v363
        %v1010 = vpop.f32.mrf.mxu0
        %v1011 = vadd.f32 %v329, %v1010
        %v1012 = vpop.f32.mrf.mxu0
        %v1013 = vadd.f32 %v329, %v1012
        %v1014 = vpop.f32.mrf.mxu0
        %v1015 = vadd.f32 %v334, %v1014
        %v1016 = vpop.f32.mrf.mxu0
        %v1017 = vadd.f32 %v334, %v1016
        %1018 = vmatprep.mubr.bf16.mxu0 0
        %1019 = vmatmul.mubr.bf16.gmra.mxu0 %v366
        %v1020 = vpop.f32.mrf.mxu0
        %v1021 = vadd.f32 %v339, %v1020
        %v1022 = vpop.f32.mrf.mxu0
        %v1023 = vadd.f32 %v339, %v1022
        %v1024 = vpop.f32.mrf.mxu0
        %v1025 = vadd.f32 %v344, %v1024
        %v1026 = vpop.f32.mrf.mxu0
        %v1027 = vadd.f32 %v344, %v1026
        %1028 = vdwg.mxu0
        %vm1029 = vcmp.gt.f32.partialorder %v1011, 0.0
        %vm1030 = vcmp.gt.f32.partialorder %v1013, 0.0
        %vm1031 = vcmp.gt.f32.partialorder %v1015, 0.0
        %vm1032 = vcmp.gt.f32.partialorder %v1017, 0.0
        %vm1033 = vcmp.gt.f32.partialorder %v1021, 0.0
        %vm1034 = vcmp.gt.f32.partialorder %v1023, 0.0
        %vm1035 = vcmp.gt.f32.partialorder %v1025, 0.0
        %vm1036 = vcmp.gt.f32.partialorder %v1027, 0.0
        %v1037 = vmul.f32 %v1011, 0.1
        %v1038 = vmul.f32 %v1013, 0.1
        %v1039 = vmul.f32 %v1015, 0.1
        %v1040 = vmul.f32 %v1017, 0.1
        %v1041 = vmul.f32 %v1021, 0.1
        %v1042 = vmul.f32 %v1023, 0.1
        %v1043 = vmul.f32 %v1025, 0.1
        %v1044 = vmul.f32 %v1027, 0.1
        %v1045 = vsel %vm1029, %v1011, %v1037
        %v1046 = vsel %vm1030, %v1013, %v1038
        %v1047 = vsel %vm1031, %v1015, %v1039
        %v1048 = vsel %vm1032, %v1017, %v1040
        %v1049 = vsel %vm1033, %v1021, %v1041
        %v1050 = vsel %vm1034, %v1023, %v1042
        %v1051 = vsel %vm1035, %v1025, %v1043
        %v1052 = vsel %vm1036, %v1027, %v1044
        %v1053 = vpack.c.bf16 %v1047, %v1045
        %v1054 = vpack.c.bf16 %v1048, %v1046
        %v1055 = vpack.c.bf16 %v1051, %v1049
        %v1056 = vpack.c.bf16 %v1052, %v1050
        %v1061 = vunpack.c.l.b16 %v1053
        %v1062 = vunpack.c.l.b16 %v1054
        %v1063 = vunpack.c.h.b16 %v1053
        %v1064 = vunpack.c.h.b16 %v1054
        %v1065 = vunpack.c.l.b16 %v1055
        %v1066 = vunpack.c.l.b16 %v1056
        %v1067 = vunpack.c.h.b16 %v1055
        %v1068 = vunpack.c.h.b16 %v1056
        %v1069 = vpack.c.b16 %v1062, %v1061
        %v1070 = vpack.c.b16 %v1064, %v1063
        %v1071 = vpack.c.b16 %v1066, %v1065
        %v1072 = vpack.c.b16 %v1068, %v1067
        %1077 = vst [vmem:[#allocation2 + $0x108] sm:$0xff] %v1069
        %1078 = vst [vmem:[#allocation2 + $0x140] sm:$0xff] %v1070
        %1079 = vst [vmem:[#allocation2 + $0x178] sm:$0xff] %v1071
        %1080 = vst [vmem:[#allocation2 + $0x1b0] sm:$0xff] %v1072
        %v1081 = vld [vmem:[%s305 + $0x8] sm:$0xcc]
        %v1082 = vld [vmem:[%s305 + $0x10] sm:$0x11]
        %v1085 = vunpack.c.l.b16 %v1081
        %v1086 = vunpack.c.h.b16 %v1081
        %v1087 = vunpack.c.l.b16 %v1082
        %v1088 = vunpack.c.h.b16 %v1082
        %v1089 = vpack.c.b16 %v1087, %v1085
        %v1090 = vpack.c.b16 %v1088, %v1086
        %v1091 = vrot.slane %v1089, 2
        %v1092 = vrot.slane %v1090, 2
        %v1094 = vsel %vm368, %v1091, 0
        %v1097 = vsel %vm368, %v1092, 0
        %1099 = vmatprep.subr.bf16.mxu0 0
        %1100 = vmatpush1.bf16.msra.mxu0 0
        %1101 = vmatprep.subr.bf16.mxu0 0
        %1102 = vmatpush1.bf16.msra.mxu0 0
        %1103 = vmatprep.subr.bf16.mxu0 0
        %1104 = vmatpush1.bf16.msra.mxu0 0
        %1105 = vmatprep.subr.bf16.mxu0 0
        %1106 = vmatpush1.bf16.msra.mxu0 0
        %1107 = vmatprep.subr.bf16.mxu0 0
        %1108 = vmatpush1.bf16.msra.mxu0 0
        %1109 = vmatprep.subr.bf16.mxu0 0
        %1110 = vmatpush1.bf16.msra.mxu0 0
        %1111 = vmatprep.subr.bf16.mxu0 0
        %1112 = vmatpush1.bf16.msra.mxu0 0
        %1113 = vmatprep.subr.bf16.mxu0 %v1097
        %1114 = vmatpush1.bf16.msra.mxu0 %v1094
        %1115 = vmatprep.subr.bf16.mxu0 0
        %1116 = vmatpush2.bf16.msra.mxu0 0
        %1117 = vmatprep.subr.bf16.mxu0 0
        %1118 = vmatpush2.bf16.msra.mxu0 0
        %1119 = vmatprep.subr.bf16.mxu0 0
        %1120 = vmatpush2.bf16.msra.mxu0 0
        %1121 = vmatprep.subr.bf16.mxu0 0
        %1122 = vmatpush2.bf16.msra.mxu0 0
        %1123 = vmatprep.subr.bf16.mxu0 0
        %1124 = vmatpush2.bf16.msra.mxu0 0
        %1125 = vmatprep.subr.bf16.mxu0 0
        %1126 = vmatpush2.bf16.msra.mxu0 0
        %1127 = vmatprep.subr.bf16.mxu0 0
        %1128 = vmatpush2.bf16.msra.mxu0 0
        %1129 = vmatprep.subr.bf16.mxu0 0
        %1130 = vmatpush2.bf16.msra.mxu0 0
        %1131 = vmatprep.mubr.bf16.mxu0 0
        %1132 = vmatmul.mubr.bf16.gmra.mxu0 %v363
        %v1133 = vpop.f32.mrf.mxu0
        %v1134 = vadd.f32 %v329, %v1133
        %v1135 = vpop.f32.mrf.mxu0
        %v1136 = vadd.f32 %v329, %v1135
        %v1137 = vpop.f32.mrf.mxu0
        %v1138 = vadd.f32 %v334, %v1137
        %v1139 = vpop.f32.mrf.mxu0
        %v1140 = vadd.f32 %v334, %v1139
        %1141 = vmatprep.mubr.bf16.mxu0 0
        %1142 = vmatmul.mubr.bf16.gmra.mxu0 %v366
        %v1143 = vpop.f32.mrf.mxu0
        %v1144 = vadd.f32 %v339, %v1143
        %v1145 = vpop.f32.mrf.mxu0
        %v1146 = vadd.f32 %v339, %v1145
        %v1147 = vpop.f32.mrf.mxu0
        %v1148 = vadd.f32 %v344, %v1147
        %v1149 = vpop.f32.mrf.mxu0
        %v1150 = vadd.f32 %v344, %v1149
        %1151 = vdwg.mxu0
        %vm1152 = vcmp.gt.f32.partialorder %v1134, 0.0
        %vm1153 = vcmp.gt.f32.partialorder %v1136, 0.0
        %vm1154 = vcmp.gt.f32.partialorder %v1138, 0.0
        %vm1155 = vcmp.gt.f32.partialorder %v1140, 0.0
        %vm1156 = vcmp.gt.f32.partialorder %v1144, 0.0
        %vm1157 = vcmp.gt.f32.partialorder %v1146, 0.0
        %vm1158 = vcmp.gt.f32.partialorder %v1148, 0.0
        %vm1159 = vcmp.gt.f32.partialorder %v1150, 0.0
        %v1160 = vmul.f32 %v1134, 0.1
        %v1161 = vmul.f32 %v1136, 0.1
        %v1162 = vmul.f32 %v1138, 0.1
        %v1163 = vmul.f32 %v1140, 0.1
        %v1164 = vmul.f32 %v1144, 0.1
        %v1165 = vmul.f32 %v1146, 0.1
        %v1166 = vmul.f32 %v1148, 0.1
        %v1167 = vmul.f32 %v1150, 0.1
        %v1168 = vsel %vm1152, %v1134, %v1160
        %v1169 = vsel %vm1153, %v1136, %v1161
        %v1170 = vsel %vm1154, %v1138, %v1162
        %v1171 = vsel %vm1155, %v1140, %v1163
        %v1172 = vsel %vm1156, %v1144, %v1164
        %v1173 = vsel %vm1157, %v1146, %v1165
        %v1174 = vsel %vm1158, %v1148, %v1166
        %v1175 = vsel %vm1159, %v1150, %v1167
        %v1176 = vpack.c.bf16 %v1170, %v1168
        %v1177 = vpack.c.bf16 %v1171, %v1169
        %v1178 = vpack.c.bf16 %v1174, %v1172
        %v1179 = vpack.c.bf16 %v1175, %v1173
        %v1184 = vunpack.c.l.b16 %v1176
        %v1185 = vunpack.c.l.b16 %v1177
        %v1186 = vunpack.c.h.b16 %v1176
        %v1187 = vunpack.c.h.b16 %v1177
        %v1188 = vunpack.c.l.b16 %v1178
        %v1189 = vunpack.c.l.b16 %v1179
        %v1190 = vunpack.c.h.b16 %v1178
        %v1191 = vunpack.c.h.b16 %v1179
        %v1192 = vpack.c.b16 %v1185, %v1184
        %v1193 = vpack.c.b16 %v1187, %v1186
        %v1194 = vpack.c.b16 %v1189, %v1188
        %v1195 = vpack.c.b16 %v1191, %v1190
        %1200 = vst [vmem:[#allocation2 + $0x110] sm:$0xff] %v1192
        %1201 = vst [vmem:[#allocation2 + $0x148] sm:$0xff] %v1193
        %1202 = vst [vmem:[#allocation2 + $0x180] sm:$0xff] %v1194
        %1203 = vst [vmem:[#allocation2 + $0x1b8] sm:$0xff] %v1195
        %v1204 = vld [vmem:[#allocation2 + $0xe0] sm:$0xff]
        %v1205 = vld [vmem:[#allocation2 + $0x118] sm:$0xff]
        %v1206 = vld [vmem:[#allocation2 + $0x150] sm:$0xff]
        %v1207 = vld [vmem:[#allocation2 + $0x188] sm:$0xff]
        %1208 = vst [vmem:[#allocation2 + $0x8] sm:$0xff] %v1204
        %1209 = vst [vmem:[#allocation2 + $0x40] sm:$0xff] %v1205
        %1210 = vst [vmem:[#allocation2 + $0x78] sm:$0xff] %v1206
        %1211 = vst [vmem:[#allocation2 + $0xb0] sm:$0xff] %v1207
        %v1212 = vld [vmem:[#allocation2 + $0xe8] sm:$0xff]
        %v1213 = vld [vmem:[#allocation2 + $0x120] sm:$0xff]
        %v1214 = vld [vmem:[#allocation2 + $0x158] sm:$0xff]
        %v1215 = vld [vmem:[#allocation2 + $0x190] sm:$0xff]
        %1216 = vst [vmem:[#allocation2 + $0x10] sm:$0xff] %v1212
        %1217 = vst [vmem:[#allocation2 + $0x48] sm:$0xff] %v1213
        %1218 = vst [vmem:[#allocation2 + $0x80] sm:$0xff] %v1214
        %1219 = vst [vmem:[#allocation2 + $0xb8] sm:$0xff] %v1215
        %1220 = vst [vmem:[#allocation2 + $0x1c0] sm:$0xff] %v1212
        %1221 = vst [vmem:[#allocation2 + $0x1f8] sm:$0xff] %v1213
        %1222 = vst [vmem:[#allocation2 + $0x230] sm:$0xff] %v1214
        %1223 = vst [vmem:[#allocation2 + $0x268] sm:$0xff] %v1215
        %v1224 = vld [vmem:[#allocation2 + $0xf0] sm:$0xff]
        %v1225 = vld [vmem:[#allocation2 + $0x128] sm:$0xff]
        %v1226 = vld [vmem:[#allocation2 + $0x160] sm:$0xff]
        %v1227 = vld [vmem:[#allocation2 + $0x198] sm:$0xff]
        %1228 = vst [vmem:[#allocation2 + $0x18] sm:$0xff] %v1224
        %1229 = vst [vmem:[#allocation2 + $0x50] sm:$0xff] %v1225
        %1230 = vst [vmem:[#allocation2 + $0x88] sm:$0xff] %v1226
        %1231 = vst [vmem:[#allocation2 + $0xc0] sm:$0xff] %v1227
        %1232 = vst [vmem:[#allocation2 + $0x1c8] sm:$0xff] %v1224
        %1233 = vst [vmem:[#allocation2 + $0x200] sm:$0xff] %v1225
        %1234 = vst [vmem:[#allocation2 + $0x238] sm:$0xff] %v1226
        %1235 = vst [vmem:[#allocation2 + $0x270] sm:$0xff] %v1227
        %v1236 = vld [vmem:[#allocation2 + $0xf8] sm:$0xff]
        %v1237 = vld [vmem:[#allocation2 + $0x130] sm:$0xff]
        %v1238 = vld [vmem:[#allocation2 + $0x168] sm:$0xff]
        %v1239 = vld [vmem:[#allocation2 + $0x1a0] sm:$0xff]
        %1240 = vst [vmem:[#allocation2 + $0x20] sm:$0xff] %v1236
        %1241 = vst [vmem:[#allocation2 + $0x58] sm:$0xff] %v1237
        %1242 = vst [vmem:[#allocation2 + $0x90] sm:$0xff] %v1238
        %1243 = vst [vmem:[#allocation2 + $0xc8] sm:$0xff] %v1239
        %1244 = vst [vmem:[#allocation2 + $0x1d0] sm:$0xff] %v1236
        %1245 = vst [vmem:[#allocation2 + $0x208] sm:$0xff] %v1237
        %1246 = vst [vmem:[#allocation2 + $0x240] sm:$0xff] %v1238
        %1247 = vst [vmem:[#allocation2 + $0x278] sm:$0xff] %v1239
        %v1248 = vld [vmem:[#allocation2 + $0x100] sm:$0xff]
        %v1249 = vld [vmem:[#allocation2 + $0x138] sm:$0xff]
        %v1250 = vld [vmem:[#allocation2 + $0x170] sm:$0xff]
        %v1251 = vld [vmem:[#allocation2 + $0x1a8] sm:$0xff]
        %1252 = vst [vmem:[#allocation2 + $0x28] sm:$0xff] %v1248
        %1253 = vst [vmem:[#allocation2 + $0x60] sm:$0xff] %v1249
        %1254 = vst [vmem:[#allocation2 + $0x98] sm:$0xff] %v1250
        %1255 = vst [vmem:[#allocation2 + $0xd0] sm:$0xff] %v1251
        %1256 = vst [vmem:[#allocation2 + $0x1d8] sm:$0xff] %v1248
        %1257 = vst [vmem:[#allocation2 + $0x210] sm:$0xff] %v1249
        %1258 = vst [vmem:[#allocation2 + $0x248] sm:$0xff] %v1250
        %1259 = vst [vmem:[#allocation2 + $0x280] sm:$0xff] %v1251
        %v1260 = vld [vmem:[#allocation2 + $0x108] sm:$0xff]
        %v1261 = vld [vmem:[#allocation2 + $0x140] sm:$0xff]
        %v1262 = vld [vmem:[#allocation2 + $0x178] sm:$0xff]
        %v1263 = vld [vmem:[#allocation2 + $0x1b0] sm:$0xff]
        %1264 = vst [vmem:[#allocation2 + $0x30] sm:$0xff] %v1260
        %1265 = vst [vmem:[#allocation2 + $0x68] sm:$0xff] %v1261
        %1266 = vst [vmem:[#allocation2 + $0xa0] sm:$0xff] %v1262
        %1267 = vst [vmem:[#allocation2 + $0xd8] sm:$0xff] %v1263
        %1268 = vst [vmem:[#allocation2 + $0x1e0] sm:$0xff] %v1260
        %1269 = vst [vmem:[#allocation2 + $0x218] sm:$0xff] %v1261
        %1270 = vst [vmem:[#allocation2 + $0x250] sm:$0xff] %v1262
        %1271 = vst [vmem:[#allocation2 + $0x288] sm:$0xff] %v1263
        %v1272 = vld [vmem:[#allocation2 + $0x110] sm:$0xff]
        %v1273 = vld [vmem:[#allocation2 + $0x148] sm:$0xff]
        %v1274 = vld [vmem:[#allocation2 + $0x180] sm:$0xff]
        %v1275 = vld [vmem:[#allocation2 + $0x1b8] sm:$0xff]
        %1276 = vst [vmem:[#allocation2 + $0x1e8] sm:$0xff] %v1272
        %1277 = vst [vmem:[#allocation2 + $0x220] sm:$0xff] %v1273
        %1278 = vst [vmem:[#allocation2 + $0x258] sm:$0xff] %v1274
        %1279 = vst [vmem:[#allocation2 + $0x290] sm:$0xff] %v1275
        %v1280 = vld [vmem:[%s3] sm:$0xf]
        %v1281 = vld [vmem:[%s3 + $0x4] sm:$0xf]
        %v1282 = vld [vmem:[%s3 + $0x8] sm:$0xf]
        %v1283 = vld [vmem:[%s3 + $0xc] sm:$0xf]
        %v1284 = vld [vmem:[%s4] sm:$0xff]
        %v1285 = vld [vmem:[%s4 + $0x8] sm:$0xff]
        %v1286 = vld [vmem:[%s4 + $0x10] sm:$0xff]
        %v1287 = vld [vmem:[%s4 + $0x18] sm:$0xff]
        %v1288 = vld [vmem:[#allocation2] sm:$0xff]
        %v1289 = vld [vmem:[#allocation2 + $0x38] sm:$0xff]
        %v1290 = vld [vmem:[#allocation2 + $0x70] sm:$0xff]
        %v1291 = vld [vmem:[#allocation2 + $0xa8] sm:$0xff]
        %v1292 = vld [vmem:[#allocation2 + $0xe0] sm:$0xff]
        %v1293 = vld [vmem:[#allocation2 + $0x118] sm:$0xff]
        %v1294 = vld [vmem:[#allocation2 + $0x150] sm:$0xff]
        %v1295 = vld [vmem:[#allocation2 + $0x188] sm:$0xff]
        %v1296 = vld [vmem:[#allocation2 + $0x1c0] sm:$0xff]
        %v1297 = vld [vmem:[#allocation2 + $0x1f8] sm:$0xff]
        %v1298 = vld [vmem:[#allocation2 + $0x230] sm:$0xff]
        %v1299 = vld [vmem:[#allocation2 + $0x268] sm:$0xff]
        %1301 = vset.pattern.permute.xlu0 0
        %1302 = vperm.xlu0 %1301, %v1284
        %v1303 = vpop.permute.xlu0 %1302
        %1306 = vset.pattern.permute.xlu0 0
        %1307 = vperm.xlu0 %1306, %v1285
        %v1308 = vpop.permute.xlu0 %1307
        %1311 = vset.pattern.permute.xlu0 0
        %1312 = vperm.xlu0 %1311, %v1286
        %v1313 = vpop.permute.xlu0 %1312
        %1316 = vset.pattern.permute.xlu0 0
        %1317 = vperm.xlu0 %1316, %v1287
        %v1318 = vpop.permute.xlu0 %1317
        %v1324 = vunpack.c.l.b16 %v1280
        %v1325 = vunpack.c.l.b16 %v1281
        %v1326 = vunpack.c.l.b16 %v1282
        %v1327 = vunpack.c.l.b16 %v1283
        %v1328 = vpack.c.b16 %v1325, %v1324
        %v1329 = vpack.c.b16 %v1327, %v1326
        %v1342 = vunpack.c.l.b16 %v1288
        %v1343 = vunpack.c.h.b16 %v1288
        %v1344 = vunpack.c.l.b16 %v1289
        %v1345 = vunpack.c.h.b16 %v1289
        %v1346 = vunpack.c.l.b16 %v1290
        %v1347 = vunpack.c.h.b16 %v1290
        %v1348 = vunpack.c.l.b16 %v1291
        %v1349 = vunpack.c.h.b16 %v1291
        %v1350 = vunpack.c.l.b16 %v1292
        %v1351 = vunpack.c.h.b16 %v1292
        %v1352 = vunpack.c.l.b16 %v1293
        %v1353 = vunpack.c.h.b16 %v1293
        %v1354 = vunpack.c.l.b16 %v1294
        %v1355 = vunpack.c.h.b16 %v1294
        %v1356 = vunpack.c.l.b16 %v1295
        %v1357 = vunpack.c.h.b16 %v1295
        %v1358 = vunpack.c.l.b16 %v1296
        %v1359 = vunpack.c.h.b16 %v1296
        %v1360 = vunpack.c.l.b16 %v1297
        %v1361 = vunpack.c.h.b16 %v1297
        %v1362 = vunpack.c.l.b16 %v1298
        %v1363 = vunpack.c.h.b16 %v1298
        %v1364 = vunpack.c.l.b16 %v1299
        %v1365 = vunpack.c.h.b16 %v1299
        %v1366 = vpack.c.b16 %v1344, %v1342
        %v1367 = vpack.c.b16 %v1345, %v1343
        %v1368 = vpack.c.b16 %v1348, %v1346
        %v1369 = vpack.c.b16 %v1349, %v1347
        %v1370 = vpack.c.b16 %v1352, %v1350
        %v1371 = vpack.c.b16 %v1353, %v1351
        %v1372 = vpack.c.b16 %v1356, %v1354
        %v1373 = vpack.c.b16 %v1357, %v1355
        %v1374 = vpack.c.b16 %v1360, %v1358
        %v1375 = vpack.c.b16 %v1361, %v1359
        %v1376 = vpack.c.b16 %v1364, %v1362
        %v1377 = vpack.c.b16 %v1365, %v1363
        %vm1390 = vcmask 785408
        %v1392 = vsel %vm1390, %v1328, 0
        %v1395 = vsel %vm1390, %v1329, 0
        %1397 = vmatprep.subr.bf16.mxu0 0
        %1398 = vmatpush1.bf16.msra.mxu0 0
        %1399 = vmatprep.subr.bf16.mxu0 0
        %1400 = vmatpush1.bf16.msra.mxu0 0
        %1401 = vmatprep.subr.bf16.mxu0 %v1377
        %1402 = vmatpush1.bf16.msra.mxu0 %v1376
        %1403 = vmatprep.subr.bf16.mxu0 %v1375
        %1404 = vmatpush1.bf16.msra.mxu0 %v1374
        %1405 = vmatprep.subr.bf16.mxu0 %v1373
        %1406 = vmatpush1.bf16.msra.mxu0 %v1372
        %1407 = vmatprep.subr.bf16.mxu0 %v1371
        %1408 = vmatpush1.bf16.msra.mxu0 %v1370
        %1409 = vmatprep.subr.bf16.mxu0 %v1369
        %1410 = vmatpush1.bf16.msra.mxu0 %v1368
        %1411 = vmatprep.subr.bf16.mxu0 %v1367
        %1412 = vmatpush1.bf16.msra.mxu0 %v1366
        %1413 = vmatprep.subr.bf16.mxu0 0
        %1414 = vmatpush2.bf16.msra.mxu0 0
        %1415 = vmatprep.subr.bf16.mxu0 0
        %1416 = vmatpush2.bf16.msra.mxu0 0
        %1417 = vmatprep.subr.bf16.mxu0 0
        %1418 = vmatpush2.bf16.msra.mxu0 0
        %1419 = vmatprep.subr.bf16.mxu0 0
        %1420 = vmatpush2.bf16.msra.mxu0 0
        %1421 = vmatprep.subr.bf16.mxu0 0
        %1422 = vmatpush2.bf16.msra.mxu0 0
        %1423 = vmatprep.subr.bf16.mxu0 0
        %1424 = vmatpush2.bf16.msra.mxu0 0
        %1425 = vmatprep.subr.bf16.mxu0 0
        %1426 = vmatpush2.bf16.msra.mxu0 0
        %1427 = vmatprep.subr.bf16.mxu0 0
        %1428 = vmatpush2.bf16.msra.mxu0 0
        %1429 = vmatprep.mubr.bf16.mxu0 0
        %1430 = vmatmul.mubr.bf16.gmra.mxu0 %v1392
        %v1431 = vpop.f32.mrf.mxu0
        %v1432 = vadd.f32 %v1303, %v1431
        %v1433 = vpop.f32.mrf.mxu0
        %v1434 = vadd.f32 %v1303, %v1433
        %v1435 = vpop.f32.mrf.mxu0
        %v1436 = vadd.f32 %v1308, %v1435
        %v1437 = vpop.f32.mrf.mxu0
        %v1438 = vadd.f32 %v1308, %v1437
        %1439 = vmatprep.mubr.bf16.mxu0 0
        %1440 = vmatmul.mubr.bf16.gmra.mxu0 %v1395
        %v1441 = vpop.f32.mrf.mxu0
        %v1442 = vadd.f32 %v1313, %v1441
        %v1443 = vpop.f32.mrf.mxu0
        %v1444 = vadd.f32 %v1313, %v1443
        %v1445 = vpop.f32.mrf.mxu0
        %v1446 = vadd.f32 %v1318, %v1445
        %v1447 = vpop.f32.mrf.mxu0
        %v1448 = vadd.f32 %v1318, %v1447
        %1449 = vdwg.mxu0
        %vm1450 = vcmp.gt.f32.partialorder %v1432, 0.0
        %vm1451 = vcmp.gt.f32.partialorder %v1434, 0.0
        %vm1452 = vcmp.gt.f32.partialorder %v1436, 0.0
        %vm1453 = vcmp.gt.f32.partialorder %v1438, 0.0
        %vm1454 = vcmp.gt.f32.partialorder %v1442, 0.0
        %vm1455 = vcmp.gt.f32.partialorder %v1444, 0.0
        %vm1456 = vcmp.gt.f32.partialorder %v1446, 0.0
        %vm1457 = vcmp.gt.f32.partialorder %v1448, 0.0
        %v1458 = vmul.f32 %v1432, 0.1
        %v1459 = vmul.f32 %v1434, 0.1
        %v1460 = vmul.f32 %v1436, 0.1
        %v1461 = vmul.f32 %v1438, 0.1
        %v1462 = vmul.f32 %v1442, 0.1
        %v1463 = vmul.f32 %v1444, 0.1
        %v1464 = vmul.f32 %v1446, 0.1
        %v1465 = vmul.f32 %v1448, 0.1
        %v1466 = vsel %vm1450, %v1432, %v1458
        %v1467 = vsel %vm1451, %v1434, %v1459
        %v1468 = vsel %vm1452, %v1436, %v1460
        %v1469 = vsel %vm1453, %v1438, %v1461
        %v1470 = vsel %vm1454, %v1442, %v1462
        %v1471 = vsel %vm1455, %v1444, %v1463
        %v1472 = vsel %vm1456, %v1446, %v1464
        %v1473 = vsel %vm1457, %v1448, %v1465
        %v1474 = vpack.c.bf16 %v1468, %v1466
        %v1475 = vpack.c.bf16 %v1469, %v1467
        %v1476 = vpack.c.bf16 %v1472, %v1470
        %v1477 = vpack.c.bf16 %v1473, %v1471
        %v1482 = vunpack.c.l.b16 %v1474
        %v1483 = vunpack.c.l.b16 %v1475
        %v1484 = vunpack.c.h.b16 %v1474
        %v1485 = vunpack.c.h.b16 %v1475
        %v1486 = vunpack.c.l.b16 %v1476
        %v1487 = vunpack.c.l.b16 %v1477
        %v1488 = vunpack.c.h.b16 %v1476
        %v1489 = vunpack.c.h.b16 %v1477
        %v1490 = vpack.c.b16 %v1483, %v1482
        %v1491 = vpack.c.b16 %v1485, %v1484
        %v1492 = vpack.c.b16 %v1487, %v1486
        %v1493 = vpack.c.b16 %v1489, %v1488
        %1498 = vst [vmem:[#allocation2 + $0xe0] sm:$0xff] %v1490
        %1499 = vst [vmem:[#allocation2 + $0x118] sm:$0xff] %v1491
        %1500 = vst [vmem:[#allocation2 + $0x150] sm:$0xff] %v1492
        %1501 = vst [vmem:[#allocation2 + $0x188] sm:$0xff] %v1493
        %v1502 = vld [vmem:[#allocation2 + $0x8] sm:$0xff]
        %v1503 = vld [vmem:[#allocation2 + $0x40] sm:$0xff]
        %v1504 = vld [vmem:[#allocation2 + $0x78] sm:$0xff]
        %v1505 = vld [vmem:[#allocation2 + $0xb0] sm:$0xff]
        %v1506 = vld [vmem:[#allocation2 + $0xe8] sm:$0xff]
        %v1507 = vld [vmem:[#allocation2 + $0x120] sm:$0xff]
        %v1508 = vld [vmem:[#allocation2 + $0x158] sm:$0xff]
        %v1509 = vld [vmem:[#allocation2 + $0x190] sm:$0xff]
        %v1510 = vld [vmem:[#allocation2 + $0x1c8] sm:$0xff]
        %v1511 = vld [vmem:[#allocation2 + $0x200] sm:$0xff]
        %v1512 = vld [vmem:[#allocation2 + $0x238] sm:$0xff]
        %v1513 = vld [vmem:[#allocation2 + $0x270] sm:$0xff]
        %v1526 = vunpack.c.l.b16 %v1502
        %v1527 = vunpack.c.h.b16 %v1502
        %v1528 = vunpack.c.l.b16 %v1503
        %v1529 = vunpack.c.h.b16 %v1503
        %v1530 = vunpack.c.l.b16 %v1504
        %v1531 = vunpack.c.h.b16 %v1504
        %v1532 = vunpack.c.l.b16 %v1505
        %v1533 = vunpack.c.h.b16 %v1505
        %v1534 = vunpack.c.l.b16 %v1506
        %v1535 = vunpack.c.h.b16 %v1506
        %v1536 = vunpack.c.l.b16 %v1507
        %v1537 = vunpack.c.h.b16 %v1507
        %v1538 = vunpack.c.l.b16 %v1508
        %v1539 = vunpack.c.h.b16 %v1508
        %v1540 = vunpack.c.l.b16 %v1509
        %v1541 = vunpack.c.h.b16 %v1509
        %v1542 = vunpack.c.l.b16 %v1510
        %v1543 = vunpack.c.h.b16 %v1510
        %v1544 = vunpack.c.l.b16 %v1511
        %v1545 = vunpack.c.h.b16 %v1511
        %v1546 = vunpack.c.l.b16 %v1512
        %v1547 = vunpack.c.h.b16 %v1512
        %v1548 = vunpack.c.l.b16 %v1513
        %v1549 = vunpack.c.h.b16 %v1513
        %v1550 = vpack.c.b16 %v1528, %v1526
        %v1551 = vpack.c.b16 %v1529, %v1527
        %v1552 = vpack.c.b16 %v1532, %v1530
        %v1553 = vpack.c.b16 %v1533, %v1531
        %v1554 = vpack.c.b16 %v1536, %v1534
        %v1555 = vpack.c.b16 %v1537, %v1535
        %v1556 = vpack.c.b16 %v1540, %v1538
        %v1557 = vpack.c.b16 %v1541, %v1539
        %v1558 = vpack.c.b16 %v1544, %v1542
        %v1559 = vpack.c.b16 %v1545, %v1543
        %v1560 = vpack.c.b16 %v1548, %v1546
        %v1561 = vpack.c.b16 %v1549, %v1547
        %1574 = vmatprep.subr.bf16.mxu0 0
        %1575 = vmatpush1.bf16.msra.mxu0 0
        %1576 = vmatprep.subr.bf16.mxu0 0
        %1577 = vmatpush1.bf16.msra.mxu0 0
        %1578 = vmatprep.subr.bf16.mxu0 %v1561
        %1579 = vmatpush1.bf16.msra.mxu0 %v1560
        %1580 = vmatprep.subr.bf16.mxu0 %v1559
        %1581 = vmatpush1.bf16.msra.mxu0 %v1558
        %1582 = vmatprep.subr.bf16.mxu0 %v1557
        %1583 = vmatpush1.bf16.msra.mxu0 %v1556
        %1584 = vmatprep.subr.bf16.mxu0 %v1555
        %1585 = vmatpush1.bf16.msra.mxu0 %v1554
        %1586 = vmatprep.subr.bf16.mxu0 %v1553
        %1587 = vmatpush1.bf16.msra.mxu0 %v1552
        %1588 = vmatprep.subr.bf16.mxu0 %v1551
        %1589 = vmatpush1.bf16.msra.mxu0 %v1550
        %1590 = vmatprep.subr.bf16.mxu0 0
        %1591 = vmatpush2.bf16.msra.mxu0 0
        %1592 = vmatprep.subr.bf16.mxu0 0
        %1593 = vmatpush2.bf16.msra.mxu0 0
        %1594 = vmatprep.subr.bf16.mxu0 0
        %1595 = vmatpush2.bf16.msra.mxu0 0
        %1596 = vmatprep.subr.bf16.mxu0 0
        %1597 = vmatpush2.bf16.msra.mxu0 0
        %1598 = vmatprep.subr.bf16.mxu0 0
        %1599 = vmatpush2.bf16.msra.mxu0 0
        %1600 = vmatprep.subr.bf16.mxu0 0
        %1601 = vmatpush2.bf16.msra.mxu0 0
        %1602 = vmatprep.subr.bf16.mxu0 0
        %1603 = vmatpush2.bf16.msra.mxu0 0
        %1604 = vmatprep.subr.bf16.mxu0 0
        %1605 = vmatpush2.bf16.msra.mxu0 0
        %1606 = vmatprep.mubr.bf16.mxu0 0
        %1607 = vmatmul.mubr.bf16.gmra.mxu0 %v1392
        %v1608 = vpop.f32.mrf.mxu0
        %v1609 = vadd.f32 %v1303, %v1608
        %v1610 = vpop.f32.mrf.mxu0
        %v1611 = vadd.f32 %v1303, %v1610
        %v1612 = vpop.f32.mrf.mxu0
        %v1613 = vadd.f32 %v1308, %v1612
        %v1614 = vpop.f32.mrf.mxu0
        %v1615 = vadd.f32 %v1308, %v1614
        %1616 = vmatprep.mubr.bf16.mxu0 0
        %1617 = vmatmul.mubr.bf16.gmra.mxu0 %v1395
        %v1618 = vpop.f32.mrf.mxu0
        %v1619 = vadd.f32 %v1313, %v1618
        %v1620 = vpop.f32.mrf.mxu0
        %v1621 = vadd.f32 %v1313, %v1620
        %v1622 = vpop.f32.mrf.mxu0
        %v1623 = vadd.f32 %v1318, %v1622
        %v1624 = vpop.f32.mrf.mxu0
        %v1625 = vadd.f32 %v1318, %v1624
        %1626 = vdwg.mxu0
        %vm1627 = vcmp.gt.f32.partialorder %v1609, 0.0
        %vm1628 = vcmp.gt.f32.partialorder %v1611, 0.0
        %vm1629 = vcmp.gt.f32.partialorder %v1613, 0.0
        %vm1630 = vcmp.gt.f32.partialorder %v1615, 0.0
        %vm1631 = vcmp.gt.f32.partialorder %v1619, 0.0
        %vm1632 = vcmp.gt.f32.partialorder %v1621, 0.0
        %vm1633 = vcmp.gt.f32.partialorder %v1623, 0.0
        %vm1634 = vcmp.gt.f32.partialorder %v1625, 0.0
        %v1635 = vmul.f32 %v1609, 0.1
        %v1636 = vmul.f32 %v1611, 0.1
        %v1637 = vmul.f32 %v1613, 0.1
        %v1638 = vmul.f32 %v1615, 0.1
        %v1639 = vmul.f32 %v1619, 0.1
        %v1640 = vmul.f32 %v1621, 0.1
        %v1641 = vmul.f32 %v1623, 0.1
        %v1642 = vmul.f32 %v1625, 0.1
        %v1643 = vsel %vm1627, %v1609, %v1635
        %v1644 = vsel %vm1628, %v1611, %v1636
        %v1645 = vsel %vm1629, %v1613, %v1637
        %v1646 = vsel %vm1630, %v1615, %v1638
        %v1647 = vsel %vm1631, %v1619, %v1639
        %v1648 = vsel %vm1632, %v1621, %v1640
        %v1649 = vsel %vm1633, %v1623, %v1641
        %v1650 = vsel %vm1634, %v1625, %v1642
        %v1651 = vpack.c.bf16 %v1645, %v1643
        %v1652 = vpack.c.bf16 %v1646, %v1644
        %v1653 = vpack.c.bf16 %v1649, %v1647
        %v1654 = vpack.c.bf16 %v1650, %v1648
        %v1659 = vunpack.c.l.b16 %v1651
        %v1660 = vunpack.c.l.b16 %v1652
        %v1661 = vunpack.c.h.b16 %v1651
        %v1662 = vunpack.c.h.b16 %v1652
        %v1663 = vunpack.c.l.b16 %v1653
        %v1664 = vunpack.c.l.b16 %v1654
        %v1665 = vunpack.c.h.b16 %v1653
        %v1666 = vunpack.c.h.b16 %v1654
        %v1667 = vpack.c.b16 %v1660, %v1659
        %v1668 = vpack.c.b16 %v1662, %v1661
        %v1669 = vpack.c.b16 %v1664, %v1663
        %v1670 = vpack.c.b16 %v1666, %v1665
        %1675 = vst [vmem:[#allocation2 + $0xe8] sm:$0xff] %v1667
        %1676 = vst [vmem:[#allocation2 + $0x120] sm:$0xff] %v1668
        %1677 = vst [vmem:[#allocation2 + $0x158] sm:$0xff] %v1669
        %1678 = vst [vmem:[#allocation2 + $0x190] sm:$0xff] %v1670
        %v1679 = vld [vmem:[#allocation2 + $0x10] sm:$0xff]
        %v1680 = vld [vmem:[#allocation2 + $0x48] sm:$0xff]
        %v1681 = vld [vmem:[#allocation2 + $0x80] sm:$0xff]
        %v1682 = vld [vmem:[#allocation2 + $0xb8] sm:$0xff]
        %v1683 = vld [vmem:[#allocation2 + $0xf0] sm:$0xff]
        %v1684 = vld [vmem:[#allocation2 + $0x128] sm:$0xff]
        %v1685 = vld [vmem:[#allocation2 + $0x160] sm:$0xff]
        %v1686 = vld [vmem:[#allocation2 + $0x198] sm:$0xff]
        %v1687 = vld [vmem:[#allocation2 + $0x1d0] sm:$0xff]
        %v1688 = vld [vmem:[#allocation2 + $0x208] sm:$0xff]
        %v1689 = vld [vmem:[#allocation2 + $0x240] sm:$0xff]
        %v1690 = vld [vmem:[#allocation2 + $0x278] sm:$0xff]
        %v1703 = vunpack.c.l.b16 %v1679
        %v1704 = vunpack.c.h.b16 %v1679
        %v1705 = vunpack.c.l.b16 %v1680
        %v1706 = vunpack.c.h.b16 %v1680
        %v1707 = vunpack.c.l.b16 %v1681
        %v1708 = vunpack.c.h.b16 %v1681
        %v1709 = vunpack.c.l.b16 %v1682
        %v1710 = vunpack.c.h.b16 %v1682
        %v1711 = vunpack.c.l.b16 %v1683
        %v1712 = vunpack.c.h.b16 %v1683
        %v1713 = vunpack.c.l.b16 %v1684
        %v1714 = vunpack.c.h.b16 %v1684
        %v1715 = vunpack.c.l.b16 %v1685
        %v1716 = vunpack.c.h.b16 %v1685
        %v1717 = vunpack.c.l.b16 %v1686
        %v1718 = vunpack.c.h.b16 %v1686
        %v1719 = vunpack.c.l.b16 %v1687
        %v1720 = vunpack.c.h.b16 %v1687
        %v1721 = vunpack.c.l.b16 %v1688
        %v1722 = vunpack.c.h.b16 %v1688
        %v1723 = vunpack.c.l.b16 %v1689
        %v1724 = vunpack.c.h.b16 %v1689
        %v1725 = vunpack.c.l.b16 %v1690
        %v1726 = vunpack.c.h.b16 %v1690
        %v1727 = vpack.c.b16 %v1705, %v1703
        %v1728 = vpack.c.b16 %v1706, %v1704
        %v1729 = vpack.c.b16 %v1709, %v1707
        %v1730 = vpack.c.b16 %v1710, %v1708
        %v1731 = vpack.c.b16 %v1713, %v1711
        %v1732 = vpack.c.b16 %v1714, %v1712
        %v1733 = vpack.c.b16 %v1717, %v1715
        %v1734 = vpack.c.b16 %v1718, %v1716
        %v1735 = vpack.c.b16 %v1721, %v1719
        %v1736 = vpack.c.b16 %v1722, %v1720
        %v1737 = vpack.c.b16 %v1725, %v1723
        %v1738 = vpack.c.b16 %v1726, %v1724
        %1751 = vmatprep.subr.bf16.mxu0 0
        %1752 = vmatpush1.bf16.msra.mxu0 0
        %1753 = vmatprep.subr.bf16.mxu0 0
        %1754 = vmatpush1.bf16.msra.mxu0 0
        %1755 = vmatprep.subr.bf16.mxu0 %v1738
        %1756 = vmatpush1.bf16.msra.mxu0 %v1737
        %1757 = vmatprep.subr.bf16.mxu0 %v1736
        %1758 = vmatpush1.bf16.msra.mxu0 %v1735
        %1759 = vmatprep.subr.bf16.mxu0 %v1734
        %1760 = vmatpush1.bf16.msra.mxu0 %v1733
        %1761 = vmatprep.subr.bf16.mxu0 %v1732
        %1762 = vmatpush1.bf16.msra.mxu0 %v1731
        %1763 = vmatprep.subr.bf16.mxu0 %v1730
        %1764 = vmatpush1.bf16.msra.mxu0 %v1729
        %1765 = vmatprep.subr.bf16.mxu0 %v1728
        %1766 = vmatpush1.bf16.msra.mxu0 %v1727
        %1767 = vmatprep.subr.bf16.mxu0 0
        %1768 = vmatpush2.bf16.msra.mxu0 0
        %1769 = vmatprep.subr.bf16.mxu0 0
        %1770 = vmatpush2.bf16.msra.mxu0 0
        %1771 = vmatprep.subr.bf16.mxu0 0
        %1772 = vmatpush2.bf16.msra.mxu0 0
        %1773 = vmatprep.subr.bf16.mxu0 0
        %1774 = vmatpush2.bf16.msra.mxu0 0
        %1775 = vmatprep.subr.bf16.mxu0 0
        %1776 = vmatpush2.bf16.msra.mxu0 0
        %1777 = vmatprep.subr.bf16.mxu0 0
        %1778 = vmatpush2.bf16.msra.mxu0 0
        %1779 = vmatprep.subr.bf16.mxu0 0
        %1780 = vmatpush2.bf16.msra.mxu0 0
        %1781 = vmatprep.subr.bf16.mxu0 0
        %1782 = vmatpush2.bf16.msra.mxu0 0
        %1783 = vmatprep.mubr.bf16.mxu0 0
        %1784 = vmatmul.mubr.bf16.gmra.mxu0 %v1392
        %v1785 = vpop.f32.mrf.mxu0
        %v1786 = vadd.f32 %v1303, %v1785
        %v1787 = vpop.f32.mrf.mxu0
        %v1788 = vadd.f32 %v1303, %v1787
        %v1789 = vpop.f32.mrf.mxu0
        %v1790 = vadd.f32 %v1308, %v1789
        %v1791 = vpop.f32.mrf.mxu0
        %v1792 = vadd.f32 %v1308, %v1791
        %1793 = vmatprep.mubr.bf16.mxu0 0
        %1794 = vmatmul.mubr.bf16.gmra.mxu0 %v1395
        %v1795 = vpop.f32.mrf.mxu0
        %v1796 = vadd.f32 %v1313, %v1795
        %v1797 = vpop.f32.mrf.mxu0
        %v1798 = vadd.f32 %v1313, %v1797
        %v1799 = vpop.f32.mrf.mxu0
        %v1800 = vadd.f32 %v1318, %v1799
        %v1801 = vpop.f32.mrf.mxu0
        %v1802 = vadd.f32 %v1318, %v1801
        %1803 = vdwg.mxu0
        %vm1804 = vcmp.gt.f32.partialorder %v1786, 0.0
        %vm1805 = vcmp.gt.f32.partialorder %v1788, 0.0
        %vm1806 = vcmp.gt.f32.partialorder %v1790, 0.0
        %vm1807 = vcmp.gt.f32.partialorder %v1792, 0.0
        %vm1808 = vcmp.gt.f32.partialorder %v1796, 0.0
        %vm1809 = vcmp.gt.f32.partialorder %v1798, 0.0
        %vm1810 = vcmp.gt.f32.partialorder %v1800, 0.0
        %vm1811 = vcmp.gt.f32.partialorder %v1802, 0.0
        %v1812 = vmul.f32 %v1786, 0.1
        %v1813 = vmul.f32 %v1788, 0.1
        %v1814 = vmul.f32 %v1790, 0.1
        %v1815 = vmul.f32 %v1792, 0.1
        %v1816 = vmul.f32 %v1796, 0.1
        %v1817 = vmul.f32 %v1798, 0.1
        %v1818 = vmul.f32 %v1800, 0.1
        %v1819 = vmul.f32 %v1802, 0.1
        %v1820 = vsel %vm1804, %v1786, %v1812
        %v1821 = vsel %vm1805, %v1788, %v1813
        %v1822 = vsel %vm1806, %v1790, %v1814
        %v1823 = vsel %vm1807, %v1792, %v1815
        %v1824 = vsel %vm1808, %v1796, %v1816
        %v1825 = vsel %vm1809, %v1798, %v1817
        %v1826 = vsel %vm1810, %v1800, %v1818
        %v1827 = vsel %vm1811, %v1802, %v1819
        %v1828 = vpack.c.bf16 %v1822, %v1820
        %v1829 = vpack.c.bf16 %v1823, %v1821
        %v1830 = vpack.c.bf16 %v1826, %v1824
        %v1831 = vpack.c.bf16 %v1827, %v1825
        %v1836 = vunpack.c.l.b16 %v1828
        %v1837 = vunpack.c.l.b16 %v1829
        %v1838 = vunpack.c.h.b16 %v1828
        %v1839 = vunpack.c.h.b16 %v1829
        %v1840 = vunpack.c.l.b16 %v1830
        %v1841 = vunpack.c.l.b16 %v1831
        %v1842 = vunpack.c.h.b16 %v1830
        %v1843 = vunpack.c.h.b16 %v1831
        %v1844 = vpack.c.b16 %v1837, %v1836
        %v1845 = vpack.c.b16 %v1839, %v1838
        %v1846 = vpack.c.b16 %v1841, %v1840
        %v1847 = vpack.c.b16 %v1843, %v1842
        %1852 = vst [vmem:[#allocation2 + $0xf0] sm:$0xff] %v1844
        %1853 = vst [vmem:[#allocation2 + $0x128] sm:$0xff] %v1845
        %1854 = vst [vmem:[#allocation2 + $0x160] sm:$0xff] %v1846
        %1855 = vst [vmem:[#allocation2 + $0x198] sm:$0xff] %v1847
        %v1856 = vld [vmem:[#allocation2 + $0x18] sm:$0xff]
        %v1857 = vld [vmem:[#allocation2 + $0x50] sm:$0xff]
        %v1858 = vld [vmem:[#allocation2 + $0x88] sm:$0xff]
        %v1859 = vld [vmem:[#allocation2 + $0xc0] sm:$0xff]
        %v1860 = vld [vmem:[#allocation2 + $0xf8] sm:$0xff]
        %v1861 = vld [vmem:[#allocation2 + $0x130] sm:$0xff]
        %v1862 = vld [vmem:[#allocation2 + $0x168] sm:$0xff]
        %v1863 = vld [vmem:[#allocation2 + $0x1a0] sm:$0xff]
        %v1864 = vld [vmem:[#allocation2 + $0x1d8] sm:$0xff]
        %v1865 = vld [vmem:[#allocation2 + $0x210] sm:$0xff]
        %v1866 = vld [vmem:[#allocation2 + $0x248] sm:$0xff]
        %v1867 = vld [vmem:[#allocation2 + $0x280] sm:$0xff]
        %v1880 = vunpack.c.l.b16 %v1856
        %v1881 = vunpack.c.h.b16 %v1856
        %v1882 = vunpack.c.l.b16 %v1857
        %v1883 = vunpack.c.h.b16 %v1857
        %v1884 = vunpack.c.l.b16 %v1858
        %v1885 = vunpack.c.h.b16 %v1858
        %v1886 = vunpack.c.l.b16 %v1859
        %v1887 = vunpack.c.h.b16 %v1859
        %v1888 = vunpack.c.l.b16 %v1860
        %v1889 = vunpack.c.h.b16 %v1860
        %v1890 = vunpack.c.l.b16 %v1861
        %v1891 = vunpack.c.h.b16 %v1861
        %v1892 = vunpack.c.l.b16 %v1862
        %v1893 = vunpack.c.h.b16 %v1862
        %v1894 = vunpack.c.l.b16 %v1863
        %v1895 = vunpack.c.h.b16 %v1863
        %v1896 = vunpack.c.l.b16 %v1864
        %v1897 = vunpack.c.h.b16 %v1864
        %v1898 = vunpack.c.l.b16 %v1865
        %v1899 = vunpack.c.h.b16 %v1865
        %v1900 = vunpack.c.l.b16 %v1866
        %v1901 = vunpack.c.h.b16 %v1866
        %v1902 = vunpack.c.l.b16 %v1867
        %v1903 = vunpack.c.h.b16 %v1867
        %v1904 = vpack.c.b16 %v1882, %v1880
        %v1905 = vpack.c.b16 %v1883, %v1881
        %v1906 = vpack.c.b16 %v1886, %v1884
        %v1907 = vpack.c.b16 %v1887, %v1885
        %v1908 = vpack.c.b16 %v1890, %v1888
        %v1909 = vpack.c.b16 %v1891, %v1889
        %v1910 = vpack.c.b16 %v1894, %v1892
        %v1911 = vpack.c.b16 %v1895, %v1893
        %v1912 = vpack.c.b16 %v1898, %v1896
        %v1913 = vpack.c.b16 %v1899, %v1897
        %v1914 = vpack.c.b16 %v1902, %v1900
        %v1915 = vpack.c.b16 %v1903, %v1901
        %1928 = vmatprep.subr.bf16.mxu0 0
        %1929 = vmatpush1.bf16.msra.mxu0 0
        %1930 = vmatprep.subr.bf16.mxu0 0
        %1931 = vmatpush1.bf16.msra.mxu0 0
        %1932 = vmatprep.subr.bf16.mxu0 %v1915
        %1933 = vmatpush1.bf16.msra.mxu0 %v1914
        %1934 = vmatprep.subr.bf16.mxu0 %v1913
        %1935 = vmatpush1.bf16.msra.mxu0 %v1912
        %1936 = vmatprep.subr.bf16.mxu0 %v1911
        %1937 = vmatpush1.bf16.msra.mxu0 %v1910
        %1938 = vmatprep.subr.bf16.mxu0 %v1909
        %1939 = vmatpush1.bf16.msra.mxu0 %v1908
        %1940 = vmatprep.subr.bf16.mxu0 %v1907
        %1941 = vmatpush1.bf16.msra.mxu0 %v1906
        %1942 = vmatprep.subr.bf16.mxu0 %v1905
        %1943 = vmatpush1.bf16.msra.mxu0 %v1904
        %1944 = vmatprep.subr.bf16.mxu0 0
        %1945 = vmatpush2.bf16.msra.mxu0 0
        %1946 = vmatprep.subr.bf16.mxu0 0
        %1947 = vmatpush2.bf16.msra.mxu0 0
        %1948 = vmatprep.subr.bf16.mxu0 0
        %1949 = vmatpush2.bf16.msra.mxu0 0
        %1950 = vmatprep.subr.bf16.mxu0 0
        %1951 = vmatpush2.bf16.msra.mxu0 0
        %1952 = vmatprep.subr.bf16.mxu0 0
        %1953 = vmatpush2.bf16.msra.mxu0 0
        %1954 = vmatprep.subr.bf16.mxu0 0
        %1955 = vmatpush2.bf16.msra.mxu0 0
        %1956 = vmatprep.subr.bf16.mxu0 0
        %1957 = vmatpush2.bf16.msra.mxu0 0
        %1958 = vmatprep.subr.bf16.mxu0 0
        %1959 = vmatpush2.bf16.msra.mxu0 0
        %1960 = vmatprep.mubr.bf16.mxu0 0
        %1961 = vmatmul.mubr.bf16.gmra.mxu0 %v1392
        %v1962 = vpop.f32.mrf.mxu0
        %v1963 = vadd.f32 %v1303, %v1962
        %v1964 = vpop.f32.mrf.mxu0
        %v1965 = vadd.f32 %v1303, %v1964
        %v1966 = vpop.f32.mrf.mxu0
        %v1967 = vadd.f32 %v1308, %v1966
        %v1968 = vpop.f32.mrf.mxu0
        %v1969 = vadd.f32 %v1308, %v1968
        %1970 = vmatprep.mubr.bf16.mxu0 0
        %1971 = vmatmul.mubr.bf16.gmra.mxu0 %v1395
        %v1972 = vpop.f32.mrf.mxu0
        %v1973 = vadd.f32 %v1313, %v1972
        %v1974 = vpop.f32.mrf.mxu0
        %v1975 = vadd.f32 %v1313, %v1974
        %v1976 = vpop.f32.mrf.mxu0
        %v1977 = vadd.f32 %v1318, %v1976
        %v1978 = vpop.f32.mrf.mxu0
        %v1979 = vadd.f32 %v1318, %v1978
        %1980 = vdwg.mxu0
        %vm1981 = vcmp.gt.f32.partialorder %v1963, 0.0
        %vm1982 = vcmp.gt.f32.partialorder %v1965, 0.0
        %vm1983 = vcmp.gt.f32.partialorder %v1967, 0.0
        %vm1984 = vcmp.gt.f32.partialorder %v1969, 0.0
        %vm1985 = vcmp.gt.f32.partialorder %v1973, 0.0
        %vm1986 = vcmp.gt.f32.partialorder %v1975, 0.0
        %vm1987 = vcmp.gt.f32.partialorder %v1977, 0.0
        %vm1988 = vcmp.gt.f32.partialorder %v1979, 0.0
        %v1989 = vmul.f32 %v1963, 0.1
        %v1990 = vmul.f32 %v1965, 0.1
        %v1991 = vmul.f32 %v1967, 0.1
        %v1992 = vmul.f32 %v1969, 0.1
        %v1993 = vmul.f32 %v1973, 0.1
        %v1994 = vmul.f32 %v1975, 0.1
        %v1995 = vmul.f32 %v1977, 0.1
        %v1996 = vmul.f32 %v1979, 0.1
        %v1997 = vsel %vm1981, %v1963, %v1989
        %v1998 = vsel %vm1982, %v1965, %v1990
        %v1999 = vsel %vm1983, %v1967, %v1991
        %v2000 = vsel %vm1984, %v1969, %v1992
        %v2001 = vsel %vm1985, %v1973, %v1993
        %v2002 = vsel %vm1986, %v1975, %v1994
        %v2003 = vsel %vm1987, %v1977, %v1995
        %v2004 = vsel %vm1988, %v1979, %v1996
        %v2005 = vpack.c.bf16 %v1999, %v1997
        %v2006 = vpack.c.bf16 %v2000, %v1998
        %v2007 = vpack.c.bf16 %v2003, %v2001
        %v2008 = vpack.c.bf16 %v2004, %v2002
        %v2013 = vunpack.c.l.b16 %v2005
        %v2014 = vunpack.c.l.b16 %v2006
        %v2015 = vunpack.c.h.b16 %v2005
        %v2016 = vunpack.c.h.b16 %v2006
        %v2017 = vunpack.c.l.b16 %v2007
        %v2018 = vunpack.c.l.b16 %v2008
        %v2019 = vunpack.c.h.b16 %v2007
        %v2020 = vunpack.c.h.b16 %v2008
        %v2021 = vpack.c.b16 %v2014, %v2013
        %v2022 = vpack.c.b16 %v2016, %v2015
        %v2023 = vpack.c.b16 %v2018, %v2017
        %v2024 = vpack.c.b16 %v2020, %v2019
        %2029 = vst [vmem:[#allocation2 + $0xf8] sm:$0xff] %v2021
        %2030 = vst [vmem:[#allocation2 + $0x130] sm:$0xff] %v2022
        %2031 = vst [vmem:[#allocation2 + $0x168] sm:$0xff] %v2023
        %2032 = vst [vmem:[#allocation2 + $0x1a0] sm:$0xff] %v2024
        %v2033 = vld [vmem:[#allocation2 + $0x20] sm:$0xff]
        %v2034 = vld [vmem:[#allocation2 + $0x58] sm:$0xff]
        %v2035 = vld [vmem:[#allocation2 + $0x90] sm:$0xff]
        %v2036 = vld [vmem:[#allocation2 + $0xc8] sm:$0xff]
        %v2037 = vld [vmem:[#allocation2 + $0x100] sm:$0xff]
        %v2038 = vld [vmem:[#allocation2 + $0x138] sm:$0xff]
        %v2039 = vld [vmem:[#allocation2 + $0x170] sm:$0xff]
        %v2040 = vld [vmem:[#allocation2 + $0x1a8] sm:$0xff]
        %v2041 = vld [vmem:[#allocation2 + $0x1e0] sm:$0xff]
        %v2042 = vld [vmem:[#allocation2 + $0x218] sm:$0xff]
        %v2043 = vld [vmem:[#allocation2 + $0x250] sm:$0xff]
        %v2044 = vld [vmem:[#allocation2 + $0x288] sm:$0xff]
        %v2057 = vunpack.c.l.b16 %v2033
        %v2058 = vunpack.c.h.b16 %v2033
        %v2059 = vunpack.c.l.b16 %v2034
        %v2060 = vunpack.c.h.b16 %v2034
        %v2061 = vunpack.c.l.b16 %v2035
        %v2062 = vunpack.c.h.b16 %v2035
        %v2063 = vunpack.c.l.b16 %v2036
        %v2064 = vunpack.c.h.b16 %v2036
        %v2065 = vunpack.c.l.b16 %v2037
        %v2066 = vunpack.c.h.b16 %v2037
        %v2067 = vunpack.c.l.b16 %v2038
        %v2068 = vunpack.c.h.b16 %v2038
        %v2069 = vunpack.c.l.b16 %v2039
        %v2070 = vunpack.c.h.b16 %v2039
        %v2071 = vunpack.c.l.b16 %v2040
        %v2072 = vunpack.c.h.b16 %v2040
        %v2073 = vunpack.c.l.b16 %v2041
        %v2074 = vunpack.c.h.b16 %v2041
        %v2075 = vunpack.c.l.b16 %v2042
        %v2076 = vunpack.c.h.b16 %v2042
        %v2077 = vunpack.c.l.b16 %v2043
        %v2078 = vunpack.c.h.b16 %v2043
        %v2079 = vunpack.c.l.b16 %v2044
        %v2080 = vunpack.c.h.b16 %v2044
        %v2081 = vpack.c.b16 %v2059, %v2057
        %v2082 = vpack.c.b16 %v2060, %v2058
        %v2083 = vpack.c.b16 %v2063, %v2061
        %v2084 = vpack.c.b16 %v2064, %v2062
        %v2085 = vpack.c.b16 %v2067, %v2065
        %v2086 = vpack.c.b16 %v2068, %v2066
        %v2087 = vpack.c.b16 %v2071, %v2069
        %v2088 = vpack.c.b16 %v2072, %v2070
        %v2089 = vpack.c.b16 %v2075, %v2073
        %v2090 = vpack.c.b16 %v2076, %v2074
        %v2091 = vpack.c.b16 %v2079, %v2077
        %v2092 = vpack.c.b16 %v2080, %v2078
        %2105 = vmatprep.subr.bf16.mxu0 0
        %2106 = vmatpush1.bf16.msra.mxu0 0
        %2107 = vmatprep.subr.bf16.mxu0 0
        %2108 = vmatpush1.bf16.msra.mxu0 0
        %2109 = vmatprep.subr.bf16.mxu0 %v2092
        %2110 = vmatpush1.bf16.msra.mxu0 %v2091
        %2111 = vmatprep.subr.bf16.mxu0 %v2090
        %2112 = vmatpush1.bf16.msra.mxu0 %v2089
        %2113 = vmatprep.subr.bf16.mxu0 %v2088
        %2114 = vmatpush1.bf16.msra.mxu0 %v2087
        %2115 = vmatprep.subr.bf16.mxu0 %v2086
        %2116 = vmatpush1.bf16.msra.mxu0 %v2085
        %2117 = vmatprep.subr.bf16.mxu0 %v2084
        %2118 = vmatpush1.bf16.msra.mxu0 %v2083
        %2119 = vmatprep.subr.bf16.mxu0 %v2082
        %2120 = vmatpush1.bf16.msra.mxu0 %v2081
        %2121 = vmatprep.subr.bf16.mxu0 0
        %2122 = vmatpush2.bf16.msra.mxu0 0
        %2123 = vmatprep.subr.bf16.mxu0 0
        %2124 = vmatpush2.bf16.msra.mxu0 0
        %2125 = vmatprep.subr.bf16.mxu0 0
        %2126 = vmatpush2.bf16.msra.mxu0 0
        %2127 = vmatprep.subr.bf16.mxu0 0
        %2128 = vmatpush2.bf16.msra.mxu0 0
        %2129 = vmatprep.subr.bf16.mxu0 0
        %2130 = vmatpush2.bf16.msra.mxu0 0
        %2131 = vmatprep.subr.bf16.mxu0 0
        %2132 = vmatpush2.bf16.msra.mxu0 0
        %2133 = vmatprep.subr.bf16.mxu0 0
        %2134 = vmatpush2.bf16.msra.mxu0 0
        %2135 = vmatprep.subr.bf16.mxu0 0
        %2136 = vmatpush2.bf16.msra.mxu0 0
        %2137 = vmatprep.mubr.bf16.mxu0 0
        %2138 = vmatmul.mubr.bf16.gmra.mxu0 %v1392
        %v2139 = vpop.f32.mrf.mxu0
        %v2140 = vadd.f32 %v1303, %v2139
        %v2141 = vpop.f32.mrf.mxu0
        %v2142 = vadd.f32 %v1303, %v2141
        %v2143 = vpop.f32.mrf.mxu0
        %v2144 = vadd.f32 %v1308, %v2143
        %v2145 = vpop.f32.mrf.mxu0
        %v2146 = vadd.f32 %v1308, %v2145
        %2147 = vmatprep.mubr.bf16.mxu0 0
        %2148 = vmatmul.mubr.bf16.gmra.mxu0 %v1395
        %v2149 = vpop.f32.mrf.mxu0
        %v2150 = vadd.f32 %v1313, %v2149
        %v2151 = vpop.f32.mrf.mxu0
        %v2152 = vadd.f32 %v1313, %v2151
        %v2153 = vpop.f32.mrf.mxu0
        %v2154 = vadd.f32 %v1318, %v2153
        %v2155 = vpop.f32.mrf.mxu0
        %v2156 = vadd.f32 %v1318, %v2155
        %2157 = vdwg.mxu0
        %vm2158 = vcmp.gt.f32.partialorder %v2140, 0.0
        %vm2159 = vcmp.gt.f32.partialorder %v2142, 0.0
        %vm2160 = vcmp.gt.f32.partialorder %v2144, 0.0
        %vm2161 = vcmp.gt.f32.partialorder %v2146, 0.0
        %vm2162 = vcmp.gt.f32.partialorder %v2150, 0.0
        %vm2163 = vcmp.gt.f32.partialorder %v2152, 0.0
        %vm2164 = vcmp.gt.f32.partialorder %v2154, 0.0
        %vm2165 = vcmp.gt.f32.partialorder %v2156, 0.0
        %v2166 = vmul.f32 %v2140, 0.1
        %v2167 = vmul.f32 %v2142, 0.1
        %v2168 = vmul.f32 %v2144, 0.1
        %v2169 = vmul.f32 %v2146, 0.1
        %v2170 = vmul.f32 %v2150, 0.1
        %v2171 = vmul.f32 %v2152, 0.1
        %v2172 = vmul.f32 %v2154, 0.1
        %v2173 = vmul.f32 %v2156, 0.1
        %v2174 = vsel %vm2158, %v2140, %v2166
        %v2175 = vsel %vm2159, %v2142, %v2167
        %v2176 = vsel %vm2160, %v2144, %v2168
        %v2177 = vsel %vm2161, %v2146, %v2169
        %v2178 = vsel %vm2162, %v2150, %v2170
        %v2179 = vsel %vm2163, %v2152, %v2171
        %v2180 = vsel %vm2164, %v2154, %v2172
        %v2181 = vsel %vm2165, %v2156, %v2173
        %v2182 = vpack.c.bf16 %v2176, %v2174
        %v2183 = vpack.c.bf16 %v2177, %v2175
        %v2184 = vpack.c.bf16 %v2180, %v2178
        %v2185 = vpack.c.bf16 %v2181, %v2179
        %v2190 = vunpack.c.l.b16 %v2182
        %v2191 = vunpack.c.l.b16 %v2183
        %v2192 = vunpack.c.h.b16 %v2182
        %v2193 = vunpack.c.h.b16 %v2183
        %v2194 = vunpack.c.l.b16 %v2184
        %v2195 = vunpack.c.l.b16 %v2185
        %v2196 = vunpack.c.h.b16 %v2184
        %v2197 = vunpack.c.h.b16 %v2185
        %v2198 = vpack.c.b16 %v2191, %v2190
        %v2199 = vpack.c.b16 %v2193, %v2192
        %v2200 = vpack.c.b16 %v2195, %v2194
        %v2201 = vpack.c.b16 %v2197, %v2196
        %2206 = vst [vmem:[#allocation2 + $0x100] sm:$0xff] %v2198
        %2207 = vst [vmem:[#allocation2 + $0x138] sm:$0xff] %v2199
        %2208 = vst [vmem:[#allocation2 + $0x170] sm:$0xff] %v2200
        %2209 = vst [vmem:[#allocation2 + $0x1a8] sm:$0xff] %v2201
        %v2210 = vld [vmem:[#allocation2 + $0x28] sm:$0xff]
        %v2211 = vld [vmem:[#allocation2 + $0x60] sm:$0xff]
        %v2212 = vld [vmem:[#allocation2 + $0x98] sm:$0xff]
        %v2213 = vld [vmem:[#allocation2 + $0xd0] sm:$0xff]
        %v2214 = vld [vmem:[#allocation2 + $0x108] sm:$0xff]
        %v2215 = vld [vmem:[#allocation2 + $0x140] sm:$0xff]
        %v2216 = vld [vmem:[#allocation2 + $0x178] sm:$0xff]
        %v2217 = vld [vmem:[#allocation2 + $0x1b0] sm:$0xff]
        %v2218 = vld [vmem:[#allocation2 + $0x1e8] sm:$0xff]
        %v2219 = vld [vmem:[#allocation2 + $0x220] sm:$0xff]
        %v2220 = vld [vmem:[#allocation2 + $0x258] sm:$0xff]
        %v2221 = vld [vmem:[#allocation2 + $0x290] sm:$0xff]
        %v2234 = vunpack.c.l.b16 %v2210
        %v2235 = vunpack.c.h.b16 %v2210
        %v2236 = vunpack.c.l.b16 %v2211
        %v2237 = vunpack.c.h.b16 %v2211
        %v2238 = vunpack.c.l.b16 %v2212
        %v2239 = vunpack.c.h.b16 %v2212
        %v2240 = vunpack.c.l.b16 %v2213
        %v2241 = vunpack.c.h.b16 %v2213
        %v2242 = vunpack.c.l.b16 %v2214
        %v2243 = vunpack.c.h.b16 %v2214
        %v2244 = vunpack.c.l.b16 %v2215
        %v2245 = vunpack.c.h.b16 %v2215
        %v2246 = vunpack.c.l.b16 %v2216
        %v2247 = vunpack.c.h.b16 %v2216
        %v2248 = vunpack.c.l.b16 %v2217
        %v2249 = vunpack.c.h.b16 %v2217
        %v2250 = vunpack.c.l.b16 %v2218
        %v2251 = vunpack.c.h.b16 %v2218
        %v2252 = vunpack.c.l.b16 %v2219
        %v2253 = vunpack.c.h.b16 %v2219
        %v2254 = vunpack.c.l.b16 %v2220
        %v2255 = vunpack.c.h.b16 %v2220
        %v2256 = vunpack.c.l.b16 %v2221
        %v2257 = vunpack.c.h.b16 %v2221
        %v2258 = vpack.c.b16 %v2236, %v2234
        %v2259 = vpack.c.b16 %v2237, %v2235
        %v2260 = vpack.c.b16 %v2240, %v2238
        %v2261 = vpack.c.b16 %v2241, %v2239
        %v2262 = vpack.c.b16 %v2244, %v2242
        %v2263 = vpack.c.b16 %v2245, %v2243
        %v2264 = vpack.c.b16 %v2248, %v2246
        %v2265 = vpack.c.b16 %v2249, %v2247
        %v2266 = vpack.c.b16 %v2252, %v2250
        %v2267 = vpack.c.b16 %v2253, %v2251
        %v2268 = vpack.c.b16 %v2256, %v2254
        %v2269 = vpack.c.b16 %v2257, %v2255
        %2282 = vmatprep.subr.bf16.mxu0 0
        %2283 = vmatpush1.bf16.msra.mxu0 0
        %2284 = vmatprep.subr.bf16.mxu0 0
        %2285 = vmatpush1.bf16.msra.mxu0 0
        %2286 = vmatprep.subr.bf16.mxu0 %v2269
        %2287 = vmatpush1.bf16.msra.mxu0 %v2268
        %2288 = vmatprep.subr.bf16.mxu0 %v2267
        %2289 = vmatpush1.bf16.msra.mxu0 %v2266
        %2290 = vmatprep.subr.bf16.mxu0 %v2265
        %2291 = vmatpush1.bf16.msra.mxu0 %v2264
        %2292 = vmatprep.subr.bf16.mxu0 %v2263
        %2293 = vmatpush1.bf16.msra.mxu0 %v2262
        %2294 = vmatprep.subr.bf16.mxu0 %v2261
        %2295 = vmatpush1.bf16.msra.mxu0 %v2260
        %2296 = vmatprep.subr.bf16.mxu0 %v2259
        %2297 = vmatpush1.bf16.msra.mxu0 %v2258
        %2298 = vmatprep.subr.bf16.mxu0 0
        %2299 = vmatpush2.bf16.msra.mxu0 0
        %2300 = vmatprep.subr.bf16.mxu0 0
        %2301 = vmatpush2.bf16.msra.mxu0 0
        %2302 = vmatprep.subr.bf16.mxu0 0
        %2303 = vmatpush2.bf16.msra.mxu0 0
        %2304 = vmatprep.subr.bf16.mxu0 0
        %2305 = vmatpush2.bf16.msra.mxu0 0
        %2306 = vmatprep.subr.bf16.mxu0 0
        %2307 = vmatpush2.bf16.msra.mxu0 0
        %2308 = vmatprep.subr.bf16.mxu0 0
        %2309 = vmatpush2.bf16.msra.mxu0 0
        %2310 = vmatprep.subr.bf16.mxu0 0
        %2311 = vmatpush2.bf16.msra.mxu0 0
        %2312 = vmatprep.subr.bf16.mxu0 0
        %2313 = vmatpush2.bf16.msra.mxu0 0
        %2314 = vmatprep.mubr.bf16.mxu0 0
        %2315 = vmatmul.mubr.bf16.gmra.mxu0 %v1392
        %v2316 = vpop.f32.mrf.mxu0
        %v2317 = vadd.f32 %v1303, %v2316
        %v2318 = vpop.f32.mrf.mxu0
        %v2319 = vadd.f32 %v1303, %v2318
        %v2320 = vpop.f32.mrf.mxu0
        %v2321 = vadd.f32 %v1308, %v2320
        %v2322 = vpop.f32.mrf.mxu0
        %v2323 = vadd.f32 %v1308, %v2322
        %2324 = vmatprep.mubr.bf16.mxu0 0
        %2325 = vmatmul.mubr.bf16.gmra.mxu0 %v1395
        %v2326 = vpop.f32.mrf.mxu0
        %v2327 = vadd.f32 %v1313, %v2326
        %v2328 = vpop.f32.mrf.mxu0
        %v2329 = vadd.f32 %v1313, %v2328
        %v2330 = vpop.f32.mrf.mxu0
        %v2331 = vadd.f32 %v1318, %v2330
        %v2332 = vpop.f32.mrf.mxu0
        %v2333 = vadd.f32 %v1318, %v2332
        %2334 = vdwg.mxu0
        %vm2335 = vcmp.gt.f32.partialorder %v2317, 0.0
        %vm2336 = vcmp.gt.f32.partialorder %v2319, 0.0
        %vm2337 = vcmp.gt.f32.partialorder %v2321, 0.0
        %vm2338 = vcmp.gt.f32.partialorder %v2323, 0.0
        %vm2339 = vcmp.gt.f32.partialorder %v2327, 0.0
        %vm2340 = vcmp.gt.f32.partialorder %v2329, 0.0
        %vm2341 = vcmp.gt.f32.partialorder %v2331, 0.0
        %vm2342 = vcmp.gt.f32.partialorder %v2333, 0.0
        %v2343 = vmul.f32 %v2317, 0.1
        %v2344 = vmul.f32 %v2319, 0.1
        %v2345 = vmul.f32 %v2321, 0.1
        %v2346 = vmul.f32 %v2323, 0.1
        %v2347 = vmul.f32 %v2327, 0.1
        %v2348 = vmul.f32 %v2329, 0.1
        %v2349 = vmul.f32 %v2331, 0.1
        %v2350 = vmul.f32 %v2333, 0.1
        %v2351 = vsel %vm2335, %v2317, %v2343
        %v2352 = vsel %vm2336, %v2319, %v2344
        %v2353 = vsel %vm2337, %v2321, %v2345
        %v2354 = vsel %vm2338, %v2323, %v2346
        %v2355 = vsel %vm2339, %v2327, %v2347
        %v2356 = vsel %vm2340, %v2329, %v2348
        %v2357 = vsel %vm2341, %v2331, %v2349
        %v2358 = vsel %vm2342, %v2333, %v2350
        %v2359 = vpack.c.bf16 %v2353, %v2351
        %v2360 = vpack.c.bf16 %v2354, %v2352
        %v2361 = vpack.c.bf16 %v2357, %v2355
        %v2362 = vpack.c.bf16 %v2358, %v2356
        %v2367 = vunpack.c.l.b16 %v2359
        %v2368 = vunpack.c.l.b16 %v2360
        %v2369 = vunpack.c.h.b16 %v2359
        %v2370 = vunpack.c.h.b16 %v2360
        %v2371 = vunpack.c.l.b16 %v2361
        %v2372 = vunpack.c.l.b16 %v2362
        %v2373 = vunpack.c.h.b16 %v2361
        %v2374 = vunpack.c.h.b16 %v2362
        %v2375 = vpack.c.b16 %v2368, %v2367
        %v2376 = vpack.c.b16 %v2370, %v2369
        %v2377 = vpack.c.b16 %v2372, %v2371
        %v2378 = vpack.c.b16 %v2374, %v2373
        %2383 = vst [vmem:[#allocation2 + $0x108] sm:$0xff] %v2375
        %2384 = vst [vmem:[#allocation2 + $0x140] sm:$0xff] %v2376
        %2385 = vst [vmem:[#allocation2 + $0x178] sm:$0xff] %v2377
        %2386 = vst [vmem:[#allocation2 + $0x1b0] sm:$0xff] %v2378
        %v2387 = vld [vmem:[#allocation2 + $0x30] sm:$0xff]
        %v2388 = vld [vmem:[#allocation2 + $0x68] sm:$0xff]
        %v2389 = vld [vmem:[#allocation2 + $0xa0] sm:$0xff]
        %v2390 = vld [vmem:[#allocation2 + $0xd8] sm:$0xff]
        %v2391 = vld [vmem:[#allocation2 + $0x110] sm:$0xff]
        %v2392 = vld [vmem:[#allocation2 + $0x148] sm:$0xff]
        %v2393 = vld [vmem:[#allocation2 + $0x180] sm:$0xff]
        %v2394 = vld [vmem:[#allocation2 + $0x1b8] sm:$0xff]
        %v2395 = vld [vmem:[#allocation2 + $0x1f0] sm:$0xff]
        %v2396 = vld [vmem:[#allocation2 + $0x228] sm:$0xff]
        %v2397 = vld [vmem:[#allocation2 + $0x260] sm:$0xff]
        %v2398 = vld [vmem:[#allocation2 + $0x298] sm:$0xff]
        %v2411 = vunpack.c.l.b16 %v2387
        %v2412 = vunpack.c.h.b16 %v2387
        %v2413 = vunpack.c.l.b16 %v2388
        %v2414 = vunpack.c.h.b16 %v2388
        %v2415 = vunpack.c.l.b16 %v2389
        %v2416 = vunpack.c.h.b16 %v2389
        %v2417 = vunpack.c.l.b16 %v2390
        %v2418 = vunpack.c.h.b16 %v2390
        %v2419 = vunpack.c.l.b16 %v2391
        %v2420 = vunpack.c.h.b16 %v2391
        %v2421 = vunpack.c.l.b16 %v2392
        %v2422 = vunpack.c.h.b16 %v2392
        %v2423 = vunpack.c.l.b16 %v2393
        %v2424 = vunpack.c.h.b16 %v2393
        %v2425 = vunpack.c.l.b16 %v2394
        %v2426 = vunpack.c.h.b16 %v2394
        %v2427 = vunpack.c.l.b16 %v2395
        %v2428 = vunpack.c.h.b16 %v2395
        %v2429 = vunpack.c.l.b16 %v2396
        %v2430 = vunpack.c.h.b16 %v2396
        %v2431 = vunpack.c.l.b16 %v2397
        %v2432 = vunpack.c.h.b16 %v2397
        %v2433 = vunpack.c.l.b16 %v2398
        %v2434 = vunpack.c.h.b16 %v2398
        %v2435 = vpack.c.b16 %v2413, %v2411
        %v2436 = vpack.c.b16 %v2414, %v2412
        %v2437 = vpack.c.b16 %v2417, %v2415
        %v2438 = vpack.c.b16 %v2418, %v2416
        %v2439 = vpack.c.b16 %v2421, %v2419
        %v2440 = vpack.c.b16 %v2422, %v2420
        %v2441 = vpack.c.b16 %v2425, %v2423
        %v2442 = vpack.c.b16 %v2426, %v2424
        %v2443 = vpack.c.b16 %v2429, %v2427
        %v2444 = vpack.c.b16 %v2430, %v2428
        %v2445 = vpack.c.b16 %v2433, %v2431
        %v2446 = vpack.c.b16 %v2434, %v2432
        %2459 = vmatprep.subr.bf16.mxu0 0
        %2460 = vmatpush1.bf16.msra.mxu0 0
        %2461 = vmatprep.subr.bf16.mxu0 0
        %2462 = vmatpush1.bf16.msra.mxu0 0
        %2463 = vmatprep.subr.bf16.mxu0 %v2446
        %2464 = vmatpush1.bf16.msra.mxu0 %v2445
        %2465 = vmatprep.subr.bf16.mxu0 %v2444
        %2466 = vmatpush1.bf16.msra.mxu0 %v2443
        %2467 = vmatprep.subr.bf16.mxu0 %v2442
        %2468 = vmatpush1.bf16.msra.mxu0 %v2441
        %2469 = vmatprep.subr.bf16.mxu0 %v2440
        %2470 = vmatpush1.bf16.msra.mxu0 %v2439
        %2471 = vmatprep.subr.bf16.mxu0 %v2438
        %2472 = vmatpush1.bf16.msra.mxu0 %v2437
        %2473 = vmatprep.subr.bf16.mxu0 %v2436
        %2474 = vmatpush1.bf16.msra.mxu0 %v2435
        %2475 = vmatprep.subr.bf16.mxu0 0
        %2476 = vmatpush2.bf16.msra.mxu0 0
        %2477 = vmatprep.subr.bf16.mxu0 0
        %2478 = vmatpush2.bf16.msra.mxu0 0
        %2479 = vmatprep.subr.bf16.mxu0 0
        %2480 = vmatpush2.bf16.msra.mxu0 0
        %2481 = vmatprep.subr.bf16.mxu0 0
        %2482 = vmatpush2.bf16.msra.mxu0 0
        %2483 = vmatprep.subr.bf16.mxu0 0
        %2484 = vmatpush2.bf16.msra.mxu0 0
        %2485 = vmatprep.subr.bf16.mxu0 0
        %2486 = vmatpush2.bf16.msra.mxu0 0
        %2487 = vmatprep.subr.bf16.mxu0 0
        %2488 = vmatpush2.bf16.msra.mxu0 0
        %2489 = vmatprep.subr.bf16.mxu0 0
        %2490 = vmatpush2.bf16.msra.mxu0 0
        %2491 = vmatprep.mubr.bf16.mxu0 0
        %2492 = vmatmul.mubr.bf16.gmra.mxu0 %v1392
        %v2493 = vpop.f32.mrf.mxu0
        %v2494 = vadd.f32 %v1303, %v2493
        %v2495 = vpop.f32.mrf.mxu0
        %v2496 = vadd.f32 %v1303, %v2495
        %v2497 = vpop.f32.mrf.mxu0
        %v2498 = vadd.f32 %v1308, %v2497
        %v2499 = vpop.f32.mrf.mxu0
        %v2500 = vadd.f32 %v1308, %v2499
        %2501 = vmatprep.mubr.bf16.mxu0 0
        %2502 = vmatmul.mubr.bf16.gmra.mxu0 %v1395
        %v2503 = vpop.f32.mrf.mxu0
        %v2504 = vadd.f32 %v1313, %v2503
        %v2505 = vpop.f32.mrf.mxu0
        %v2506 = vadd.f32 %v1313, %v2505
        %v2507 = vpop.f32.mrf.mxu0
        %v2508 = vadd.f32 %v1318, %v2507
        %v2509 = vpop.f32.mrf.mxu0
        %v2510 = vadd.f32 %v1318, %v2509
        %2511 = vdwg.mxu0
        %vm2512 = vcmp.gt.f32.partialorder %v2494, 0.0
        %vm2513 = vcmp.gt.f32.partialorder %v2496, 0.0
        %vm2514 = vcmp.gt.f32.partialorder %v2498, 0.0
        %vm2515 = vcmp.gt.f32.partialorder %v2500, 0.0
        %vm2516 = vcmp.gt.f32.partialorder %v2504, 0.0
        %vm2517 = vcmp.gt.f32.partialorder %v2506, 0.0
        %vm2518 = vcmp.gt.f32.partialorder %v2508, 0.0
        %vm2519 = vcmp.gt.f32.partialorder %v2510, 0.0
        %v2520 = vmul.f32 %v2494, 0.1
        %v2521 = vmul.f32 %v2496, 0.1
        %v2522 = vmul.f32 %v2498, 0.1
        %v2523 = vmul.f32 %v2500, 0.1
        %v2524 = vmul.f32 %v2504, 0.1
        %v2525 = vmul.f32 %v2506, 0.1
        %v2526 = vmul.f32 %v2508, 0.1
        %v2527 = vmul.f32 %v2510, 0.1
        %v2528 = vsel %vm2512, %v2494, %v2520
        %v2529 = vsel %vm2513, %v2496, %v2521
        %v2530 = vsel %vm2514, %v2498, %v2522
        %v2531 = vsel %vm2515, %v2500, %v2523
        %v2532 = vsel %vm2516, %v2504, %v2524
        %v2533 = vsel %vm2517, %v2506, %v2525
        %v2534 = vsel %vm2518, %v2508, %v2526
        %v2535 = vsel %vm2519, %v2510, %v2527
        %v2536 = vpack.c.bf16 %v2530, %v2528
        %v2537 = vpack.c.bf16 %v2531, %v2529
        %v2538 = vpack.c.bf16 %v2534, %v2532
        %v2539 = vpack.c.bf16 %v2535, %v2533
        %v2544 = vunpack.c.l.b16 %v2536
        %v2545 = vunpack.c.l.b16 %v2537
        %v2546 = vunpack.c.h.b16 %v2536
        %v2547 = vunpack.c.h.b16 %v2537
        %v2548 = vunpack.c.l.b16 %v2538
        %v2549 = vunpack.c.l.b16 %v2539
        %v2550 = vunpack.c.h.b16 %v2538
        %v2551 = vunpack.c.h.b16 %v2539
        %v2552 = vpack.c.b16 %v2545, %v2544
        %v2553 = vpack.c.b16 %v2547, %v2546
        %v2554 = vpack.c.b16 %v2549, %v2548
        %v2555 = vpack.c.b16 %v2551, %v2550
        %2560 = vst [vmem:[#allocation2 + $0x110] sm:$0xff] %v2552
        %2561 = vst [vmem:[#allocation2 + $0x148] sm:$0xff] %v2553
        %2562 = vst [vmem:[#allocation2 + $0x180] sm:$0xff] %v2554
        %2563 = vst [vmem:[#allocation2 + $0x1b8] sm:$0xff] %v2555
        %v2564 = vld [vmem:[#allocation2 + $0xe0] sm:$0xff]
        %v2565 = vld [vmem:[#allocation2 + $0x118] sm:$0xff]
        %v2566 = vld [vmem:[#allocation2 + $0x150] sm:$0xff]
        %v2567 = vld [vmem:[#allocation2 + $0x188] sm:$0xff]
        %2568 = vst [vmem:[#allocation2 + $0x8] sm:$0xff] %v2564
        %2569 = vst [vmem:[#allocation2 + $0x40] sm:$0xff] %v2565
        %2570 = vst [vmem:[#allocation2 + $0x78] sm:$0xff] %v2566
        %2571 = vst [vmem:[#allocation2 + $0xb0] sm:$0xff] %v2567
        %v2572 = vld [vmem:[#allocation2 + $0xe8] sm:$0xff]
        %v2573 = vld [vmem:[#allocation2 + $0x120] sm:$0xff]
        %v2574 = vld [vmem:[#allocation2 + $0x158] sm:$0xff]
        %v2575 = vld [vmem:[#allocation2 + $0x190] sm:$0xff]
        %2576 = vst [vmem:[#allocation2 + $0x10] sm:$0xff] %v2572
        %2577 = vst [vmem:[#allocation2 + $0x48] sm:$0xff] %v2573
        %2578 = vst [vmem:[#allocation2 + $0x80] sm:$0xff] %v2574
        %2579 = vst [vmem:[#allocation2 + $0xb8] sm:$0xff] %v2575
        %2580 = vst [vmem:[#allocation2 + $0x1c0] sm:$0xff] %v2572
        %2581 = vst [vmem:[#allocation2 + $0x1f8] sm:$0xff] %v2573
        %2582 = vst [vmem:[#allocation2 + $0x230] sm:$0xff] %v2574
        %2583 = vst [vmem:[#allocation2 + $0x268] sm:$0xff] %v2575
        %v2584 = vld [vmem:[#allocation2 + $0xf0] sm:$0xff]
        %v2585 = vld [vmem:[#allocation2 + $0x128] sm:$0xff]
        %v2586 = vld [vmem:[#allocation2 + $0x160] sm:$0xff]
        %v2587 = vld [vmem:[#allocation2 + $0x198] sm:$0xff]
        %2588 = vst [vmem:[#allocation2 + $0x18] sm:$0xff] %v2584
        %2589 = vst [vmem:[#allocation2 + $0x50] sm:$0xff] %v2585
        %2590 = vst [vmem:[#allocation2 + $0x88] sm:$0xff] %v2586
        %2591 = vst [vmem:[#allocation2 + $0xc0] sm:$0xff] %v2587
        %2592 = vst [vmem:[#allocation2 + $0x1c8] sm:$0xff] %v2584
        %2593 = vst [vmem:[#allocation2 + $0x200] sm:$0xff] %v2585
        %2594 = vst [vmem:[#allocation2 + $0x238] sm:$0xff] %v2586
        %2595 = vst [vmem:[#allocation2 + $0x270] sm:$0xff] %v2587
        %v2596 = vld [vmem:[#allocation2 + $0xf8] sm:$0xff]
        %v2597 = vld [vmem:[#allocation2 + $0x130] sm:$0xff]
        %v2598 = vld [vmem:[#allocation2 + $0x168] sm:$0xff]
        %v2599 = vld [vmem:[#allocation2 + $0x1a0] sm:$0xff]
        %2600 = vst [vmem:[#allocation2 + $0x20] sm:$0xff] %v2596
        %2601 = vst [vmem:[#allocation2 + $0x58] sm:$0xff] %v2597
        %2602 = vst [vmem:[#allocation2 + $0x90] sm:$0xff] %v2598
        %2603 = vst [vmem:[#allocation2 + $0xc8] sm:$0xff] %v2599
        %2604 = vst [vmem:[#allocation2 + $0x1d0] sm:$0xff] %v2596
        %2605 = vst [vmem:[#allocation2 + $0x208] sm:$0xff] %v2597
        %2606 = vst [vmem:[#allocation2 + $0x240] sm:$0xff] %v2598
        %2607 = vst [vmem:[#allocation2 + $0x278] sm:$0xff] %v2599
        %v2608 = vld [vmem:[#allocation2 + $0x100] sm:$0xff]
        %v2609 = vld [vmem:[#allocation2 + $0x138] sm:$0xff]
        %v2610 = vld [vmem:[#allocation2 + $0x170] sm:$0xff]
        %v2611 = vld [vmem:[#allocation2 + $0x1a8] sm:$0xff]
        %2612 = vst [vmem:[#allocation2 + $0x28] sm:$0xff] %v2608
        %2613 = vst [vmem:[#allocation2 + $0x60] sm:$0xff] %v2609
        %2614 = vst [vmem:[#allocation2 + $0x98] sm:$0xff] %v2610
        %2615 = vst [vmem:[#allocation2 + $0xd0] sm:$0xff] %v2611
        %2616 = vst [vmem:[#allocation2 + $0x1d8] sm:$0xff] %v2608
        %2617 = vst [vmem:[#allocation2 + $0x210] sm:$0xff] %v2609
        %2618 = vst [vmem:[#allocation2 + $0x248] sm:$0xff] %v2610
        %2619 = vst [vmem:[#allocation2 + $0x280] sm:$0xff] %v2611
        %v2620 = vld [vmem:[#allocation2 + $0x108] sm:$0xff]
        %v2621 = vld [vmem:[#allocation2 + $0x140] sm:$0xff]
        %v2622 = vld [vmem:[#allocation2 + $0x178] sm:$0xff]
        %v2623 = vld [vmem:[#allocation2 + $0x1b0] sm:$0xff]
        %2624 = vst [vmem:[#allocation2 + $0x30] sm:$0xff] %v2620
        %2625 = vst [vmem:[#allocation2 + $0x68] sm:$0xff] %v2621
        %2626 = vst [vmem:[#allocation2 + $0xa0] sm:$0xff] %v2622
        %2627 = vst [vmem:[#allocation2 + $0xd8] sm:$0xff] %v2623
        %2628 = vst [vmem:[#allocation2 + $0x1e0] sm:$0xff] %v2620
        %2629 = vst [vmem:[#allocation2 + $0x218] sm:$0xff] %v2621
        %2630 = vst [vmem:[#allocation2 + $0x250] sm:$0xff] %v2622
        %2631 = vst [vmem:[#allocation2 + $0x288] sm:$0xff] %v2623
        %v2632 = vld [vmem:[#allocation2 + $0x110] sm:$0xff]
        %v2633 = vld [vmem:[#allocation2 + $0x148] sm:$0xff]
        %v2634 = vld [vmem:[#allocation2 + $0x180] sm:$0xff]
        %v2635 = vld [vmem:[#allocation2 + $0x1b8] sm:$0xff]
        %2636 = vst [vmem:[#allocation2 + $0x1e8] sm:$0xff] %v2632
        %2637 = vst [vmem:[#allocation2 + $0x220] sm:$0xff] %v2633
        %2638 = vst [vmem:[#allocation2 + $0x258] sm:$0xff] %v2634
        %2639 = vst [vmem:[#allocation2 + $0x290] sm:$0xff] %v2635
        %v2640 = vld [vmem:[%s5] sm:$0xf]
        %v2641 = vld [vmem:[%s5 + $0x4] sm:$0xf]
        %v2642 = vld [vmem:[%s5 + $0x8] sm:$0xf]
        %v2643 = vld [vmem:[%s5 + $0xc] sm:$0xf]
        %v2644 = vld [vmem:[%s6] sm:$0xff]
        %v2645 = vld [vmem:[%s6 + $0x8] sm:$0xff]
        %v2646 = vld [vmem:[%s6 + $0x10] sm:$0xff]
        %v2647 = vld [vmem:[%s6 + $0x18] sm:$0xff]
        %v2648 = vld [vmem:[#allocation2] sm:$0xff]
        %v2649 = vld [vmem:[#allocation2 + $0x38] sm:$0xff]
        %v2650 = vld [vmem:[#allocation2 + $0x70] sm:$0xff]
        %v2651 = vld [vmem:[#allocation2 + $0xa8] sm:$0xff]
        %v2652 = vld [vmem:[#allocation2 + $0xe0] sm:$0xff]
        %v2653 = vld [vmem:[#allocation2 + $0x118] sm:$0xff]
        %v2654 = vld [vmem:[#allocation2 + $0x150] sm:$0xff]
        %v2655 = vld [vmem:[#allocation2 + $0x188] sm:$0xff]
        %v2656 = vld [vmem:[#allocation2 + $0x1c0] sm:$0xff]
        %v2657 = vld [vmem:[#allocation2 + $0x1f8] sm:$0xff]
        %v2658 = vld [vmem:[#allocation2 + $0x230] sm:$0xff]
        %v2659 = vld [vmem:[#allocation2 + $0x268] sm:$0xff]
        %2661 = vset.pattern.permute.xlu0 0
        %2662 = vperm.xlu0 %2661, %v2644
        %v2663 = vpop.permute.xlu0 %2662
        %2666 = vset.pattern.permute.xlu0 0
        %2667 = vperm.xlu0 %2666, %v2645
        %v2668 = vpop.permute.xlu0 %2667
        %2671 = vset.pattern.permute.xlu0 0
        %2672 = vperm.xlu0 %2671, %v2646
        %v2673 = vpop.permute.xlu0 %2672
        %2676 = vset.pattern.permute.xlu0 0
        %2677 = vperm.xlu0 %2676, %v2647
        %v2678 = vpop.permute.xlu0 %2677
        %v2684 = vunpack.c.l.b16 %v2640
        %v2685 = vunpack.c.l.b16 %v2641
        %v2686 = vunpack.c.l.b16 %v2642
        %v2687 = vunpack.c.l.b16 %v2643
        %v2688 = vpack.c.b16 %v2685, %v2684
        %v2689 = vpack.c.b16 %v2687, %v2686
        %v2702 = vunpack.c.l.b16 %v2648
        %v2703 = vunpack.c.h.b16 %v2648
        %v2704 = vunpack.c.l.b16 %v2649
        %v2705 = vunpack.c.h.b16 %v2649
        %v2706 = vunpack.c.l.b16 %v2650
        %v2707 = vunpack.c.h.b16 %v2650
        %v2708 = vunpack.c.l.b16 %v2651
        %v2709 = vunpack.c.h.b16 %v2651
        %v2710 = vunpack.c.l.b16 %v2652
        %v2711 = vunpack.c.h.b16 %v2652
        %v2712 = vunpack.c.l.b16 %v2653
        %v2713 = vunpack.c.h.b16 %v2653
        %v2714 = vunpack.c.l.b16 %v2654
        %v2715 = vunpack.c.h.b16 %v2654
        %v2716 = vunpack.c.l.b16 %v2655
        %v2717 = vunpack.c.h.b16 %v2655
        %v2718 = vunpack.c.l.b16 %v2656
        %v2719 = vunpack.c.h.b16 %v2656
        %v2720 = vunpack.c.l.b16 %v2657
        %v2721 = vunpack.c.h.b16 %v2657
        %v2722 = vunpack.c.l.b16 %v2658
        %v2723 = vunpack.c.h.b16 %v2658
        %v2724 = vunpack.c.l.b16 %v2659
        %v2725 = vunpack.c.h.b16 %v2659
        %v2726 = vpack.c.b16 %v2704, %v2702
        %v2727 = vpack.c.b16 %v2705, %v2703
        %v2728 = vpack.c.b16 %v2708, %v2706
        %v2729 = vpack.c.b16 %v2709, %v2707
        %v2730 = vpack.c.b16 %v2712, %v2710
        %v2731 = vpack.c.b16 %v2713, %v2711
        %v2732 = vpack.c.b16 %v2716, %v2714
        %v2733 = vpack.c.b16 %v2717, %v2715
        %v2734 = vpack.c.b16 %v2720, %v2718
        %v2735 = vpack.c.b16 %v2721, %v2719
        %v2736 = vpack.c.b16 %v2724, %v2722
        %v2737 = vpack.c.b16 %v2725, %v2723
        %v2751 = vsel %vm1390, %v2688, 0
        %v2754 = vsel %vm1390, %v2689, 0
        %2756 = vmatprep.subr.bf16.mxu0 0
        %2757 = vmatpush1.bf16.msra.mxu0 0
        %2758 = vmatprep.subr.bf16.mxu0 0
        %2759 = vmatpush1.bf16.msra.mxu0 0
        %2760 = vmatprep.subr.bf16.mxu0 %v2737
        %2761 = vmatpush1.bf16.msra.mxu0 %v2736
        %2762 = vmatprep.subr.bf16.mxu0 %v2735
        %2763 = vmatpush1.bf16.msra.mxu0 %v2734
        %2764 = vmatprep.subr.bf16.mxu0 %v2733
        %2765 = vmatpush1.bf16.msra.mxu0 %v2732
        %2766 = vmatprep.subr.bf16.mxu0 %v2731
        %2767 = vmatpush1.bf16.msra.mxu0 %v2730
        %2768 = vmatprep.subr.bf16.mxu0 %v2729
        %2769 = vmatpush1.bf16.msra.mxu0 %v2728
        %2770 = vmatprep.subr.bf16.mxu0 %v2727
        %2771 = vmatpush1.bf16.msra.mxu0 %v2726
        %2772 = vmatprep.subr.bf16.mxu0 0
        %2773 = vmatpush2.bf16.msra.mxu0 0
        %2774 = vmatprep.subr.bf16.mxu0 0
        %2775 = vmatpush2.bf16.msra.mxu0 0
        %2776 = vmatprep.subr.bf16.mxu0 0
        %2777 = vmatpush2.bf16.msra.mxu0 0
        %2778 = vmatprep.subr.bf16.mxu0 0
        %2779 = vmatpush2.bf16.msra.mxu0 0
        %2780 = vmatprep.subr.bf16.mxu0 0
        %2781 = vmatpush2.bf16.msra.mxu0 0
        %2782 = vmatprep.subr.bf16.mxu0 0
        %2783 = vmatpush2.bf16.msra.mxu0 0
        %2784 = vmatprep.subr.bf16.mxu0 0
        %2785 = vmatpush2.bf16.msra.mxu0 0
        %2786 = vmatprep.subr.bf16.mxu0 0
        %2787 = vmatpush2.bf16.msra.mxu0 0
        %2788 = vmatprep.mubr.bf16.mxu0 0
        %2789 = vmatmul.mubr.bf16.gmra.mxu0 %v2751
        %v2790 = vpop.f32.mrf.mxu0
        %v2791 = vadd.f32 %v2663, %v2790
        %v2792 = vpop.f32.mrf.mxu0
        %v2793 = vadd.f32 %v2663, %v2792
        %v2794 = vpop.f32.mrf.mxu0
        %v2795 = vadd.f32 %v2668, %v2794
        %v2796 = vpop.f32.mrf.mxu0
        %v2797 = vadd.f32 %v2668, %v2796
        %2798 = vmatprep.mubr.bf16.mxu0 0
        %2799 = vmatmul.mubr.bf16.gmra.mxu0 %v2754
        %v2800 = vpop.f32.mrf.mxu0
        %v2801 = vadd.f32 %v2673, %v2800
        %v2802 = vpop.f32.mrf.mxu0
        %v2803 = vadd.f32 %v2673, %v2802
        %v2804 = vpop.f32.mrf.mxu0
        %v2805 = vadd.f32 %v2678, %v2804
        %v2806 = vpop.f32.mrf.mxu0
        %v2807 = vadd.f32 %v2678, %v2806
        %2808 = vdwg.mxu0
        %vm2809 = vcmp.gt.f32.partialorder %v2791, 0.0
        %vm2810 = vcmp.gt.f32.partialorder %v2793, 0.0
        %vm2811 = vcmp.gt.f32.partialorder %v2795, 0.0
        %vm2812 = vcmp.gt.f32.partialorder %v2797, 0.0
        %vm2813 = vcmp.gt.f32.partialorder %v2801, 0.0
        %vm2814 = vcmp.gt.f32.partialorder %v2803, 0.0
        %vm2815 = vcmp.gt.f32.partialorder %v2805, 0.0
        %vm2816 = vcmp.gt.f32.partialorder %v2807, 0.0
        %v2817 = vmul.f32 %v2791, 0.1
        %v2818 = vmul.f32 %v2793, 0.1
        %v2819 = vmul.f32 %v2795, 0.1
        %v2820 = vmul.f32 %v2797, 0.1
        %v2821 = vmul.f32 %v2801, 0.1
        %v2822 = vmul.f32 %v2803, 0.1
        %v2823 = vmul.f32 %v2805, 0.1
        %v2824 = vmul.f32 %v2807, 0.1
        %v2825 = vsel %vm2809, %v2791, %v2817
        %v2826 = vsel %vm2810, %v2793, %v2818
        %v2827 = vsel %vm2811, %v2795, %v2819
        %v2828 = vsel %vm2812, %v2797, %v2820
        %v2829 = vsel %vm2813, %v2801, %v2821
        %v2830 = vsel %vm2814, %v2803, %v2822
        %v2831 = vsel %vm2815, %v2805, %v2823
        %v2832 = vsel %vm2816, %v2807, %v2824
        %2833 = vst [vmem:[%s296] sm:$0xff] %v2825
        %2834 = vst [vmem:[%s296 + $0x8] sm:$0xff] %v2826
        %2835 = vst [vmem:[%s296 + $0x10] sm:$0xff] %v2827
        %2836 = vst [vmem:[%s296 + $0x18] sm:$0xff] %v2828
        %2837 = vst [vmem:[%s296 + $0x20] sm:$0xff] %v2829
        %2838 = vst [vmem:[%s296 + $0x28] sm:$0xff] %v2830
        %2839 = vst [vmem:[%s296 + $0x30] sm:$0xff] %v2831
        %2840 = vst [vmem:[%s296 + $0x38] sm:$0xff] %v2832
        %v2841 = vld [vmem:[#allocation2 + $0x8] sm:$0xff]
        %v2842 = vld [vmem:[#allocation2 + $0x40] sm:$0xff]
        %v2843 = vld [vmem:[#allocation2 + $0x78] sm:$0xff]
        %v2844 = vld [vmem:[#allocation2 + $0xb0] sm:$0xff]
        %v2845 = vld [vmem:[#allocation2 + $0xe8] sm:$0xff]
        %v2846 = vld [vmem:[#allocation2 + $0x120] sm:$0xff]
        %v2847 = vld [vmem:[#allocation2 + $0x158] sm:$0xff]
        %v2848 = vld [vmem:[#allocation2 + $0x190] sm:$0xff]
        %v2849 = vld [vmem:[#allocation2 + $0x1c8] sm:$0xff]
        %v2850 = vld [vmem:[#allocation2 + $0x200] sm:$0xff]
        %v2851 = vld [vmem:[#allocation2 + $0x238] sm:$0xff]
        %v2852 = vld [vmem:[#allocation2 + $0x270] sm:$0xff]
        %v2865 = vunpack.c.l.b16 %v2841
        %v2866 = vunpack.c.h.b16 %v2841
        %v2867 = vunpack.c.l.b16 %v2842
        %v2868 = vunpack.c.h.b16 %v2842
        %v2869 = vunpack.c.l.b16 %v2843
        %v2870 = vunpack.c.h.b16 %v2843
        %v2871 = vunpack.c.l.b16 %v2844
        %v2872 = vunpack.c.h.b16 %v2844
        %v2873 = vunpack.c.l.b16 %v2845
        %v2874 = vunpack.c.h.b16 %v2845
        %v2875 = vunpack.c.l.b16 %v2846
        %v2876 = vunpack.c.h.b16 %v2846
        %v2877 = vunpack.c.l.b16 %v2847
        %v2878 = vunpack.c.h.b16 %v2847
        %v2879 = vunpack.c.l.b16 %v2848
        %v2880 = vunpack.c.h.b16 %v2848
        %v2881 = vunpack.c.l.b16 %v2849
        %v2882 = vunpack.c.h.b16 %v2849
        %v2883 = vunpack.c.l.b16 %v2850
        %v2884 = vunpack.c.h.b16 %v2850
        %v2885 = vunpack.c.l.b16 %v2851
        %v2886 = vunpack.c.h.b16 %v2851
        %v2887 = vunpack.c.l.b16 %v2852
        %v2888 = vunpack.c.h.b16 %v2852
        %v2889 = vpack.c.b16 %v2867, %v2865
        %v2890 = vpack.c.b16 %v2868, %v2866
        %v2891 = vpack.c.b16 %v2871, %v2869
        %v2892 = vpack.c.b16 %v2872, %v2870
        %v2893 = vpack.c.b16 %v2875, %v2873
        %v2894 = vpack.c.b16 %v2876, %v2874
        %v2895 = vpack.c.b16 %v2879, %v2877
        %v2896 = vpack.c.b16 %v2880, %v2878
        %v2897 = vpack.c.b16 %v2883, %v2881
        %v2898 = vpack.c.b16 %v2884, %v2882
        %v2899 = vpack.c.b16 %v2887, %v2885
        %v2900 = vpack.c.b16 %v2888, %v2886
        %2913 = vmatprep.subr.bf16.mxu0 0
        %2914 = vmatpush1.bf16.msra.mxu0 0
        %2915 = vmatprep.subr.bf16.mxu0 0
        %2916 = vmatpush1.bf16.msra.mxu0 0
        %2917 = vmatprep.subr.bf16.mxu0 %v2900
        %2918 = vmatpush1.bf16.msra.mxu0 %v2899
        %2919 = vmatprep.subr.bf16.mxu0 %v2898
        %2920 = vmatpush1.bf16.msra.mxu0 %v2897
        %2921 = vmatprep.subr.bf16.mxu0 %v2896
        %2922 = vmatpush1.bf16.msra.mxu0 %v2895
        %2923 = vmatprep.subr.bf16.mxu0 %v2894
        %2924 = vmatpush1.bf16.msra.mxu0 %v2893
        %2925 = vmatprep.subr.bf16.mxu0 %v2892
        %2926 = vmatpush1.bf16.msra.mxu0 %v2891
        %2927 = vmatprep.subr.bf16.mxu0 %v2890
        %2928 = vmatpush1.bf16.msra.mxu0 %v2889
        %2929 = vmatprep.subr.bf16.mxu0 0
        %2930 = vmatpush2.bf16.msra.mxu0 0
        %2931 = vmatprep.subr.bf16.mxu0 0
        %2932 = vmatpush2.bf16.msra.mxu0 0
        %2933 = vmatprep.subr.bf16.mxu0 0
        %2934 = vmatpush2.bf16.msra.mxu0 0
        %2935 = vmatprep.subr.bf16.mxu0 0
        %2936 = vmatpush2.bf16.msra.mxu0 0
        %2937 = vmatprep.subr.bf16.mxu0 0
        %2938 = vmatpush2.bf16.msra.mxu0 0
        %2939 = vmatprep.subr.bf16.mxu0 0
        %2940 = vmatpush2.bf16.msra.mxu0 0
        %2941 = vmatprep.subr.bf16.mxu0 0
        %2942 = vmatpush2.bf16.msra.mxu0 0
        %2943 = vmatprep.subr.bf16.mxu0 0
        %2944 = vmatpush2.bf16.msra.mxu0 0
        %2945 = vmatprep.mubr.bf16.mxu0 0
        %2946 = vmatmul.mubr.bf16.gmra.mxu0 %v2751
        %v2947 = vpop.f32.mrf.mxu0
        %v2948 = vadd.f32 %v2663, %v2947
        %v2949 = vpop.f32.mrf.mxu0
        %v2950 = vadd.f32 %v2663, %v2949
        %v2951 = vpop.f32.mrf.mxu0
        %v2952 = vadd.f32 %v2668, %v2951
        %v2953 = vpop.f32.mrf.mxu0
        %v2954 = vadd.f32 %v2668, %v2953
        %2955 = vmatprep.mubr.bf16.mxu0 0
        %2956 = vmatmul.mubr.bf16.gmra.mxu0 %v2754
        %v2957 = vpop.f32.mrf.mxu0
        %v2958 = vadd.f32 %v2673, %v2957
        %v2959 = vpop.f32.mrf.mxu0
        %v2960 = vadd.f32 %v2673, %v2959
        %v2961 = vpop.f32.mrf.mxu0
        %v2962 = vadd.f32 %v2678, %v2961
        %v2963 = vpop.f32.mrf.mxu0
        %v2964 = vadd.f32 %v2678, %v2963
        %2965 = vdwg.mxu0
        %vm2966 = vcmp.gt.f32.partialorder %v2948, 0.0
        %vm2967 = vcmp.gt.f32.partialorder %v2950, 0.0
        %vm2968 = vcmp.gt.f32.partialorder %v2952, 0.0
        %vm2969 = vcmp.gt.f32.partialorder %v2954, 0.0
        %vm2970 = vcmp.gt.f32.partialorder %v2958, 0.0
        %vm2971 = vcmp.gt.f32.partialorder %v2960, 0.0
        %vm2972 = vcmp.gt.f32.partialorder %v2962, 0.0
        %vm2973 = vcmp.gt.f32.partialorder %v2964, 0.0
        %v2974 = vmul.f32 %v2948, 0.1
        %v2975 = vmul.f32 %v2950, 0.1
        %v2976 = vmul.f32 %v2952, 0.1
        %v2977 = vmul.f32 %v2954, 0.1
        %v2978 = vmul.f32 %v2958, 0.1
        %v2979 = vmul.f32 %v2960, 0.1
        %v2980 = vmul.f32 %v2962, 0.1
        %v2981 = vmul.f32 %v2964, 0.1
        %v2982 = vsel %vm2966, %v2948, %v2974
        %v2983 = vsel %vm2967, %v2950, %v2975
        %v2984 = vsel %vm2968, %v2952, %v2976
        %v2985 = vsel %vm2969, %v2954, %v2977
        %v2986 = vsel %vm2970, %v2958, %v2978
        %v2987 = vsel %vm2971, %v2960, %v2979
        %v2988 = vsel %vm2972, %v2962, %v2980
        %v2989 = vsel %vm2973, %v2964, %v2981
        %v2990 = vld [vmem:[%s296] sm:$0xff]
        %v2991 = vld [vmem:[%s296 + $0x8] sm:$0xff]
        %v2992 = vld [vmem:[%s296 + $0x10] sm:$0xff]
        %v2993 = vld [vmem:[%s296 + $0x18] sm:$0xff]
        %v2994 = vld [vmem:[%s296 + $0x20] sm:$0xff]
        %v2995 = vld [vmem:[%s296 + $0x28] sm:$0xff]
        %v2996 = vld [vmem:[%s296 + $0x30] sm:$0xff]
        %v2997 = vld [vmem:[%s296 + $0x38] sm:$0xff]
        %v2998 = vmax.f32 %v2990, %v2982
        %v2999 = vmax.f32 %v2991, %v2983
        %v3000 = vmax.f32 %v2992, %v2984
        %v3001 = vmax.f32 %v2993, %v2985
        %v3002 = vmax.f32 %v2994, %v2986
        %v3003 = vmax.f32 %v2995, %v2987
        %v3004 = vmax.f32 %v2996, %v2988
        %v3005 = vmax.f32 %v2997, %v2989
        %3006 = vst [vmem:[%s296] sm:$0xff] %v2998
        %3007 = vst [vmem:[%s296 + $0x8] sm:$0xff] %v2999
        %3008 = vst [vmem:[%s296 + $0x10] sm:$0xff] %v3000
        %3009 = vst [vmem:[%s296 + $0x18] sm:$0xff] %v3001
        %3010 = vst [vmem:[%s296 + $0x20] sm:$0xff] %v3002
        %3011 = vst [vmem:[%s296 + $0x28] sm:$0xff] %v3003
        %3012 = vst [vmem:[%s296 + $0x30] sm:$0xff] %v3004
        %3013 = vst [vmem:[%s296 + $0x38] sm:$0xff] %v3005
        %v3014 = vld [vmem:[#allocation2 + $0x10] sm:$0xff]
        %v3015 = vld [vmem:[#allocation2 + $0x48] sm:$0xff]
        %v3016 = vld [vmem:[#allocation2 + $0x80] sm:$0xff]
        %v3017 = vld [vmem:[#allocation2 + $0xb8] sm:$0xff]
        %v3018 = vld [vmem:[#allocation2 + $0xf0] sm:$0xff]
        %v3019 = vld [vmem:[#allocation2 + $0x128] sm:$0xff]
        %v3020 = vld [vmem:[#allocation2 + $0x160] sm:$0xff]
        %v3021 = vld [vmem:[#allocation2 + $0x198] sm:$0xff]
        %v3022 = vld [vmem:[#allocation2 + $0x1d0] sm:$0xff]
        %v3023 = vld [vmem:[#allocation2 + $0x208] sm:$0xff]
        %v3024 = vld [vmem:[#allocation2 + $0x240] sm:$0xff]
        %v3025 = vld [vmem:[#allocation2 + $0x278] sm:$0xff]
        %v3038 = vunpack.c.l.b16 %v3014
        %v3039 = vunpack.c.h.b16 %v3014
        %v3040 = vunpack.c.l.b16 %v3015
        %v3041 = vunpack.c.h.b16 %v3015
        %v3042 = vunpack.c.l.b16 %v3016
        %v3043 = vunpack.c.h.b16 %v3016
        %v3044 = vunpack.c.l.b16 %v3017
        %v3045 = vunpack.c.h.b16 %v3017
        %v3046 = vunpack.c.l.b16 %v3018
        %v3047 = vunpack.c.h.b16 %v3018
        %v3048 = vunpack.c.l.b16 %v3019
        %v3049 = vunpack.c.h.b16 %v3019
        %v3050 = vunpack.c.l.b16 %v3020
        %v3051 = vunpack.c.h.b16 %v3020
        %v3052 = vunpack.c.l.b16 %v3021
        %v3053 = vunpack.c.h.b16 %v3021
        %v3054 = vunpack.c.l.b16 %v3022
        %v3055 = vunpack.c.h.b16 %v3022
        %v3056 = vunpack.c.l.b16 %v3023
        %v3057 = vunpack.c.h.b16 %v3023
        %v3058 = vunpack.c.l.b16 %v3024
        %v3059 = vunpack.c.h.b16 %v3024
        %v3060 = vunpack.c.l.b16 %v3025
        %v3061 = vunpack.c.h.b16 %v3025
        %v3062 = vpack.c.b16 %v3040, %v3038
        %v3063 = vpack.c.b16 %v3041, %v3039
        %v3064 = vpack.c.b16 %v3044, %v3042
        %v3065 = vpack.c.b16 %v3045, %v3043
        %v3066 = vpack.c.b16 %v3048, %v3046
        %v3067 = vpack.c.b16 %v3049, %v3047
        %v3068 = vpack.c.b16 %v3052, %v3050
        %v3069 = vpack.c.b16 %v3053, %v3051
        %v3070 = vpack.c.b16 %v3056, %v3054
        %v3071 = vpack.c.b16 %v3057, %v3055
        %v3072 = vpack.c.b16 %v3060, %v3058
        %v3073 = vpack.c.b16 %v3061, %v3059
        %3086 = vmatprep.subr.bf16.mxu0 0
        %3087 = vmatpush1.bf16.msra.mxu0 0
        %3088 = vmatprep.subr.bf16.mxu0 0
        %3089 = vmatpush1.bf16.msra.mxu0 0
        %3090 = vmatprep.subr.bf16.mxu0 %v3073
        %3091 = vmatpush1.bf16.msra.mxu0 %v3072
        %3092 = vmatprep.subr.bf16.mxu0 %v3071
        %3093 = vmatpush1.bf16.msra.mxu0 %v3070
        %3094 = vmatprep.subr.bf16.mxu0 %v3069
        %3095 = vmatpush1.bf16.msra.mxu0 %v3068
        %3096 = vmatprep.subr.bf16.mxu0 %v3067
        %3097 = vmatpush1.bf16.msra.mxu0 %v3066
        %3098 = vmatprep.subr.bf16.mxu0 %v3065
        %3099 = vmatpush1.bf16.msra.mxu0 %v3064
        %3100 = vmatprep.subr.bf16.mxu0 %v3063
        %3101 = vmatpush1.bf16.msra.mxu0 %v3062
        %3102 = vmatprep.subr.bf16.mxu0 0
        %3103 = vmatpush2.bf16.msra.mxu0 0
        %3104 = vmatprep.subr.bf16.mxu0 0
        %3105 = vmatpush2.bf16.msra.mxu0 0
        %3106 = vmatprep.subr.bf16.mxu0 0
        %3107 = vmatpush2.bf16.msra.mxu0 0
        %3108 = vmatprep.subr.bf16.mxu0 0
        %3109 = vmatpush2.bf16.msra.mxu0 0
        %3110 = vmatprep.subr.bf16.mxu0 0
        %3111 = vmatpush2.bf16.msra.mxu0 0
        %3112 = vmatprep.subr.bf16.mxu0 0
        %3113 = vmatpush2.bf16.msra.mxu0 0
        %3114 = vmatprep.subr.bf16.mxu0 0
        %3115 = vmatpush2.bf16.msra.mxu0 0
        %3116 = vmatprep.subr.bf16.mxu0 0
        %3117 = vmatpush2.bf16.msra.mxu0 0
        %3118 = vmatprep.mubr.bf16.mxu0 0
        %3119 = vmatmul.mubr.bf16.gmra.mxu0 %v2751
        %v3120 = vpop.f32.mrf.mxu0
        %v3121 = vadd.f32 %v2663, %v3120
        %v3122 = vpop.f32.mrf.mxu0
        %v3123 = vadd.f32 %v2663, %v3122
        %v3124 = vpop.f32.mrf.mxu0
        %v3125 = vadd.f32 %v2668, %v3124
        %v3126 = vpop.f32.mrf.mxu0
        %v3127 = vadd.f32 %v2668, %v3126
        %3128 = vmatprep.mubr.bf16.mxu0 0
        %3129 = vmatmul.mubr.bf16.gmra.mxu0 %v2754
        %v3130 = vpop.f32.mrf.mxu0
        %v3131 = vadd.f32 %v2673, %v3130
        %v3132 = vpop.f32.mrf.mxu0
        %v3133 = vadd.f32 %v2673, %v3132
        %v3134 = vpop.f32.mrf.mxu0
        %v3135 = vadd.f32 %v2678, %v3134
        %v3136 = vpop.f32.mrf.mxu0
        %v3137 = vadd.f32 %v2678, %v3136
        %3138 = vdwg.mxu0
        %vm3139 = vcmp.gt.f32.partialorder %v3121, 0.0
        %vm3140 = vcmp.gt.f32.partialorder %v3123, 0.0
        %vm3141 = vcmp.gt.f32.partialorder %v3125, 0.0
        %vm3142 = vcmp.gt.f32.partialorder %v3127, 0.0
        %vm3143 = vcmp.gt.f32.partialorder %v3131, 0.0
        %vm3144 = vcmp.gt.f32.partialorder %v3133, 0.0
        %vm3145 = vcmp.gt.f32.partialorder %v3135, 0.0
        %vm3146 = vcmp.gt.f32.partialorder %v3137, 0.0
        %v3147 = vmul.f32 %v3121, 0.1
        %v3148 = vmul.f32 %v3123, 0.1
        %v3149 = vmul.f32 %v3125, 0.1
        %v3150 = vmul.f32 %v3127, 0.1
        %v3151 = vmul.f32 %v3131, 0.1
        %v3152 = vmul.f32 %v3133, 0.1
        %v3153 = vmul.f32 %v3135, 0.1
        %v3154 = vmul.f32 %v3137, 0.1
        %v3155 = vsel %vm3139, %v3121, %v3147
        %v3156 = vsel %vm3140, %v3123, %v3148
        %v3157 = vsel %vm3141, %v3125, %v3149
        %v3158 = vsel %vm3142, %v3127, %v3150
        %v3159 = vsel %vm3143, %v3131, %v3151
        %v3160 = vsel %vm3144, %v3133, %v3152
        %v3161 = vsel %vm3145, %v3135, %v3153
        %v3162 = vsel %vm3146, %v3137, %v3154
        %v3163 = vld [vmem:[%s296] sm:$0xff]
        %v3164 = vld [vmem:[%s296 + $0x8] sm:$0xff]
        %v3165 = vld [vmem:[%s296 + $0x10] sm:$0xff]
        %v3166 = vld [vmem:[%s296 + $0x18] sm:$0xff]
        %v3167 = vld [vmem:[%s296 + $0x20] sm:$0xff]
        %v3168 = vld [vmem:[%s296 + $0x28] sm:$0xff]
        %v3169 = vld [vmem:[%s296 + $0x30] sm:$0xff]
        %v3170 = vld [vmem:[%s296 + $0x38] sm:$0xff]
        %v3171 = vmax.f32 %v3163, %v3155
        %v3172 = vmax.f32 %v3164, %v3156
        %v3173 = vmax.f32 %v3165, %v3157
        %v3174 = vmax.f32 %v3166, %v3158
        %v3175 = vmax.f32 %v3167, %v3159
        %v3176 = vmax.f32 %v3168, %v3160
        %v3177 = vmax.f32 %v3169, %v3161
        %v3178 = vmax.f32 %v3170, %v3162
        %3179 = vst [vmem:[%s296] sm:$0xff] %v3171
        %3180 = vst [vmem:[%s296 + $0x8] sm:$0xff] %v3172
        %3181 = vst [vmem:[%s296 + $0x10] sm:$0xff] %v3173
        %3182 = vst [vmem:[%s296 + $0x18] sm:$0xff] %v3174
        %3183 = vst [vmem:[%s296 + $0x20] sm:$0xff] %v3175
        %3184 = vst [vmem:[%s296 + $0x28] sm:$0xff] %v3176
        %3185 = vst [vmem:[%s296 + $0x30] sm:$0xff] %v3177
        %3186 = vst [vmem:[%s296 + $0x38] sm:$0xff] %v3178
        %v3187 = vld [vmem:[#allocation2 + $0x18] sm:$0xff]
        %v3188 = vld [vmem:[#allocation2 + $0x50] sm:$0xff]
        %v3189 = vld [vmem:[#allocation2 + $0x88] sm:$0xff]
        %v3190 = vld [vmem:[#allocation2 + $0xc0] sm:$0xff]
        %v3191 = vld [vmem:[#allocation2 + $0xf8] sm:$0xff]
        %v3192 = vld [vmem:[#allocation2 + $0x130] sm:$0xff]
        %v3193 = vld [vmem:[#allocation2 + $0x168] sm:$0xff]
        %v3194 = vld [vmem:[#allocation2 + $0x1a0] sm:$0xff]
        %v3195 = vld [vmem:[#allocation2 + $0x1d8] sm:$0xff]
        %v3196 = vld [vmem:[#allocation2 + $0x210] sm:$0xff]
        %v3197 = vld [vmem:[#allocation2 + $0x248] sm:$0xff]
        %v3198 = vld [vmem:[#allocation2 + $0x280] sm:$0xff]
        %v3211 = vunpack.c.l.b16 %v3187
        %v3212 = vunpack.c.h.b16 %v3187
        %v3213 = vunpack.c.l.b16 %v3188
        %v3214 = vunpack.c.h.b16 %v3188
        %v3215 = vunpack.c.l.b16 %v3189
        %v3216 = vunpack.c.h.b16 %v3189
        %v3217 = vunpack.c.l.b16 %v3190
        %v3218 = vunpack.c.h.b16 %v3190
        %v3219 = vunpack.c.l.b16 %v3191
        %v3220 = vunpack.c.h.b16 %v3191
        %v3221 = vunpack.c.l.b16 %v3192
        %v3222 = vunpack.c.h.b16 %v3192
        %v3223 = vunpack.c.l.b16 %v3193
        %v3224 = vunpack.c.h.b16 %v3193
        %v3225 = vunpack.c.l.b16 %v3194
        %v3226 = vunpack.c.h.b16 %v3194
        %v3227 = vunpack.c.l.b16 %v3195
        %v3228 = vunpack.c.h.b16 %v3195
        %v3229 = vunpack.c.l.b16 %v3196
        %v3230 = vunpack.c.h.b16 %v3196
        %v3231 = vunpack.c.l.b16 %v3197
        %v3232 = vunpack.c.h.b16 %v3197
        %v3233 = vunpack.c.l.b16 %v3198
        %v3234 = vunpack.c.h.b16 %v3198
        %v3235 = vpack.c.b16 %v3213, %v3211
        %v3236 = vpack.c.b16 %v3214, %v3212
        %v3237 = vpack.c.b16 %v3217, %v3215
        %v3238 = vpack.c.b16 %v3218, %v3216
        %v3239 = vpack.c.b16 %v3221, %v3219
        %v3240 = vpack.c.b16 %v3222, %v3220
        %v3241 = vpack.c.b16 %v3225, %v3223
        %v3242 = vpack.c.b16 %v3226, %v3224
        %v3243 = vpack.c.b16 %v3229, %v3227
        %v3244 = vpack.c.b16 %v3230, %v3228
        %v3245 = vpack.c.b16 %v3233, %v3231
        %v3246 = vpack.c.b16 %v3234, %v3232
        %3259 = vmatprep.subr.bf16.mxu0 0
        %3260 = vmatpush1.bf16.msra.mxu0 0
        %3261 = vmatprep.subr.bf16.mxu0 0
        %3262 = vmatpush1.bf16.msra.mxu0 0
        %3263 = vmatprep.subr.bf16.mxu0 %v3246
        %3264 = vmatpush1.bf16.msra.mxu0 %v3245
        %3265 = vmatprep.subr.bf16.mxu0 %v3244
        %3266 = vmatpush1.bf16.msra.mxu0 %v3243
        %3267 = vmatprep.subr.bf16.mxu0 %v3242
        %3268 = vmatpush1.bf16.msra.mxu0 %v3241
        %3269 = vmatprep.subr.bf16.mxu0 %v3240
        %3270 = vmatpush1.bf16.msra.mxu0 %v3239
        %3271 = vmatprep.subr.bf16.mxu0 %v3238
        %3272 = vmatpush1.bf16.msra.mxu0 %v3237
        %3273 = vmatprep.subr.bf16.mxu0 %v3236
        %3274 = vmatpush1.bf16.msra.mxu0 %v3235
        %3275 = vmatprep.subr.bf16.mxu0 0
        %3276 = vmatpush2.bf16.msra.mxu0 0
        %3277 = vmatprep.subr.bf16.mxu0 0
        %3278 = vmatpush2.bf16.msra.mxu0 0
        %3279 = vmatprep.subr.bf16.mxu0 0
        %3280 = vmatpush2.bf16.msra.mxu0 0
        %3281 = vmatprep.subr.bf16.mxu0 0
        %3282 = vmatpush2.bf16.msra.mxu0 0
        %3283 = vmatprep.subr.bf16.mxu0 0
        %3284 = vmatpush2.bf16.msra.mxu0 0
        %3285 = vmatprep.subr.bf16.mxu0 0
        %3286 = vmatpush2.bf16.msra.mxu0 0
        %3287 = vmatprep.subr.bf16.mxu0 0
        %3288 = vmatpush2.bf16.msra.mxu0 0
        %3289 = vmatprep.subr.bf16.mxu0 0
        %3290 = vmatpush2.bf16.msra.mxu0 0
        %3291 = vmatprep.mubr.bf16.mxu0 0
        %3292 = vmatmul.mubr.bf16.gmra.mxu0 %v2751
        %v3293 = vpop.f32.mrf.mxu0
        %v3294 = vadd.f32 %v2663, %v3293
        %v3295 = vpop.f32.mrf.mxu0
        %v3296 = vadd.f32 %v2663, %v3295
        %v3297 = vpop.f32.mrf.mxu0
        %v3298 = vadd.f32 %v2668, %v3297
        %v3299 = vpop.f32.mrf.mxu0
        %v3300 = vadd.f32 %v2668, %v3299
        %3301 = vmatprep.mubr.bf16.mxu0 0
        %3302 = vmatmul.mubr.bf16.gmra.mxu0 %v2754
        %v3303 = vpop.f32.mrf.mxu0
        %v3304 = vadd.f32 %v2673, %v3303
        %v3305 = vpop.f32.mrf.mxu0
        %v3306 = vadd.f32 %v2673, %v3305
        %v3307 = vpop.f32.mrf.mxu0
        %v3308 = vadd.f32 %v2678, %v3307
        %v3309 = vpop.f32.mrf.mxu0
        %v3310 = vadd.f32 %v2678, %v3309
        %3311 = vdwg.mxu0
        %vm3312 = vcmp.gt.f32.partialorder %v3294, 0.0
        %vm3313 = vcmp.gt.f32.partialorder %v3296, 0.0
        %vm3314 = vcmp.gt.f32.partialorder %v3298, 0.0
        %vm3315 = vcmp.gt.f32.partialorder %v3300, 0.0
        %vm3316 = vcmp.gt.f32.partialorder %v3304, 0.0
        %vm3317 = vcmp.gt.f32.partialorder %v3306, 0.0
        %vm3318 = vcmp.gt.f32.partialorder %v3308, 0.0
        %vm3319 = vcmp.gt.f32.partialorder %v3310, 0.0
        %v3320 = vmul.f32 %v3294, 0.1
        %v3321 = vmul.f32 %v3296, 0.1
        %v3322 = vmul.f32 %v3298, 0.1
        %v3323 = vmul.f32 %v3300, 0.1
        %v3324 = vmul.f32 %v3304, 0.1
        %v3325 = vmul.f32 %v3306, 0.1
        %v3326 = vmul.f32 %v3308, 0.1
        %v3327 = vmul.f32 %v3310, 0.1
        %v3328 = vsel %vm3312, %v3294, %v3320
        %v3329 = vsel %vm3313, %v3296, %v3321
        %v3330 = vsel %vm3314, %v3298, %v3322
        %v3331 = vsel %vm3315, %v3300, %v3323
        %v3332 = vsel %vm3316, %v3304, %v3324
        %v3333 = vsel %vm3317, %v3306, %v3325
        %v3334 = vsel %vm3318, %v3308, %v3326
        %v3335 = vsel %vm3319, %v3310, %v3327
        %v3336 = vld [vmem:[%s296] sm:$0xff]
        %v3337 = vld [vmem:[%s296 + $0x8] sm:$0xff]
        %v3338 = vld [vmem:[%s296 + $0x10] sm:$0xff]
        %v3339 = vld [vmem:[%s296 + $0x18] sm:$0xff]
        %v3340 = vld [vmem:[%s296 + $0x20] sm:$0xff]
        %v3341 = vld [vmem:[%s296 + $0x28] sm:$0xff]
        %v3342 = vld [vmem:[%s296 + $0x30] sm:$0xff]
        %v3343 = vld [vmem:[%s296 + $0x38] sm:$0xff]
        %v3344 = vmax.f32 %v3336, %v3328
        %v3345 = vmax.f32 %v3337, %v3329
        %v3346 = vmax.f32 %v3338, %v3330
        %v3347 = vmax.f32 %v3339, %v3331
        %v3348 = vmax.f32 %v3340, %v3332
        %v3349 = vmax.f32 %v3341, %v3333
        %v3350 = vmax.f32 %v3342, %v3334
        %v3351 = vmax.f32 %v3343, %v3335
        %3352 = vst [vmem:[%s296] sm:$0xff] %v3344
        %3353 = vst [vmem:[%s296 + $0x8] sm:$0xff] %v3345
        %3354 = vst [vmem:[%s296 + $0x10] sm:$0xff] %v3346
        %3355 = vst [vmem:[%s296 + $0x18] sm:$0xff] %v3347
        %3356 = vst [vmem:[%s296 + $0x20] sm:$0xff] %v3348
        %3357 = vst [vmem:[%s296 + $0x28] sm:$0xff] %v3349
        %3358 = vst [vmem:[%s296 + $0x30] sm:$0xff] %v3350
        %3359 = vst [vmem:[%s296 + $0x38] sm:$0xff] %v3351
        %v3360 = vld [vmem:[#allocation2 + $0x20] sm:$0xff]
        %v3361 = vld [vmem:[#allocation2 + $0x58] sm:$0xff]
        %v3362 = vld [vmem:[#allocation2 + $0x90] sm:$0xff]
        %v3363 = vld [vmem:[#allocation2 + $0xc8] sm:$0xff]
        %v3364 = vld [vmem:[#allocation2 + $0x100] sm:$0xff]
        %v3365 = vld [vmem:[#allocation2 + $0x138] sm:$0xff]
        %v3366 = vld [vmem:[#allocation2 + $0x170] sm:$0xff]
        %v3367 = vld [vmem:[#allocation2 + $0x1a8] sm:$0xff]
        %v3368 = vld [vmem:[#allocation2 + $0x1e0] sm:$0xff]
        %v3369 = vld [vmem:[#allocation2 + $0x218] sm:$0xff]
        %v3370 = vld [vmem:[#allocation2 + $0x250] sm:$0xff]
        %v3371 = vld [vmem:[#allocation2 + $0x288] sm:$0xff]
        %v3384 = vunpack.c.l.b16 %v3360
        %v3385 = vunpack.c.h.b16 %v3360
        %v3386 = vunpack.c.l.b16 %v3361
        %v3387 = vunpack.c.h.b16 %v3361
        %v3388 = vunpack.c.l.b16 %v3362
        %v3389 = vunpack.c.h.b16 %v3362
        %v3390 = vunpack.c.l.b16 %v3363
        %v3391 = vunpack.c.h.b16 %v3363
        %v3392 = vunpack.c.l.b16 %v3364
        %v3393 = vunpack.c.h.b16 %v3364
        %v3394 = vunpack.c.l.b16 %v3365
        %v3395 = vunpack.c.h.b16 %v3365
        %v3396 = vunpack.c.l.b16 %v3366
        %v3397 = vunpack.c.h.b16 %v3366
        %v3398 = vunpack.c.l.b16 %v3367
        %v3399 = vunpack.c.h.b16 %v3367
        %v3400 = vunpack.c.l.b16 %v3368
        %v3401 = vunpack.c.h.b16 %v3368
        %v3402 = vunpack.c.l.b16 %v3369
        %v3403 = vunpack.c.h.b16 %v3369
        %v3404 = vunpack.c.l.b16 %v3370
        %v3405 = vunpack.c.h.b16 %v3370
        %v3406 = vunpack.c.l.b16 %v3371
        %v3407 = vunpack.c.h.b16 %v3371
        %v3408 = vpack.c.b16 %v3386, %v3384
        %v3409 = vpack.c.b16 %v3387, %v3385
        %v3410 = vpack.c.b16 %v3390, %v3388
        %v3411 = vpack.c.b16 %v3391, %v3389
        %v3412 = vpack.c.b16 %v3394, %v3392
        %v3413 = vpack.c.b16 %v3395, %v3393
        %v3414 = vpack.c.b16 %v3398, %v3396
        %v3415 = vpack.c.b16 %v3399, %v3397
        %v3416 = vpack.c.b16 %v3402, %v3400
        %v3417 = vpack.c.b16 %v3403, %v3401
        %v3418 = vpack.c.b16 %v3406, %v3404
        %v3419 = vpack.c.b16 %v3407, %v3405
        %3432 = vmatprep.subr.bf16.mxu0 0
        %3433 = vmatpush1.bf16.msra.mxu0 0
        %3434 = vmatprep.subr.bf16.mxu0 0
        %3435 = vmatpush1.bf16.msra.mxu0 0
        %3436 = vmatprep.subr.bf16.mxu0 %v3419
        %3437 = vmatpush1.bf16.msra.mxu0 %v3418
        %3438 = vmatprep.subr.bf16.mxu0 %v3417
        %3439 = vmatpush1.bf16.msra.mxu0 %v3416
        %3440 = vmatprep.subr.bf16.mxu0 %v3415
        %3441 = vmatpush1.bf16.msra.mxu0 %v3414
        %3442 = vmatprep.subr.bf16.mxu0 %v3413
        %3443 = vmatpush1.bf16.msra.mxu0 %v3412
        %3444 = vmatprep.subr.bf16.mxu0 %v3411
        %3445 = vmatpush1.bf16.msra.mxu0 %v3410
        %3446 = vmatprep.subr.bf16.mxu0 %v3409
        %3447 = vmatpush1.bf16.msra.mxu0 %v3408
        %3448 = vmatprep.subr.bf16.mxu0 0
        %3449 = vmatpush2.bf16.msra.mxu0 0
        %3450 = vmatprep.subr.bf16.mxu0 0
        %3451 = vmatpush2.bf16.msra.mxu0 0
        %3452 = vmatprep.subr.bf16.mxu0 0
        %3453 = vmatpush2.bf16.msra.mxu0 0
        %3454 = vmatprep.subr.bf16.mxu0 0
        %3455 = vmatpush2.bf16.msra.mxu0 0
        %3456 = vmatprep.subr.bf16.mxu0 0
        %3457 = vmatpush2.bf16.msra.mxu0 0
        %3458 = vmatprep.subr.bf16.mxu0 0
        %3459 = vmatpush2.bf16.msra.mxu0 0
        %3460 = vmatprep.subr.bf16.mxu0 0
        %3461 = vmatpush2.bf16.msra.mxu0 0
        %3462 = vmatprep.subr.bf16.mxu0 0
        %3463 = vmatpush2.bf16.msra.mxu0 0
        %3464 = vmatprep.mubr.bf16.mxu0 0
        %3465 = vmatmul.mubr.bf16.gmra.mxu0 %v2751
        %v3466 = vpop.f32.mrf.mxu0
        %v3467 = vadd.f32 %v2663, %v3466
        %v3468 = vpop.f32.mrf.mxu0
        %v3469 = vadd.f32 %v2663, %v3468
        %v3470 = vpop.f32.mrf.mxu0
        %v3471 = vadd.f32 %v2668, %v3470
        %v3472 = vpop.f32.mrf.mxu0
        %v3473 = vadd.f32 %v2668, %v3472
        %3474 = vmatprep.mubr.bf16.mxu0 0
        %3475 = vmatmul.mubr.bf16.gmra.mxu0 %v2754
        %v3476 = vpop.f32.mrf.mxu0
        %v3477 = vadd.f32 %v2673, %v3476
        %v3478 = vpop.f32.mrf.mxu0
        %v3479 = vadd.f32 %v2673, %v3478
        %v3480 = vpop.f32.mrf.mxu0
        %v3481 = vadd.f32 %v2678, %v3480
        %v3482 = vpop.f32.mrf.mxu0
        %v3483 = vadd.f32 %v2678, %v3482
        %3484 = vdwg.mxu0
        %vm3485 = vcmp.gt.f32.partialorder %v3467, 0.0
        %vm3486 = vcmp.gt.f32.partialorder %v3469, 0.0
        %vm3487 = vcmp.gt.f32.partialorder %v3471, 0.0
        %vm3488 = vcmp.gt.f32.partialorder %v3473, 0.0
        %vm3489 = vcmp.gt.f32.partialorder %v3477, 0.0
        %vm3490 = vcmp.gt.f32.partialorder %v3479, 0.0
        %vm3491 = vcmp.gt.f32.partialorder %v3481, 0.0
        %vm3492 = vcmp.gt.f32.partialorder %v3483, 0.0
        %v3493 = vmul.f32 %v3467, 0.1
        %v3494 = vmul.f32 %v3469, 0.1
        %v3495 = vmul.f32 %v3471, 0.1
        %v3496 = vmul.f32 %v3473, 0.1
        %v3497 = vmul.f32 %v3477, 0.1
        %v3498 = vmul.f32 %v3479, 0.1
        %v3499 = vmul.f32 %v3481, 0.1
        %v3500 = vmul.f32 %v3483, 0.1
        %v3501 = vsel %vm3485, %v3467, %v3493
        %v3502 = vsel %vm3486, %v3469, %v3494
        %v3503 = vsel %vm3487, %v3471, %v3495
        %v3504 = vsel %vm3488, %v3473, %v3496
        %v3505 = vsel %vm3489, %v3477, %v3497
        %v3506 = vsel %vm3490, %v3479, %v3498
        %v3507 = vsel %vm3491, %v3481, %v3499
        %v3508 = vsel %vm3492, %v3483, %v3500
        %v3509 = vld [vmem:[%s296] sm:$0xff]
        %v3510 = vld [vmem:[%s296 + $0x8] sm:$0xff]
        %v3511 = vld [vmem:[%s296 + $0x10] sm:$0xff]
        %v3512 = vld [vmem:[%s296 + $0x18] sm:$0xff]
        %v3513 = vld [vmem:[%s296 + $0x20] sm:$0xff]
        %v3514 = vld [vmem:[%s296 + $0x28] sm:$0xff]
        %v3515 = vld [vmem:[%s296 + $0x30] sm:$0xff]
        %v3516 = vld [vmem:[%s296 + $0x38] sm:$0xff]
        %v3517 = vmax.f32 %v3509, %v3501
        %v3518 = vmax.f32 %v3510, %v3502
        %v3519 = vmax.f32 %v3511, %v3503
        %v3520 = vmax.f32 %v3512, %v3504
        %v3521 = vmax.f32 %v3513, %v3505
        %v3522 = vmax.f32 %v3514, %v3506
        %v3523 = vmax.f32 %v3515, %v3507
        %v3524 = vmax.f32 %v3516, %v3508
        %3525 = vst [vmem:[%s296] sm:$0xff] %v3517
        %3526 = vst [vmem:[%s296 + $0x8] sm:$0xff] %v3518
        %3527 = vst [vmem:[%s296 + $0x10] sm:$0xff] %v3519
        %3528 = vst [vmem:[%s296 + $0x18] sm:$0xff] %v3520
        %3529 = vst [vmem:[%s296 + $0x20] sm:$0xff] %v3521
        %3530 = vst [vmem:[%s296 + $0x28] sm:$0xff] %v3522
        %3531 = vst [vmem:[%s296 + $0x30] sm:$0xff] %v3523
        %3532 = vst [vmem:[%s296 + $0x38] sm:$0xff] %v3524
        %v3533 = vld [vmem:[#allocation2 + $0x28] sm:$0xff]
        %v3534 = vld [vmem:[#allocation2 + $0x60] sm:$0xff]
        %v3535 = vld [vmem:[#allocation2 + $0x98] sm:$0xff]
        %v3536 = vld [vmem:[#allocation2 + $0xd0] sm:$0xff]
        %v3537 = vld [vmem:[#allocation2 + $0x108] sm:$0xff]
        %v3538 = vld [vmem:[#allocation2 + $0x140] sm:$0xff]
        %v3539 = vld [vmem:[#allocation2 + $0x178] sm:$0xff]
        %v3540 = vld [vmem:[#allocation2 + $0x1b0] sm:$0xff]
        %v3541 = vld [vmem:[#allocation2 + $0x1e8] sm:$0xff]
        %v3542 = vld [vmem:[#allocation2 + $0x220] sm:$0xff]
        %v3543 = vld [vmem:[#allocation2 + $0x258] sm:$0xff]
        %v3544 = vld [vmem:[#allocation2 + $0x290] sm:$0xff]
        %v3557 = vunpack.c.l.b16 %v3533
        %v3558 = vunpack.c.h.b16 %v3533
        %v3559 = vunpack.c.l.b16 %v3534
        %v3560 = vunpack.c.h.b16 %v3534
        %v3561 = vunpack.c.l.b16 %v3535
        %v3562 = vunpack.c.h.b16 %v3535
        %v3563 = vunpack.c.l.b16 %v3536
        %v3564 = vunpack.c.h.b16 %v3536
        %v3565 = vunpack.c.l.b16 %v3537
        %v3566 = vunpack.c.h.b16 %v3537
        %v3567 = vunpack.c.l.b16 %v3538
        %v3568 = vunpack.c.h.b16 %v3538
        %v3569 = vunpack.c.l.b16 %v3539
        %v3570 = vunpack.c.h.b16 %v3539
        %v3571 = vunpack.c.l.b16 %v3540
        %v3572 = vunpack.c.h.b16 %v3540
        %v3573 = vunpack.c.l.b16 %v3541
        %v3574 = vunpack.c.h.b16 %v3541
        %v3575 = vunpack.c.l.b16 %v3542
        %v3576 = vunpack.c.h.b16 %v3542
        %v3577 = vunpack.c.l.b16 %v3543
        %v3578 = vunpack.c.h.b16 %v3543
        %v3579 = vunpack.c.l.b16 %v3544
        %v3580 = vunpack.c.h.b16 %v3544
        %v3581 = vpack.c.b16 %v3559, %v3557
        %v3582 = vpack.c.b16 %v3560, %v3558
        %v3583 = vpack.c.b16 %v3563, %v3561
        %v3584 = vpack.c.b16 %v3564, %v3562
        %v3585 = vpack.c.b16 %v3567, %v3565
        %v3586 = vpack.c.b16 %v3568, %v3566
        %v3587 = vpack.c.b16 %v3571, %v3569
        %v3588 = vpack.c.b16 %v3572, %v3570
        %v3589 = vpack.c.b16 %v3575, %v3573
        %v3590 = vpack.c.b16 %v3576, %v3574
        %v3591 = vpack.c.b16 %v3579, %v3577
        %v3592 = vpack.c.b16 %v3580, %v3578
        %3605 = vmatprep.subr.bf16.mxu0 0
        %3606 = vmatpush1.bf16.msra.mxu0 0
        %3607 = vmatprep.subr.bf16.mxu0 0
        %3608 = vmatpush1.bf16.msra.mxu0 0
        %3609 = vmatprep.subr.bf16.mxu0 %v3592
        %3610 = vmatpush1.bf16.msra.mxu0 %v3591
        %3611 = vmatprep.subr.bf16.mxu0 %v3590
        %3612 = vmatpush1.bf16.msra.mxu0 %v3589
        %3613 = vmatprep.subr.bf16.mxu0 %v3588
        %3614 = vmatpush1.bf16.msra.mxu0 %v3587
        %3615 = vmatprep.subr.bf16.mxu0 %v3586
        %3616 = vmatpush1.bf16.msra.mxu0 %v3585
        %3617 = vmatprep.subr.bf16.mxu0 %v3584
        %3618 = vmatpush1.bf16.msra.mxu0 %v3583
        %3619 = vmatprep.subr.bf16.mxu0 %v3582
        %3620 = vmatpush1.bf16.msra.mxu0 %v3581
        %3621 = vmatprep.subr.bf16.mxu0 0
        %3622 = vmatpush2.bf16.msra.mxu0 0
        %3623 = vmatprep.subr.bf16.mxu0 0
        %3624 = vmatpush2.bf16.msra.mxu0 0
        %3625 = vmatprep.subr.bf16.mxu0 0
        %3626 = vmatpush2.bf16.msra.mxu0 0
        %3627 = vmatprep.subr.bf16.mxu0 0
        %3628 = vmatpush2.bf16.msra.mxu0 0
        %3629 = vmatprep.subr.bf16.mxu0 0
        %3630 = vmatpush2.bf16.msra.mxu0 0
        %3631 = vmatprep.subr.bf16.mxu0 0
        %3632 = vmatpush2.bf16.msra.mxu0 0
        %3633 = vmatprep.subr.bf16.mxu0 0
        %3634 = vmatpush2.bf16.msra.mxu0 0
        %3635 = vmatprep.subr.bf16.mxu0 0
        %3636 = vmatpush2.bf16.msra.mxu0 0
        %3637 = vmatprep.mubr.bf16.mxu0 0
        %3638 = vmatmul.mubr.bf16.gmra.mxu0 %v2751
        %v3639 = vpop.f32.mrf.mxu0
        %v3640 = vadd.f32 %v2663, %v3639
        %v3641 = vpop.f32.mrf.mxu0
        %v3642 = vadd.f32 %v2663, %v3641
        %v3643 = vpop.f32.mrf.mxu0
        %v3644 = vadd.f32 %v2668, %v3643
        %v3645 = vpop.f32.mrf.mxu0
        %v3646 = vadd.f32 %v2668, %v3645
        %3647 = vmatprep.mubr.bf16.mxu0 0
        %3648 = vmatmul.mubr.bf16.gmra.mxu0 %v2754
        %v3649 = vpop.f32.mrf.mxu0
        %v3650 = vadd.f32 %v2673, %v3649
        %v3651 = vpop.f32.mrf.mxu0
        %v3652 = vadd.f32 %v2673, %v3651
        %v3653 = vpop.f32.mrf.mxu0
        %v3654 = vadd.f32 %v2678, %v3653
        %v3655 = vpop.f32.mrf.mxu0
        %v3656 = vadd.f32 %v2678, %v3655
        %3657 = vdwg.mxu0
        %vm3658 = vcmp.gt.f32.partialorder %v3640, 0.0
        %vm3659 = vcmp.gt.f32.partialorder %v3642, 0.0
        %vm3660 = vcmp.gt.f32.partialorder %v3644, 0.0
        %vm3661 = vcmp.gt.f32.partialorder %v3646, 0.0
        %vm3662 = vcmp.gt.f32.partialorder %v3650, 0.0
        %vm3663 = vcmp.gt.f32.partialorder %v3652, 0.0
        %vm3664 = vcmp.gt.f32.partialorder %v3654, 0.0
        %vm3665 = vcmp.gt.f32.partialorder %v3656, 0.0
        %v3666 = vmul.f32 %v3640, 0.1
        %v3667 = vmul.f32 %v3642, 0.1
        %v3668 = vmul.f32 %v3644, 0.1
        %v3669 = vmul.f32 %v3646, 0.1
        %v3670 = vmul.f32 %v3650, 0.1
        %v3671 = vmul.f32 %v3652, 0.1
        %v3672 = vmul.f32 %v3654, 0.1
        %v3673 = vmul.f32 %v3656, 0.1
        %v3674 = vsel %vm3658, %v3640, %v3666
        %v3675 = vsel %vm3659, %v3642, %v3667
        %v3676 = vsel %vm3660, %v3644, %v3668
        %v3677 = vsel %vm3661, %v3646, %v3669
        %v3678 = vsel %vm3662, %v3650, %v3670
        %v3679 = vsel %vm3663, %v3652, %v3671
        %v3680 = vsel %vm3664, %v3654, %v3672
        %v3681 = vsel %vm3665, %v3656, %v3673
        %v3682 = vld [vmem:[%s296] sm:$0xff]
        %v3683 = vld [vmem:[%s296 + $0x8] sm:$0xff]
        %v3684 = vld [vmem:[%s296 + $0x10] sm:$0xff]
        %v3685 = vld [vmem:[%s296 + $0x18] sm:$0xff]
        %v3686 = vld [vmem:[%s296 + $0x20] sm:$0xff]
        %v3687 = vld [vmem:[%s296 + $0x28] sm:$0xff]
        %v3688 = vld [vmem:[%s296 + $0x30] sm:$0xff]
        %v3689 = vld [vmem:[%s296 + $0x38] sm:$0xff]
        %v3690 = vmax.f32 %v3682, %v3674
        %v3691 = vmax.f32 %v3683, %v3675
        %v3692 = vmax.f32 %v3684, %v3676
        %v3693 = vmax.f32 %v3685, %v3677
        %v3694 = vmax.f32 %v3686, %v3678
        %v3695 = vmax.f32 %v3687, %v3679
        %v3696 = vmax.f32 %v3688, %v3680
        %v3697 = vmax.f32 %v3689, %v3681
        %3698 = vst [vmem:[%s296] sm:$0xff] %v3690
        %3699 = vst [vmem:[%s296 + $0x8] sm:$0xff] %v3691
        %3700 = vst [vmem:[%s296 + $0x10] sm:$0xff] %v3692
        %3701 = vst [vmem:[%s296 + $0x18] sm:$0xff] %v3693
        %3702 = vst [vmem:[%s296 + $0x20] sm:$0xff] %v3694
        %3703 = vst [vmem:[%s296 + $0x28] sm:$0xff] %v3695
        %3704 = vst [vmem:[%s296 + $0x30] sm:$0xff] %v3696
        %3705 = vst [vmem:[%s296 + $0x38] sm:$0xff] %v3697
        %v3706 = vld [vmem:[#allocation2 + $0x30] sm:$0xff]
        %v3707 = vld [vmem:[#allocation2 + $0x68] sm:$0xff]
        %v3708 = vld [vmem:[#allocation2 + $0xa0] sm:$0xff]
        %v3709 = vld [vmem:[#allocation2 + $0xd8] sm:$0xff]
        %v3710 = vld [vmem:[#allocation2 + $0x110] sm:$0xff]
        %v3711 = vld [vmem:[#allocation2 + $0x148] sm:$0xff]
        %v3712 = vld [vmem:[#allocation2 + $0x180] sm:$0xff]
        %v3713 = vld [vmem:[#allocation2 + $0x1b8] sm:$0xff]
        %v3714 = vld [vmem:[#allocation2 + $0x1f0] sm:$0xff]
        %v3715 = vld [vmem:[#allocation2 + $0x228] sm:$0xff]
        %v3716 = vld [vmem:[#allocation2 + $0x260] sm:$0xff]
        %v3717 = vld [vmem:[#allocation2 + $0x298] sm:$0xff]
        %v3730 = vunpack.c.l.b16 %v3706
        %v3731 = vunpack.c.h.b16 %v3706
        %v3732 = vunpack.c.l.b16 %v3707
        %v3733 = vunpack.c.h.b16 %v3707
        %v3734 = vunpack.c.l.b16 %v3708
        %v3735 = vunpack.c.h.b16 %v3708
        %v3736 = vunpack.c.l.b16 %v3709
        %v3737 = vunpack.c.h.b16 %v3709
        %v3738 = vunpack.c.l.b16 %v3710
        %v3739 = vunpack.c.h.b16 %v3710
        %v3740 = vunpack.c.l.b16 %v3711
        %v3741 = vunpack.c.h.b16 %v3711
        %v3742 = vunpack.c.l.b16 %v3712
        %v3743 = vunpack.c.h.b16 %v3712
        %v3744 = vunpack.c.l.b16 %v3713
        %v3745 = vunpack.c.h.b16 %v3713
        %v3746 = vunpack.c.l.b16 %v3714
        %v3747 = vunpack.c.h.b16 %v3714
        %v3748 = vunpack.c.l.b16 %v3715
        %v3749 = vunpack.c.h.b16 %v3715
        %v3750 = vunpack.c.l.b16 %v3716
        %v3751 = vunpack.c.h.b16 %v3716
        %v3752 = vunpack.c.l.b16 %v3717
        %v3753 = vunpack.c.h.b16 %v3717
        %v3754 = vpack.c.b16 %v3732, %v3730
        %v3755 = vpack.c.b16 %v3733, %v3731
        %v3756 = vpack.c.b16 %v3736, %v3734
        %v3757 = vpack.c.b16 %v3737, %v3735
        %v3758 = vpack.c.b16 %v3740, %v3738
        %v3759 = vpack.c.b16 %v3741, %v3739
        %v3760 = vpack.c.b16 %v3744, %v3742
        %v3761 = vpack.c.b16 %v3745, %v3743
        %v3762 = vpack.c.b16 %v3748, %v3746
        %v3763 = vpack.c.b16 %v3749, %v3747
        %v3764 = vpack.c.b16 %v3752, %v3750
        %v3765 = vpack.c.b16 %v3753, %v3751
        %3778 = vmatprep.subr.bf16.mxu0 0
        %3779 = vmatpush1.bf16.msra.mxu0 0
        %3780 = vmatprep.subr.bf16.mxu0 0
        %3781 = vmatpush1.bf16.msra.mxu0 0
        %3782 = vmatprep.subr.bf16.mxu0 %v3765
        %3783 = vmatpush1.bf16.msra.mxu0 %v3764
        %3784 = vmatprep.subr.bf16.mxu0 %v3763
        %3785 = vmatpush1.bf16.msra.mxu0 %v3762
        %3786 = vmatprep.subr.bf16.mxu0 %v3761
        %3787 = vmatpush1.bf16.msra.mxu0 %v3760
        %3788 = vmatprep.subr.bf16.mxu0 %v3759
        %3789 = vmatpush1.bf16.msra.mxu0 %v3758
        %3790 = vmatprep.subr.bf16.mxu0 %v3757
        %3791 = vmatpush1.bf16.msra.mxu0 %v3756
        %3792 = vmatprep.subr.bf16.mxu0 %v3755
        %3793 = vmatpush1.bf16.msra.mxu0 %v3754
        %3794 = vmatprep.subr.bf16.mxu0 0
        %3795 = vmatpush2.bf16.msra.mxu0 0
        %3796 = vmatprep.subr.bf16.mxu0 0
        %3797 = vmatpush2.bf16.msra.mxu0 0
        %3798 = vmatprep.subr.bf16.mxu0 0
        %3799 = vmatpush2.bf16.msra.mxu0 0
        %3800 = vmatprep.subr.bf16.mxu0 0
        %3801 = vmatpush2.bf16.msra.mxu0 0
        %3802 = vmatprep.subr.bf16.mxu0 0
        %3803 = vmatpush2.bf16.msra.mxu0 0
        %3804 = vmatprep.subr.bf16.mxu0 0
        %3805 = vmatpush2.bf16.msra.mxu0 0
        %3806 = vmatprep.subr.bf16.mxu0 0
        %3807 = vmatpush2.bf16.msra.mxu0 0
        %3808 = vmatprep.subr.bf16.mxu0 0
        %3809 = vmatpush2.bf16.msra.mxu0 0
        %3810 = vmatprep.mubr.bf16.mxu0 0
        %3811 = vmatmul.mubr.bf16.gmra.mxu0 %v2751
        %v3812 = vpop.f32.mrf.mxu0
        %v3813 = vadd.f32 %v2663, %v3812
        %v3814 = vpop.f32.mrf.mxu0
        %v3815 = vadd.f32 %v2663, %v3814
        %v3816 = vpop.f32.mrf.mxu0
        %v3817 = vadd.f32 %v2668, %v3816
        %v3818 = vpop.f32.mrf.mxu0
        %v3819 = vadd.f32 %v2668, %v3818
        %3820 = vmatprep.mubr.bf16.mxu0 0
        %3821 = vmatmul.mubr.bf16.gmra.mxu0 %v2754
        %v3822 = vpop.f32.mrf.mxu0
        %v3823 = vadd.f32 %v2673, %v3822
        %v3824 = vpop.f32.mrf.mxu0
        %v3825 = vadd.f32 %v2673, %v3824
        %v3826 = vpop.f32.mrf.mxu0
        %v3827 = vadd.f32 %v2678, %v3826
        %v3828 = vpop.f32.mrf.mxu0
        %v3829 = vadd.f32 %v2678, %v3828
        %3830 = vdwg.mxu0
        %vm3831 = vcmp.gt.f32.partialorder %v3813, 0.0
        %vm3832 = vcmp.gt.f32.partialorder %v3815, 0.0
        %vm3833 = vcmp.gt.f32.partialorder %v3817, 0.0
        %vm3834 = vcmp.gt.f32.partialorder %v3819, 0.0
        %vm3835 = vcmp.gt.f32.partialorder %v3823, 0.0
        %vm3836 = vcmp.gt.f32.partialorder %v3825, 0.0
        %vm3837 = vcmp.gt.f32.partialorder %v3827, 0.0
        %vm3838 = vcmp.gt.f32.partialorder %v3829, 0.0
        %v3839 = vmul.f32 %v3813, 0.1
        %v3840 = vmul.f32 %v3815, 0.1
        %v3841 = vmul.f32 %v3817, 0.1
        %v3842 = vmul.f32 %v3819, 0.1
        %v3843 = vmul.f32 %v3823, 0.1
        %v3844 = vmul.f32 %v3825, 0.1
        %v3845 = vmul.f32 %v3827, 0.1
        %v3846 = vmul.f32 %v3829, 0.1
        %v3847 = vsel %vm3831, %v3813, %v3839
        %v3848 = vsel %vm3832, %v3815, %v3840
        %v3849 = vsel %vm3833, %v3817, %v3841
        %v3850 = vsel %vm3834, %v3819, %v3842
        %v3851 = vsel %vm3835, %v3823, %v3843
        %v3852 = vsel %vm3836, %v3825, %v3844
        %v3853 = vsel %vm3837, %v3827, %v3845
        %v3854 = vsel %vm3838, %v3829, %v3846
        %v3855 = vld [vmem:[%s296] sm:$0xff]
        %v3856 = vld [vmem:[%s296 + $0x8] sm:$0xff]
        %v3857 = vld [vmem:[%s296 + $0x10] sm:$0xff]
        %v3858 = vld [vmem:[%s296 + $0x18] sm:$0xff]
        %v3859 = vld [vmem:[%s296 + $0x20] sm:$0xff]
        %v3860 = vld [vmem:[%s296 + $0x28] sm:$0xff]
        %v3861 = vld [vmem:[%s296 + $0x30] sm:$0xff]
        %v3862 = vld [vmem:[%s296 + $0x38] sm:$0xff]
        %v3863 = vmax.f32 %v3855, %v3847
        %v3864 = vmax.f32 %v3856, %v3848
        %v3865 = vmax.f32 %v3857, %v3849
        %v3866 = vmax.f32 %v3858, %v3850
        %v3867 = vmax.f32 %v3859, %v3851
        %v3868 = vmax.f32 %v3860, %v3852
        %v3869 = vmax.f32 %v3861, %v3853
        %v3870 = vmax.f32 %v3862, %v3854
        %3871 = vst [vmem:[%s296] sm:$0xff] %v3863
        %3872 = vst [vmem:[%s296 + $0x8] sm:$0xff] %v3864
        %3873 = vst [vmem:[%s296 + $0x10] sm:$0xff] %v3865
        %3874 = vst [vmem:[%s296 + $0x18] sm:$0xff] %v3866
        %3875 = vst [vmem:[%s296 + $0x20] sm:$0xff] %v3867
        %3876 = vst [vmem:[%s296 + $0x28] sm:$0xff] %v3868
        %3877 = vst [vmem:[%s296 + $0x30] sm:$0xff] %v3869
        %3878 = vst [vmem:[%s296 + $0x38] sm:$0xff] %v3870
        %s3879 = sand.u32 %s197, 1
        %s3880 = scalar_lea.sflag [#allocation4], %s3879
        %s3881 = sand.u32 %s197, 1
        %s3882 = smul.addr %s3881, 64
        %s3883 = scalar_lea.vmem [#allocation3], %s3882
        // Predicated region
        $region49: #{tpu_custom_call.1} parent=47 // pred_check
          %p3884 = pneg %p207
        $region50: #{tpu_custom_call.1} parent=47 // pred_check_branch
          %3886 = sbr.rel (%p3884) target = $region52
        $region51: #{tpu_custom_call.1} parent=47 // pred_region
          %s3887 = smul.u32 2, %s26
          %s3889 = ssub.s32 1024, 1024
          %3890 = vsyncadd %s3880, %s3889
          %s3891 = smul.addr %s25, 8
          %s3892 = sadd.s32 %s3887, %s3891
          %s3893 = smul.addr %s3892, 128
          %s3894 = scalar_lea.hbm %s7, %s3893
          %s3895 = sshll.u32 %s3883, 4
          %s3896 = int_to_ptr.vmem [resolvable:$true] %s3895
          %3901 = dma.vmem_to_hbm [thread:$0]  %s3896, 1024, %s3894, %s3880, 256, 256, 16
        $region52: #{tpu_custom_call.1} parent=47 // pred_fallthru
          _
      $region48: #{tpu_custom_call.1} parent=5 // pred_fallthru
        _
      %p3902 = scmp.le.s32.totalorder 2, %s16
      // Predicated region
      $region53: #{tpu_custom_call.1} parent=5 // pred_check
        %p3903 = pneg %p3902
      $region54: #{tpu_custom_call.1} parent=5 // pred_check_branch
        %3905 = sbr.rel (%p3903) target = $region56
      $region55: #{tpu_custom_call.1} parent=5 // pred_region
        %s3906 = ssub.s32 %s16, 2
        // Predicated region
        $region57: #{tpu_custom_call.1} parent=55 // pred_check
          %p3907 = pneg %p213
        $region58: #{tpu_custom_call.1} parent=55 // pred_check_branch
          %3909 = sbr.rel (%p3907) target = $region60
        $region59: #{tpu_custom_call.1} parent=55 // pred_region
          %s3910 = sand.u32 %s198, 1
          %s3911 = scalar_lea.sflag [#allocation4], %s3910
          %s3912 = sand.u32 %s198, 1
          %s3913 = smul.addr %s3912, 64
          %s3914 = scalar_lea.vmem [#allocation3], %s3913
          %3915 = dma.done %s3911, 1024
        $region60: #{tpu_custom_call.1} parent=55 // pred_fallthru
          _
      $region56: #{tpu_custom_call.1} parent=5 // pred_fallthru
        _
    $region6: #{tpu_custom_call.1} parent=1 // loop_footer
      %s20 = sadd.s32 1, %s16
    $region7: #{tpu_custom_call.1} parent=1 // loop_footer_branch
      %15 = sbr.rel target = $region3
    $region8: #{tpu_custom_call.1} parent=1 // loop_exit
      _
    %3916 = vsyncpa [#allocation4], 1
    %s3917 = scalar_lea.sflag [#allocation4], 1
    %3918 = vsyncpa %s3917, 1

</llo_original>
